<compile_context>
chip_gen: v7x
topology: tpu7x:2x2x1
jax: 0.10.0
libtpu: 0.0.40
codegen_flags: <defaults>
</compile_context>

<pallas_src>
import math
import numpy as np
import jax
import jax.numpy as jnp
from jax.experimental import pallas as pl
from jax.experimental.pallas import tpu as pltpu


def ssm_s5_chunk_kernel(u_ref, bhat_ref, cmat_ref, t_ref, kx_ref, y_ref,
                        v_ref, sre_ref, sim_ref):
    # u_ref : (1, Cin, Bg, Lc)   current (batch-group, chunk) tile
    # bhat  : (N, Cin)           discretized B            (resident)
    # cmat  : (D, N)             output projection C      (resident)
    # t_ref : (N, Lc, Lc)        causal Toeplitz Re(exp(dtA*(l-s)))  (resident)
    # kx_ref: (4, N, Lc)         [dec_re, dec_im, flip_re, flip_im]  (resident)
    # y_ref : (1, D, Bg, Lc)
    # v_ref : (N, Bg, Lc) VMEM scratch, sre/sim: (N, Bg) complex state carry
    c = pl.program_id(1)

    @pl.when(c == 0)
    def _():  # new batch group -> zero SSM state (training mode starts from rest)
        sre_ref[...] = jnp.zeros_like(sre_ref)
        sim_ref[...] = jnp.zeros_like(sim_ref)

    bhat = bhat_ref[...]
    cmat = cmat_ref[...]
    T = t_ref[...]                      # (N, Lc, Lc), T[n, l, s]
    kdec_re = kx_ref[0]                 # (N, Lc)  Re(exp(dtA*l))
    kdec_im = kx_ref[1]                 # (N, Lc)  Im(exp(dtA*l))
    kflip_re = kx_ref[2]                # (N, Lc)  Re(exp(dtA*(Lc-j)))
    kflip_im = kx_ref[3]                # (N, Lc)  Im(exp(dtA*(Lc-j)))

    Bg = v_ref.shape[1]

    # ---- input projection on the MXU: v[n,b,l] = sum_c B_hat[n,c] u[c,b,l] ----
    # (per batch element -> plain 2D matmuls with lane-dense Lc columns; assembled
    #  into a (N, Bg, Lc) scratch so no in-kernel minor-dim reshape is needed)
    for b in range(Bg):
        v_ref[:, b, :] = jnp.dot(bhat, u_ref[0, :, b, :],
                                 preferred_element_type=jnp.float32)
    v = v_ref[...]                      # (N, Bg, Lc)

    # ---- intra-chunk causal conv on the MXU, batched over the state dim n ----
    # x[n, b, l] = sum_{s<=l} Re(exp(dtA[n]*(l-s))) * v[n, b, s]
    x = jnp.einsum('nbs,nls->nbl', v, T, preferred_element_type=jnp.float32)

    # ---- cross-chunk contribution: Re(exp(dtA*l) * state) -------------------
    x = x + (kdec_re[:, None, :] * sre_ref[...][:, :, None]
             - kdec_im[:, None, :] * sim_ref[...][:, :, None])

    # ---- output projection on the MXU: y[d,b,l] = sum_n C[d,n] x[n,b,l] ------
    for b in range(Bg):
        y_ref[0, :, b, :] = jnp.dot(cmat, x[:, b, :],
                                    preferred_element_type=jnp.float32
                                    ).astype(y_ref.dtype)

    # ---- carry the (complex) SSM state to the next chunk ---------------------
    # S' = exp(dtA*Lc) * S + sum_j exp(dtA*(Lc-j)) * v[:, :, j]
    @pl.when(c + 1 < pl.num_programs(1))
    def _():
        dec_re = kflip_re[:, 0:1]       # exp(dtA*Lc), (N, 1)
        dec_im = kflip_im[:, 0:1]
        inc_re = jnp.sum(kflip_re[:, None, :] * v, axis=-1)   # (N, Bg)
        inc_im = jnp.sum(kflip_im[:, None, :] * v, axis=-1)
        s_re = sre_ref[...]
        s_im = sim_ref[...]
        sre_ref[...] = dec_re * s_re - dec_im * s_im + inc_re
        sim_ref[...] = dec_re * s_im + dec_im * s_re + inc_im


def _precompute_decay_kernels(A, log_dt, Lc):
    """All transcendentals done once, outside the grid (plain JAX glue)."""
    dt = jnp.exp(log_dt.astype(jnp.float32))                     # (N,)
    A32 = A.astype(jnp.float32)
    ar = dt * (-jax.nn.softplus(A32[:, 0]))                      # dt*A_real (<0)
    ai = dt * A32[:, 1]                                          # dt*A_imag

    t = jnp.arange(Lc, dtype=jnp.float32)
    tau = t[:, None] - t[None, :]                                # (Lc, Lc)
    causal = tau >= 0.0
    tau_c = jnp.where(causal, tau, 0.0)          # mask BEFORE exp: no inf/NaN
    T = jnp.where(causal[None],
                  jnp.exp(ar[:, None, None] * tau_c[None]) *
                  jnp.cos(ai[:, None, None] * tau_c[None]),
                  0.0)                                           # (N, Lc, Lc)

    # cross-chunk decay applied to the carried state: exp(dtA*l), l = 0..Lc-1
    kdec_re = jnp.exp(ar[:, None] * t[None]) * jnp.cos(ai[:, None] * t[None])
    kdec_im = jnp.exp(ar[:, None] * t[None]) * jnp.sin(ai[:, None] * t[None])
    # state-update kernel: exp(dtA*(Lc-j)), j = 0..Lc-1   (column 0 = exp(dtA*Lc))
    tt = (Lc - t)[None]
    kflip_re = jnp.exp(ar[:, None] * tt) * jnp.cos(ai[:, None] * tt)
    kflip_im = jnp.exp(ar[:, None] * tt) * jnp.sin(ai[:, None] * tt)
    kx = jnp.stack([kdec_re, kdec_im, kflip_re, kflip_im], axis=0)   # (4, N, Lc)
    return dt, T, kx


def ssm_layer_forward(u, A, B, C, log_dt, *, chunk_len=None, batch_block=None):
    """Pallas-backed SSMLayer forward (s5, training mode, mixer=Identity)."""
    Bsz, Cin, L = u.shape
    D, N = C.shape

    if chunk_len is None:
        chunk_len = 128 if L % 128 == 0 else L       # 128-aligned chunks (v5e MXU)
    if L % chunk_len != 0:
        raise ValueError("L must be divisible by chunk_len")
    Lc = chunk_len
    n_chunks = L // Lc

    if batch_block is None:
        batch_block = Bsz                            # whole batch folded per step
    if Bsz % batch_block != 0:
        raise ValueError("batch must be divisible by batch_block")
    Bg = batch_block
    n_bg = Bsz // Bg

    dt, T, kx = _precompute_decay_kernels(A, log_dt, Lc)
    B_hat = B.astype(jnp.float32) * dt[:, None]                  # (N, Cin)
    C32 = C.astype(jnp.float32)

    # (Bsz, Cin, L) -> (n_bg*n_chunks, Cin, Bg, Lc); blocks cover the full last two
    # dims so the (8,128) block constraint is always satisfied, even for small Lc.
    u32 = u.astype(jnp.float32)
    u_in = jnp.transpose(u32.reshape(n_bg, Bg, Cin, n_chunks, Lc),
                         (0, 3, 2, 1, 4)).reshape(n_bg * n_chunks, Cin, Bg, Lc)

    # VMEM budget (resident kernels + double-buffered I/O tiles + scratch)
    vmem_est = 4 * (2 * N * Lc * Lc + 2 * 4 * N * Lc + 2 * N * Cin + 2 * D * N
                    + 2 * Cin * Bg * Lc + 2 * D * Bg * Lc
                    + N * Bg * Lc + 2 * N * Bg)
    vmem_limit = int(min(64 * 1024 * 1024, max(32 * 1024 * 1024, 2 * vmem_est)))

    y_chunks = pl.pallas_call(
        ssm_s5_chunk_kernel,
        out_shape=jax.ShapeDtypeStruct((n_bg * n_chunks, D, Bg, Lc), jnp.float32),
        grid_spec=pltpu.PrefetchScalarGridSpec(
            num_scalar_prefetch=0,
            grid=(n_bg, n_chunks),
            in_specs=[
                pl.BlockSpec((1, Cin, Bg, Lc),
                             lambda g, c: (g * n_chunks + c, 0, 0, 0)),
                pl.BlockSpec((N, Cin), lambda g, c: (0, 0)),
                pl.BlockSpec((D, N), lambda g, c: (0, 0)),
                pl.BlockSpec((N, Lc, Lc), lambda g, c: (0, 0, 0)),
                pl.BlockSpec((4, N, Lc), lambda g, c: (0, 0, 0)),
            ],
            out_specs=pl.BlockSpec((1, D, Bg, Lc),
                                   lambda g, c: (g * n_chunks + c, 0, 0, 0)),
            scratch_shapes=[
                pltpu.VMEM((N, Bg, Lc), jnp.float32),    # B-projected input v
                pltpu.VMEM((N, Bg), jnp.float32),        # Re(state)
                pltpu.VMEM((N, Bg), jnp.float32),        # Im(state)
            ],
        ),
        compiler_params=pltpu.CompilerParams(
            dimension_semantics=("parallel", "arbitrary"),
            vmem_limit_bytes=vmem_limit,
        ),
    )(u_in, B_hat, C32, T, kx)

    y = jnp.transpose(y_chunks.reshape(n_bg, n_chunks, D, Bg, Lc),
                      (0, 3, 2, 1, 4)).reshape(Bsz, D, L)
    return y


def ssm_layer_forward_ref(u, A, B, C, log_dt):
    """Pure-JAX complex reference (mirrors padded_fft_conv_opt semantics for s5)."""
    dt = jnp.exp(log_dt.astype(jnp.float32))
    A_real = -jax.nn.softplus(A[:, 0].astype(jnp.float32))
    A_imag = A[:, 1].astype(jnp.float32)
    dtA = (dt * A_real + 1j * dt * A_imag).astype(jnp.complex64)     # (N,)
    B_hat = (B.astype(jnp.float32) * dt[:, None]).astype(jnp.complex64)
    L = u.shape[-1]
    l = jnp.arange(L)
    causal = l[:, None] >= l[None, :]
    tau = jnp.where(causal, (l[:, None] - l[None, :]), 0).astype(jnp.complex64)
    T = jnp.where(causal[None], jnp.exp(dtA[:, None, None] * tau[None]), 0.0)
    v = jnp.einsum('nc,bcl->bnl', B_hat, u.astype(jnp.complex64))
    x = jnp.einsum('nls,bns->bnl', T, v)
    y = jnp.einsum('dn,bnl->bdl', C.astype(jnp.complex64), x)
    return y.real.astype(jnp.float32)


if __name__ == "__main__":
    # module config: SSMLayer(num_states=16, in_channels=4, out_channels=4,
    #                         state_blocks=1, mode='s5', use_activations=False)
    num_states, in_channels, out_channels, state_blocks = 16, 4, 4, 1
    batch, seq_len = 2, 16
    tot_coeffs = state_blocks * num_states

    # deterministic parameter init (mirrors SSMLayer.__init__ for mode='s5')
    inv_softplus = lambda x: x + np.log(-np.expm1(-x))
    A_np = np.stack([0.5 * np.ones(num_states), math.pi * np.arange(num_states)], -1)
    A_np[..., 0] = inv_softplus(A_np[..., 0])
    A_np = np.tile(A_np, (state_blocks, 1))                 # 'n i -> (j n) i'
    dt_np = np.geomspace(0.001, 0.1, state_blocks)
    log_dt_np = np.repeat(np.log(dt_np), num_states)        # 'j -> (j n)'
    B_np = np.ones((tot_coeffs, in_channels)) / math.sqrt(in_channels)

    key = jax.random.PRNGKey(0)
    k_c, k_x = jax.random.split(key)
    C_arr = jax.random.normal(k_c, (out_channels, tot_coeffs), jnp.float32) \
        * math.sqrt(2.0 / tot_coeffs)
    A_arr = jnp.asarray(A_np, jnp.float32)
    B_arr = jnp.asarray(B_np, jnp.float32)
    log_dt_arr = jnp.asarray(log_dt_np, jnp.float32)

    x = jax.random.normal(k_x, (batch, in_channels, seq_len), jnp.float32)

    y_ref = ssm_layer_forward_ref(x, A_arr, B_arr, C_arr, log_dt_arr)

    # 1) chunked path (2 chunks -> exercises the cross-chunk complex state carry)
    y1 = jax.block_until_ready(
        ssm_layer_forward(x, A_arr, B_arr, C_arr, log_dt_arr, chunk_len=8))
    np.testing.assert_allclose(np.asarray(y1), np.asarray(y_ref),
                               rtol=2e-3, atol=2e-4)

    # 2) single chunk, batch split across the parallel grid axis
    y2 = jax.block_until_ready(
        ssm_layer_forward(x, A_arr, B_arr, C_arr, log_dt_arr,
                          chunk_len=16, batch_block=1))
    np.testing.assert_allclose(np.asarray(y2), np.asarray(y_ref),
                               rtol=2e-3, atol=2e-4)

    print("KERNEL_OK")
</pallas_src>

<mosaic_0001>
module attributes {stable_mosaic.version = 11 : i64} {
  func.func @ssm_s5_chunk_kernel(%arg0: i32, %arg1: i32, %arg2: memref<1x4x2x8xf32, #tpu.memory_space<vmem>>, %arg3: memref<16x4xf32, #tpu.memory_space<vmem>>, %arg4: memref<4x16xf32, #tpu.memory_space<vmem>>, %arg5: memref<16x8x8xf32, #tpu.memory_space<vmem>>, %arg6: memref<4x16x8xf32, #tpu.memory_space<vmem>>, %arg7: memref<1x4x2x8xf32, #tpu.memory_space<vmem>>, %arg8: memref<16x2x8xf32, #tpu.memory_space<vmem>>, %arg9: memref<16x2xf32, #tpu.memory_space<vmem>>, %arg10: memref<16x2xf32, #tpu.memory_space<vmem>>) attributes {dimension_semantics = [#tpu.dimension_semantics<parallel>, #tpu.dimension_semantics<arbitrary>], iteration_bounds = array<i64: 1, 2>, scalar_prefetch = 0 : i64, scratch_operands = 3 : i64, tpu.core_type = #tpu.core_type<tc>, window_params = [{transform_indices = @transform_0, window_bounds = array<i64: 1, 4, 2, 8>}, {pipeline_mode = #tpu.pipeline_mode<synchronous>, transform_indices = @transform_1, window_bounds = array<i64: 16, 4>}, {pipeline_mode = #tpu.pipeline_mode<synchronous>, transform_indices = @transform_2, window_bounds = array<i64: 4, 16>}, {pipeline_mode = #tpu.pipeline_mode<synchronous>, transform_indices = @transform_3, window_bounds = array<i64: 16, 8, 8>}, {pipeline_mode = #tpu.pipeline_mode<synchronous>, transform_indices = @transform_4, window_bounds = array<i64: 4, 16, 8>}, {transform_indices = @transform_5, window_bounds = array<i64: 1, 4, 2, 8>}]} {
    %c0_i32 = arith.constant 0 : i32
    %0 = arith.cmpi eq, %arg1, %c0_i32 : i32
    %1 = arith.extui %0 : i1 to i32
    %c0_i32_0 = arith.constant 0 : i32
    %2 = arith.cmpi ne, %1, %c0_i32_0 : i32
    scf.if %2 {
      %cst_50 = arith.constant 0.000000e+00 : f32
      %58 = vector.broadcast %cst_50 : f32 to vector<16x2xf32>
      %c0_51 = arith.constant 0 : index
      %c0_52 = arith.constant 0 : index
      %59 = vector.load %arg9[%c0_51, %c0_52] : memref<16x2xf32, #tpu.memory_space<vmem>>, vector<16x2xf32>
      tpu.vector_store %arg9[%c0_51, %c0_52], %58 {strides = array<i32>} : memref<16x2xf32, #tpu.memory_space<vmem>>, vector<16x2xf32>,
      %cst_53 = arith.constant 0.000000e+00 : f32
      %60 = vector.broadcast %cst_53 : f32 to vector<16x2xf32>
      %c0_54 = arith.constant 0 : index
      %c0_55 = arith.constant 0 : index
      %61 = vector.load %arg10[%c0_54, %c0_55] : memref<16x2xf32, #tpu.memory_space<vmem>>, vector<16x2xf32>
      tpu.vector_store %arg10[%c0_54, %c0_55], %60 {strides = array<i32>} : memref<16x2xf32, #tpu.memory_space<vmem>>, vector<16x2xf32>,
    } else {
    }
    %c0 = arith.constant 0 : index
    %c0_1 = arith.constant 0 : index
    %3 = vector.load %arg3[%c0, %c0_1] : memref<16x4xf32, #tpu.memory_space<vmem>>, vector<16x4xf32>
    %c0_2 = arith.constant 0 : index
    %c0_3 = arith.constant 0 : index
    %4 = vector.load %arg4[%c0_2, %c0_3] : memref<4x16xf32, #tpu.memory_space<vmem>>, vector<4x16xf32>
    %c0_4 = arith.constant 0 : index
    %c0_5 = arith.constant 0 : index
    %c0_6 = arith.constant 0 : index
    %5 = vector.load %arg5[%c0_4, %c0_5, %c0_6] : memref<16x8x8xf32, #tpu.memory_space<vmem>>, vector<16x8x8xf32>
    %c0_7 = arith.constant 0 : index
    %c0_8 = arith.constant 0 : index
    %c0_9 = arith.constant 0 : index
    %6 = vector.load %arg6[%c0_7, %c0_8, %c0_9] : memref<4x16x8xf32, #tpu.memory_space<vmem>>, vector<1x16x8xf32>
    %7 = vector.shape_cast %6 : vector<1x16x8xf32> to vector<16x8xf32>
    %c1 = arith.constant 1 : index
    %c0_10 = arith.constant 0 : index
    %c0_11 = arith.constant 0 : index
    %8 = vector.load %arg6[%c1, %c0_10, %c0_11] : memref<4x16x8xf32, #tpu.memory_space<vmem>>, vector<1x16x8xf32>
    %9 = vector.shape_cast %8 : vector<1x16x8xf32> to vector<16x8xf32>
    %c2 = arith.constant 2 : index
    %c0_12 = arith.constant 0 : index
    %c0_13 = arith.constant 0 : index
    %10 = vector.load %arg6[%c2, %c0_12, %c0_13] : memref<4x16x8xf32, #tpu.memory_space<vmem>>, vector<1x16x8xf32>
    %11 = vector.shape_cast %10 : vector<1x16x8xf32> to vector<16x8xf32>
    %c3 = arith.constant 3 : index
    %c0_14 = arith.constant 0 : index
    %c0_15 = arith.constant 0 : index
    %12 = vector.load %arg6[%c3, %c0_14, %c0_15] : memref<4x16x8xf32, #tpu.memory_space<vmem>>, vector<1x16x8xf32>
    %13 = vector.shape_cast %12 : vector<1x16x8xf32> to vector<16x8xf32>
    %c0_16 = arith.constant 0 : index
    %c0_17 = arith.constant 0 : index
    %c0_18 = arith.constant 0 : index
    %c0_19 = arith.constant 0 : index
    %14 = vector.load %arg2[%c0_16, %c0_17, %c0_18, %c0_19] : memref<1x4x2x8xf32, #tpu.memory_space<vmem>>, vector<1x4x1x8xf32>
    %15 = vector.shape_cast %14 : vector<1x4x1x8xf32> to vector<4x8xf32>
    %cst = arith.constant dense<0.000000e+00> : vector<16x8xf32>
    %16 = tpu.matmul %3, %15, %cst {dimension_numbers = #tpu.dot_dimension_numbers<[1], [0], [0], [1], [0, 0, 1, 1], [], []>} : vector<16x4xf32>, vector<4x8xf32>, vector<16x8xf32> -> vector<16x8xf32>
    %c0_20 = arith.constant 0 : index
    %c0_21 = arith.constant 0 : index
    %c0_22 = arith.constant 0 : index
    %17 = vector.load %arg8[%c0_20, %c0_21, %c0_22] : memref<16x2x8xf32, #tpu.memory_space<vmem>>, vector<16x1x8xf32>
    %18 = vector.shape_cast %17 : vector<16x1x8xf32> to vector<16x8xf32>
    %19 = vector.shape_cast %16 : vector<16x8xf32> to vector<16x1x8xf32>
    tpu.vector_store %arg8[%c0_20, %c0_21, %c0_22], %19 {strides = array<i32>} : memref<16x2x8xf32, #tpu.memory_space<vmem>>, vector<16x1x8xf32>,
    %c0_23 = arith.constant 0 : index
    %c0_24 = arith.constant 0 : index
    %c1_25 = arith.constant 1 : index
    %c0_26 = arith.constant 0 : index
    %20 = vector.load %arg2[%c0_23, %c0_24, %c1_25, %c0_26] : memref<1x4x2x8xf32, #tpu.memory_space<vmem>>, vector<1x4x1x8xf32>
    %21 = vector.shape_cast %20 : vector<1x4x1x8xf32> to vector<4x8xf32>
    %cst_27 = arith.constant dense<0.000000e+00> : vector<16x8xf32>
    %22 = tpu.matmul %3, %21, %cst_27 {dimension_numbers = #tpu.dot_dimension_numbers<[1], [0], [0], [1], [0, 0, 1, 1], [], []>} : vector<16x4xf32>, vector<4x8xf32>, vector<16x8xf32> -> vector<16x8xf32>
    %c0_28 = arith.constant 0 : index
    %c1_29 = arith.constant 1 : index
    %c0_30 = arith.constant 0 : index
    %23 = vector.load %arg8[%c0_28, %c1_29, %c0_30] : memref<16x2x8xf32, #tpu.memory_space<vmem>>, vector<16x1x8xf32>
    %24 = vector.shape_cast %23 : vector<16x1x8xf32> to vector<16x8xf32>
    %25 = vector.shape_cast %22 : vector<16x8xf32> to vector<16x1x8xf32>
    tpu.vector_store %arg8[%c0_28, %c1_29, %c0_30], %25 {strides = array<i32>} : memref<16x2x8xf32, #tpu.memory_space<vmem>>, vector<16x1x8xf32>,
    %c0_31 = arith.constant 0 : index
    %c0_32 = arith.constant 0 : index
    %c0_33 = arith.constant 0 : index
    %26 = vector.load %arg8[%c0_31, %c0_32, %c0_33] : memref<16x2x8xf32, #tpu.memory_space<vmem>>, vector<16x2x8xf32>
    "tpu.trace_start"() <{level = 10 : i32, message = "nbs,nls->nbl"}> : () -> ()
    %cst_34 = arith.constant dense<0.000000e+00> : vector<16x2x8xf32>
    %27 = tpu.matmul %26, %5, %cst_34 {dimension_numbers = #tpu.dot_dimension_numbers<[2], [2], [1], [1], [0, 0, 0, 1, 1, 1], [0], [0]>} : vector<16x2x8xf32>, vector<16x8x8xf32>, vector<16x2x8xf32> -> vector<16x2x8xf32>
    "tpu.trace_stop"() : () -> ()
    %28 = vector.shape_cast %7 : vector<16x8xf32> to vector<16x1x8xf32>
    %c0_35 = arith.constant 0 : index
    %c0_36 = arith.constant 0 : index
    %29 = vector.load %arg9[%c0_35, %c0_36] : memref<16x2xf32, #tpu.memory_space<vmem>>, vector<16x2xf32>
    %30 = vector.shape_cast %29 : vector<16x2xf32> to vector<16x2x1xf32>
    %31 = vector.broadcast %28 : vector<16x1x8xf32> to vector<16x2x8xf32>
    %32 = vector.broadcast %30 : vector<16x2x1xf32> to vector<16x2x8xf32>
    %33 = arith.mulf %31, %32 : vector<16x2x8xf32>
    %34 = vector.shape_cast %9 : vector<16x8xf32> to vector<16x1x8xf32>
    %c0_37 = arith.constant 0 : index
    %c0_38 = arith.constant 0 : index
    %35 = vector.load %arg10[%c0_37, %c0_38] : memref<16x2xf32, #tpu.memory_space<vmem>>, vector<16x2xf32>
    %36 = vector.shape_cast %35 : vector<16x2xf32> to vector<16x2x1xf32>
    %37 = vector.broadcast %34 : vector<16x1x8xf32> to vector<16x2x8xf32>
    %38 = vector.broadcast %36 : vector<16x2x1xf32> to vector<16x2x8xf32>
    %39 = arith.mulf %37, %38 : vector<16x2x8xf32>
    %40 = arith.subf %33, %39 : vector<16x2x8xf32>
    %41 = arith.addf %27, %40 : vector<16x2x8xf32>
    %42 = vector.extract_strided_slice %41 {offsets = [0, 0, 0], sizes = [16, 1, 8], strides = [1, 1, 1]} : vector<16x2x8xf32> to vector<16x1x8xf32>
    %43 = vector.shape_cast %42 : vector<16x1x8xf32> to vector<16x8xf32>
    %cst_39 = arith.constant dense<0.000000e+00> : vector<4x8xf32>
    %44 = tpu.matmul %4, %43, %cst_39 {dimension_numbers = #tpu.dot_dimension_numbers<[1], [0], [0], [1], [0, 0, 1, 1], [], []>} : vector<4x16xf32>, vector<16x8xf32>, vector<4x8xf32> -> vector<4x8xf32>
    %c0_40 = arith.constant 0 : index
    %c0_41 = arith.constant 0 : index
    %c0_42 = arith.constant 0 : index
    %c0_43 = arith.constant 0 : index
    %45 = vector.load %arg7[%c0_40, %c0_41, %c0_42, %c0_43] : memref<1x4x2x8xf32, #tpu.memory_space<vmem>>, vector<1x4x1x8xf32>
    %46 = vector.shape_cast %45 : vector<1x4x1x8xf32> to vector<4x8xf32>
    %47 = vector.shape_cast %44 : vector<4x8xf32> to vector<1x4x1x8xf32>
    tpu.vector_store %arg7[%c0_40, %c0_41, %c0_42, %c0_43], %47 {strides = array<i32>} : memref<1x4x2x8xf32, #tpu.memory_space<vmem>>, vector<1x4x1x8xf32>,
    %48 = vector.extract_strided_slice %41 {offsets = [0, 1, 0], sizes = [16, 1, 8], strides = [1, 1, 1]} : vector<16x2x8xf32> to vector<16x1x8xf32>
    %49 = vector.shape_cast %48 : vector<16x1x8xf32> to vector<16x8xf32>
    %cst_44 = arith.constant dense<0.000000e+00> : vector<4x8xf32>
    %50 = tpu.matmul %4, %49, %cst_44 {dimension_numbers = #tpu.dot_dimension_numbers<[1], [0], [0], [1], [0, 0, 1, 1], [], []>} : vector<4x16xf32>, vector<16x8xf32>, vector<4x8xf32> -> vector<4x8xf32>
    %c0_45 = arith.constant 0 : index
    %c0_46 = arith.constant 0 : index
    %c1_47 = arith.constant 1 : index
    %c0_48 = arith.constant 0 : index
    %51 = vector.load %arg7[%c0_45, %c0_46, %c1_47, %c0_48] : memref<1x4x2x8xf32, #tpu.memory_space<vmem>>, vector<1x4x1x8xf32>
    %52 = vector.shape_cast %51 : vector<1x4x1x8xf32> to vector<4x8xf32>
    %53 = vector.shape_cast %50 : vector<4x8xf32> to vector<1x4x1x8xf32>
    tpu.vector_store %arg7[%c0_45, %c0_46, %c1_47, %c0_48], %53 {strides = array<i32>} : memref<1x4x2x8xf32, #tpu.memory_space<vmem>>, vector<1x4x1x8xf32>,
    %c1_i32 = arith.constant 1 : i32
    %54 = arith.addi %arg1, %c1_i32 : i32
    %c2_i32 = arith.constant 2 : i32
    %55 = arith.cmpi slt, %54, %c2_i32 : i32
    %56 = arith.extui %55 : i1 to i32
    %c0_i32_49 = arith.constant 0 : i32
    %57 = arith.cmpi ne, %56, %c0_i32_49 : i32
    scf.if %57 {
      %58 = vector.extract_strided_slice %11 {offsets = [0, 0], sizes = [16, 1], strides = [1, 1]} : vector<16x8xf32> to vector<16x1xf32>
      %59 = vector.extract_strided_slice %13 {offsets = [0, 0], sizes = [16, 1], strides = [1, 1]} : vector<16x8xf32> to vector<16x1xf32>
      %60 = vector.shape_cast %11 : vector<16x8xf32> to vector<16x1x8xf32>
      %61 = vector.broadcast %60 : vector<16x1x8xf32> to vector<16x2x8xf32>
      %62 = arith.mulf %61, %26 : vector<16x2x8xf32>
      %cst_50 = arith.constant dense<0.000000e+00> : vector<16x2xf32>
      %63 = vector.multi_reduction <add>, %62, %cst_50 [2] : vector<16x2x8xf32> to vector<16x2xf32>
      %64 = vector.shape_cast %13 : vector<16x8xf32> to vector<16x1x8xf32>
      %65 = vector.broadcast %64 : vector<16x1x8xf32> to vector<16x2x8xf32>
      %66 = arith.mulf %65, %26 : vector<16x2x8xf32>
      %cst_51 = arith.constant dense<0.000000e+00> : vector<16x2xf32>
      %67 = vector.multi_reduction <add>, %66, %cst_51 [2] : vector<16x2x8xf32> to vector<16x2xf32>
      %c0_52 = arith.constant 0 : index
      %c0_53 = arith.constant 0 : index
      %68 = vector.load %arg9[%c0_52, %c0_53] : memref<16x2xf32, #tpu.memory_space<vmem>>, vector<16x2xf32>
      %c0_54 = arith.constant 0 : index
      %c0_55 = arith.constant 0 : index
      %69 = vector.load %arg10[%c0_54, %c0_55] : memref<16x2xf32, #tpu.memory_space<vmem>>, vector<16x2xf32>
      %70 = vector.broadcast %58 : vector<16x1xf32> to vector<16x2xf32>
      %71 = arith.mulf %70, %68 : vector<16x2xf32>
      %72 = vector.broadcast %59 : vector<16x1xf32> to vector<16x2xf32>
      %73 = arith.mulf %72, %69 : vector<16x2xf32>
      %74 = arith.subf %71, %73 : vector<16x2xf32>
      %75 = arith.addf %74, %63 : vector<16x2xf32>
      %c0_56 = arith.constant 0 : index
      %c0_57 = arith.constant 0 : index
      %76 = vector.load %arg9[%c0_56, %c0_57] : memref<16x2xf32, #tpu.memory_space<vmem>>, vector<16x2xf32>
      tpu.vector_store %arg9[%c0_56, %c0_57], %75 {strides = array<i32>} : memref<16x2xf32, #tpu.memory_space<vmem>>, vector<16x2xf32>,
      %77 = vector.broadcast %58 : vector<16x1xf32> to vector<16x2xf32>
      %78 = arith.mulf %77, %69 : vector<16x2xf32>
      %79 = vector.broadcast %59 : vector<16x1xf32> to vector<16x2xf32>
      %80 = arith.mulf %79, %68 : vector<16x2xf32>
      %81 = arith.addf %78, %80 : vector<16x2xf32>
      %82 = arith.addf %81, %67 : vector<16x2xf32>
      %c0_58 = arith.constant 0 : index
      %c0_59 = arith.constant 0 : index
      %83 = vector.load %arg10[%c0_58, %c0_59] : memref<16x2xf32, #tpu.memory_space<vmem>>, vector<16x2xf32>
      tpu.vector_store %arg10[%c0_58, %c0_59], %82 {strides = array<i32>} : memref<16x2xf32, #tpu.memory_space<vmem>>, vector<16x2xf32>,
    } else {
    }
    return
  }
  func.func @transform_0(%arg0: i32, %arg1: i32) -> (i32, i32, i32, i32) {
    %c2_i32 = arith.constant 2 : i32
    %0 = arith.muli %arg0, %c2_i32 : i32
    %1 = arith.addi %0, %arg1 : i32
    %c0_i32 = arith.constant 0 : i32
    %c0_i32_0 = arith.constant 0 : i32
    %c0_i32_1 = arith.constant 0 : i32
    %c0_i32_2 = arith.constant 0 : i32
    return %1, %c0_i32, %c0_i32_0, %c0_i32_1 : i32, i32, i32, i32
  }
  func.func @transform_1(%arg0: i32, %arg1: i32) -> (i32, i32) {
    %c0_i32 = arith.constant 0 : i32
    %c0_i32_0 = arith.constant 0 : i32
    %c0_i32_1 = arith.constant 0 : i32
    return %c0_i32, %c0_i32_0 : i32, i32
  }
  func.func @transform_2(%arg0: i32, %arg1: i32) -> (i32, i32) {
    %c0_i32 = arith.constant 0 : i32
    %c0_i32_0 = arith.constant 0 : i32
    %c0_i32_1 = arith.constant 0 : i32
    return %c0_i32, %c0_i32_0 : i32, i32
  }
  func.func @transform_3(%arg0: i32, %arg1: i32) -> (i32, i32, i32) {
    %c0_i32 = arith.constant 0 : i32
    %c0_i32_0 = arith.constant 0 : i32
    %c0_i32_1 = arith.constant 0 : i32
    %c0_i32_2 = arith.constant 0 : i32
    return %c0_i32, %c0_i32_0, %c0_i32_1 : i32, i32, i32
  }
  func.func @transform_4(%arg0: i32, %arg1: i32) -> (i32, i32, i32) {
    %c0_i32 = arith.constant 0 : i32
    %c0_i32_0 = arith.constant 0 : i32
    %c0_i32_1 = arith.constant 0 : i32
    %c0_i32_2 = arith.constant 0 : i32
    return %c0_i32, %c0_i32_0, %c0_i32_1 : i32, i32, i32
  }
  func.func @transform_5(%arg0: i32, %arg1: i32) -> (i32, i32, i32, i32) {
    %c2_i32 = arith.constant 2 : i32
    %0 = arith.muli %arg0, %c2_i32 : i32
    %1 = arith.addi %0, %arg1 : i32
    %c0_i32 = arith.constant 0 : i32
    %c0_i32_0 = arith.constant 0 : i32
    %c0_i32_1 = arith.constant 0 : i32
    %c0_i32_2 = arith.constant 0 : i32
    return %1, %c0_i32, %c0_i32_0, %c0_i32_1 : i32, i32, i32, i32
  }
}

</mosaic_0001>

<llo_original>
// kernel: tpu_custom_call.1
$region0: #{tpu_custom_call.1}
  #allocation0 [shape = 'u32[]', space=smem, size = 0x4, offset = 0x4, fixed_abs, tag = 'smem constant byte address 0x4 - core index']
  #allocation1 [shape = 'u32[144,128]{1,0:T(1,128)}', space=vmem, size = 0x12000, scoped, tag = 'internal scratch']
  #allocation2 [shape = 'f32[16,2,8]{2,1,0:T(2,128)}', space=vmem, size = 0x4000, scoped, tag = 'scratch operand']
  #allocation3 [shape = 'f32[16,2]{1,0:T(8,128)}', space=vmem, size = 0x2000, scoped, tag = 'scratch operand']
  #allocation4 [shape = 'f32[16,2]{1,0:T(8,128)}', space=vmem, size = 0x2000, scoped, tag = 'scratch operand']
  %s0 = inlined_call_operand.vmem [shape: f32[2,4,2,8], index: 0, kind: input, shape index: {}]
  %s1 = inlined_call_operand.vmem [shape: f32[16,4], index: 1, kind: input, shape index: {}]
  %s2 = inlined_call_operand.vmem [shape: f32[4,16], index: 2, kind: input, shape index: {}]
  %s3 = inlined_call_operand.vmem [shape: f32[16,8,8], index: 3, kind: input, shape index: {}]
  %s4 = inlined_call_operand.vmem [shape: f32[4,16,8], index: 4, kind: input, shape index: {}]
  %s5 = inlined_call_operand.hbm [shape: f32[2,4,2,8], index: 5, kind: output, shape index: {}]
  %s6 = sld [smem:[#allocation0]]
  $region61: #{tpu_custom_call.1} parent=0
    _
  %s8 = ssub.s32 1, %s6
  %s9 = scalar_select 0, %s8, %s6
  $region1: #{tpu_custom_call.1} parent=0
    #allocation5 [shape = 'u8[8192]{0}', space=vmem, size = 0x2000, scoped, tag = 'output window, operand 0']
    #allocation6 [shape = 's32[2]{0}', space=sflag, size = 0x8, scoped, tag = 'scoped memory for tpu_custom_call.1']
    %10 = vsyncpa [#allocation6], 0
    %s11 = scalar_lea.sflag [#allocation6], 1
    %12 = vsyncpa %s11, 0
    loop: start=0, step=1, limit=4
    $region2: #{tpu_custom_call.1} parent=1 // loop_pre_header
      _
    $region3: #{tpu_custom_call.1} parent=1 // loop_header
      %s14 = sphi 0, %s18
      %p15 = scmp.ge.s32.totalorder %s14, 4
      %s21 = sphi 0, %s33
      %s22 = sphi 0, %s29
      %s23 = sphi 0, %s21
      %s24 = sphi 0, %s22
      %s25 = sphi 0, %s23
      %s26 = sphi 0, %s24
      %s40 = sphi 0, %s42
      %s43 = sphi 0, %s40
      %s44 = sphi 0, %s43
      %s60 = sphi 0, %s44
      %s64 = sphi 0, %s64
      %s66 = sphi 0, %s64
      %s67 = sphi 0, %s66
      %s81 = sphi 0, %s67
      %s85 = sphi 0, %s85
      %s87 = sphi 0, %s85
      %s88 = sphi 0, %s87
      %s102 = sphi 0, %s88
      %s106 = sphi 0, %s106
      %s108 = sphi 0, %s106
      %s109 = sphi 0, %s108
      %s123 = sphi 0, %s109
      %s127 = sphi 0, %s127
      %s129 = sphi 0, %s127
      %s130 = sphi 0, %s129
      %s144 = sphi 0, %s130
      %s154 = sphi 0, %s156
      %s157 = sphi 0, %s154
      %s158 = sphi 0, %s157
      %s174 = sphi 0, %s158
    $region4: #{tpu_custom_call.1} parent=1 // loop_header_branch
      %17 = sbr.rel (%p15) target = $region8
    $region5: #{tpu_custom_call.1} parent=1 // loop_body
      %s19 = ssub.s32 %s14, 1
      %s20 = ssub.s32 %s14, 2
      %s27 = sadd.s32 1, %s22
      %p28 = scmp.ge.s32.totalorder %s27, 2
      %s29 = scalar_select %p28, 0, %s27
      %s30 = sadd.s32 1, %s21
      %s31 = scalar_select %p28, %s30, %s21
      %p32 = scmp.ge.s32.totalorder %s31, 1
      %s33 = scalar_select %p32, 0, %s31
      %s34 = smul.u32 %s21, 2
      %s35 = sadd.s32 %s34, %s22
      %s36 = smul.u32 %s33, 2
      %s37 = sadd.s32 %s36, %s29
      %s38 = ssub.s32 %s35, %s37
      %p39 = scmp.eq.s32.totalorder %s38, 0
      %s41 = sadd.s32 %s40, 1
      %s42 = scalar_select %p39, %s40, %s41
      %p45 = pneg %p39
      %p46 = scmp.eq.s32.totalorder %s14, 1
      %p47 = por %p45, %p46
      %p48 = scmp.ne.s32.totalorder %s40, %s43
      %p49 = scmp.eq.s32.totalorder %s14, 0
      %p50 = por %p48, %p49
      %p51 = scmp.ne.s32.totalorder %s40, %s43
      %p52 = scmp.eq.s32.totalorder %s19, 1
      %p53 = por %p51, %p52
      %p54 = scmp.ne.s32.totalorder %s43, %s44
      %p55 = scmp.eq.s32.totalorder %s19, 0
      %p56 = por %p54, %p55
      %p57 = scmp.ne.s32.totalorder %s43, %s44
      %p58 = scmp.eq.s32.totalorder %s20, 1
      %p59 = por %p57, %p58
      %p61 = scmp.ne.s32.totalorder %s44, %s60
      %p62 = scmp.eq.s32.totalorder %s20, 0
      %p63 = por %p61, %p62
      %s65 = sadd.s32 %s64, 1
      %p68 = scmp.eq.s32.totalorder %s14, 1
      %p69 = scmp.ne.s32.totalorder %s64, %s66
      %p70 = scmp.eq.s32.totalorder %s14, 0
      %p71 = por %p69, %p70
      %p72 = scmp.ne.s32.totalorder %s64, %s66
      %p73 = scmp.eq.s32.totalorder %s19, 1
      %p74 = por %p72, %p73
      %p75 = scmp.ne.s32.totalorder %s66, %s67
      %p76 = scmp.eq.s32.totalorder %s19, 0
      %p77 = por %p75, %p76
      %p78 = scmp.ne.s32.totalorder %s66, %s67
      %p79 = scmp.eq.s32.totalorder %s20, 1
      %p80 = por %p78, %p79
      %p82 = scmp.ne.s32.totalorder %s67, %s81
      %p83 = scmp.eq.s32.totalorder %s20, 0
      %p84 = por %p82, %p83
      %s86 = sadd.s32 %s85, 1
      %p89 = scmp.eq.s32.totalorder %s14, 1
      %p90 = scmp.ne.s32.totalorder %s85, %s87
      %p91 = scmp.eq.s32.totalorder %s14, 0
      %p92 = por %p90, %p91
      %p93 = scmp.ne.s32.totalorder %s85, %s87
      %p94 = scmp.eq.s32.totalorder %s19, 1
      %p95 = por %p93, %p94
      %p96 = scmp.ne.s32.totalorder %s87, %s88
      %p97 = scmp.eq.s32.totalorder %s19, 0
      %p98 = por %p96, %p97
      %p99 = scmp.ne.s32.totalorder %s87, %s88
      %p100 = scmp.eq.s32.totalorder %s20, 1
      %p101 = por %p99, %p100
      %p103 = scmp.ne.s32.totalorder %s88, %s102
      %p104 = scmp.eq.s32.totalorder %s20, 0
      %p105 = por %p103, %p104
      %s107 = sadd.s32 %s106, 1
      %p110 = scmp.eq.s32.totalorder %s14, 1
      %p111 = scmp.ne.s32.totalorder %s106, %s108
      %p112 = scmp.eq.s32.totalorder %s14, 0
      %p113 = por %p111, %p112
      %p114 = scmp.ne.s32.totalorder %s106, %s108
      %p115 = scmp.eq.s32.totalorder %s19, 1
      %p116 = por %p114, %p115
      %p117 = scmp.ne.s32.totalorder %s108, %s109
      %p118 = scmp.eq.s32.totalorder %s19, 0
      %p119 = por %p117, %p118
      %p120 = scmp.ne.s32.totalorder %s108, %s109
      %p121 = scmp.eq.s32.totalorder %s20, 1
      %p122 = por %p120, %p121
      %p124 = scmp.ne.s32.totalorder %s109, %s123
      %p125 = scmp.eq.s32.totalorder %s20, 0
      %p126 = por %p124, %p125
      %s128 = sadd.s32 %s127, 1
      %p131 = scmp.eq.s32.totalorder %s14, 1
      %p132 = scmp.ne.s32.totalorder %s127, %s129
      %p133 = scmp.eq.s32.totalorder %s14, 0
      %p134 = por %p132, %p133
      %p135 = scmp.ne.s32.totalorder %s127, %s129
      %p136 = scmp.eq.s32.totalorder %s19, 1
      %p137 = por %p135, %p136
      %p138 = scmp.ne.s32.totalorder %s129, %s130
      %p139 = scmp.eq.s32.totalorder %s19, 0
      %p140 = por %p138, %p139
      %p141 = scmp.ne.s32.totalorder %s129, %s130
      %p142 = scmp.eq.s32.totalorder %s20, 1
      %p143 = por %p141, %p142
      %p145 = scmp.ne.s32.totalorder %s130, %s144
      %p146 = scmp.eq.s32.totalorder %s20, 0
      %p147 = por %p145, %p146
      %s148 = smul.u32 %s21, 2
      %s149 = sadd.s32 %s148, %s22
      %s150 = smul.u32 %s33, 2
      %s151 = sadd.s32 %s150, %s29
      %s152 = ssub.s32 %s149, %s151
      %p153 = scmp.eq.s32.totalorder %s152, 0
      %s155 = sadd.s32 %s154, 1
      %s156 = scalar_select %p153, %s154, %s155
      %p159 = pneg %p153
      %p160 = scmp.eq.s32.totalorder %s14, 1
      %p161 = por %p159, %p160
      %p162 = scmp.ne.s32.totalorder %s154, %s157
      %p163 = scmp.eq.s32.totalorder %s14, 0
      %p164 = por %p162, %p163
      %p165 = scmp.ne.s32.totalorder %s154, %s157
      %p166 = scmp.eq.s32.totalorder %s19, 1
      %p167 = por %p165, %p166
      %p168 = scmp.ne.s32.totalorder %s157, %s158
      %p169 = scmp.eq.s32.totalorder %s19, 0
      %p170 = por %p168, %p169
      %p171 = scmp.ne.s32.totalorder %s157, %s158
      %p172 = scmp.eq.s32.totalorder %s20, 1
      %p173 = por %p171, %p172
      %p175 = scmp.ne.s32.totalorder %s158, %s174
      %p176 = scmp.eq.s32.totalorder %s20, 0
      %p177 = por %p175, %p176
      %p178 = scmp.le.s32.totalorder 1, %s14
      %p179 = scmp.lt.s32.totalorder %s14, 3
      %p180 = pnand %p178, %p179
      %p181 = pneg %p180
      // Predicated region
      $region9: #{tpu_custom_call.1} parent=5 // pred_check
        _
      $region10: #{tpu_custom_call.1} parent=5 // pred_check_branch
        %183 = sbr.rel (%p180) target = $region12
      $region11: #{tpu_custom_call.1} parent=5 // pred_region
        %s184 = ssub.s32 %s14, 1
        // Predicated region
        $region13: #{tpu_custom_call.1} parent=11 // pred_check
          %p185 = pneg %p77
        $region14: #{tpu_custom_call.1} parent=11 // pred_check_branch
          %187 = sbr.rel (%p185) target = $region16
        $region15: #{tpu_custom_call.1} parent=11 // pred_region
          _
        $region16: #{tpu_custom_call.1} parent=11 // pred_fallthru
          _
        // Predicated region
        $region17: #{tpu_custom_call.1} parent=11 // pred_check
          %p188 = pneg %p98
        $region18: #{tpu_custom_call.1} parent=11 // pred_check_branch
          %190 = sbr.rel (%p188) target = $region20
        $region19: #{tpu_custom_call.1} parent=11 // pred_region
          _
        $region20: #{tpu_custom_call.1} parent=11 // pred_fallthru
          _
        // Predicated region
        $region21: #{tpu_custom_call.1} parent=11 // pred_check
          %p191 = pneg %p119
        $region22: #{tpu_custom_call.1} parent=11 // pred_check_branch
          %193 = sbr.rel (%p191) target = $region24
        $region23: #{tpu_custom_call.1} parent=11 // pred_region
          _
        $region24: #{tpu_custom_call.1} parent=11 // pred_fallthru
          _
        // Predicated region
        $region25: #{tpu_custom_call.1} parent=11 // pred_check
          %p194 = pneg %p140
        $region26: #{tpu_custom_call.1} parent=11 // pred_check_branch
          %196 = sbr.rel (%p194) target = $region28
        $region27: #{tpu_custom_call.1} parent=11 // pred_region
          _
        $region28: #{tpu_custom_call.1} parent=11 // pred_fallthru
          _
      $region12: #{tpu_custom_call.1} parent=5 // pred_fallthru
        _
      %p197 = scmp.lt.s32.totalorder %s14, 2
      // Predicated region
      $region29: #{tpu_custom_call.1} parent=5 // pred_check
        %p198 = pneg %p197
      $region30: #{tpu_custom_call.1} parent=5 // pred_check_branch
        %200 = sbr.rel (%p198) target = $region32
      $region31: #{tpu_custom_call.1} parent=5 // pred_region
        // Predicated region
        $region33: #{tpu_custom_call.1} parent=31 // pred_check
          %p201 = pneg %p50
        $region34: #{tpu_custom_call.1} parent=31 // pred_check_branch
          %203 = sbr.rel (%p201) target = $region36
        $region35: #{tpu_custom_call.1} parent=31 // pred_region
          %s204 = smul.u32 %s21, 2
          %s205 = sadd.s32 %s204, %s22
          %p206 = scmp.lt.s32.totalorder %s205, 1
          %s207 = scalar_select %p206, %s205, 1
          %s208 = smul.addr %s207, 4
          %s209 = smul.addr %s208, 2
          %s210 = scalar_lea.vmem %s0, %s209
          %s211 = smul.u32 %s21, 2
          %s212 = sadd.s32 %s211, %s22
        $region36: #{tpu_custom_call.1} parent=31 // pred_fallthru
          _
      $region32: #{tpu_custom_call.1} parent=5 // pred_fallthru
        _
      %p213 = scmp.le.s32.totalorder 1, %s14
      %p214 = scmp.lt.s32.totalorder %s14, 3
      %p215 = pnand %p213, %p214
      %p216 = pneg %p215
      // Predicated region
      $region37: #{tpu_custom_call.1} parent=5 // pred_check
        _
      $region38: #{tpu_custom_call.1} parent=5 // pred_check_branch
        %218 = sbr.rel (%p215) target = $region40
      $region39: #{tpu_custom_call.1} parent=5 // pred_region
        %s219 = ssub.s32 %s14, 1
        %s220 = smul.u32 %s23, 2
        %s221 = sadd.s32 %s220, %s24
        %p222 = scmp.lt.s32.totalorder %s221, 1
        %s223 = scalar_select %p222, %s221, 1
        %s224 = smul.addr %s223, 4
        %s225 = smul.addr %s224, 2
        %s226 = scalar_lea.vmem %s0, %s225
        %p227 = pneg %p56
        %p228 = pneg %p53
        %p229 = pneg %p77
        %p230 = pneg %p74
        %p231 = pneg %p98
        %p232 = pneg %p95
        %p233 = pneg %p119
        %p234 = pneg %p116
        %p235 = pneg %p140
        %p236 = pneg %p137
        %p237 = pneg %p170
        %p238 = pneg %p167
        %s239 = sand.u32 %s157, 1
        %s240 = scalar_lea.sflag [#allocation6], %s239
        %s241 = sand.u32 %s157, 1
        %s242 = smul.addr %s241, 8
        %s243 = scalar_lea.vmem [#allocation5], %s242
        %s244 = smul.u32 %s23, 2
        %s245 = sadd.s32 %s244, %s24
        %p246 = scmp.lt.s32.totalorder %s245, 1
        %s247 = scalar_select %p246, %s245, 1
        %s248 = smul.addr %s247, 4
        %s249 = smul.addr %s248, 2
        %s250 = scalar_lea.vmem %s0, %s249
        %s251 = smul.u32 %s23, 2
        %s252 = sadd.s32 %s251, %s24
        %s253 = smul.u32 %s23, 2
        %s254 = sadd.s32 %s253, %s24
        %p255 = scmp.eq.s32.totalorder %s24, 0
        // Predicated region
        $region41: #{tpu_custom_call.1} parent=39 // pred_check
          %p256 = pneg %p255
        $region42: #{tpu_custom_call.1} parent=39 // pred_check_branch
          %258 = sbr.rel (%p256) target = $region44
        $region43: #{tpu_custom_call.1} parent=39 // pred_region
          %vm259 = vcmask 15360
          %260 = vst.msk [vmem:[#allocation3] sm:$0xff] %vm259, 0.0
          %261 = vst.msk [vmem:[#allocation3 + $0x8] sm:$0xff] %vm259, 0.0
          %262 = vst.msk [vmem:[#allocation4] sm:$0xff] %vm259, 0.0
          %263 = vst.msk [vmem:[#allocation4 + $0x8] sm:$0xff] %vm259, 0.0
        $region44: #{tpu_custom_call.1} parent=39 // pred_fallthru
          _
        %v264 = vld [vmem:[%s1] sm:$0xff]
        %v265 = vld [vmem:[%s1 + $0x8] sm:$0xff]
        %v266 = vld [vmem:[%s2] sm:$0xf]
        %v267 = vld [vmem:[%s3] sm:$0xff]
        %v268 = vld [vmem:[%s3 + $0x8] sm:$0xff]
        %v269 = vld [vmem:[%s3 + $0x10] sm:$0xff]
        %v270 = vld [vmem:[%s3 + $0x18] sm:$0xff]
        %v271 = vld [vmem:[%s3 + $0x20] sm:$0xff]
        %v272 = vld [vmem:[%s3 + $0x28] sm:$0xff]
        %v273 = vld [vmem:[%s3 + $0x30] sm:$0xff]
        %v274 = vld [vmem:[%s3 + $0x38] sm:$0xff]
        %v275 = vld [vmem:[%s3 + $0x40] sm:$0xff]
        %v276 = vld [vmem:[%s3 + $0x48] sm:$0xff]
        %v277 = vld [vmem:[%s3 + $0x50] sm:$0xff]
        %v278 = vld [vmem:[%s3 + $0x58] sm:$0xff]
        %v279 = vld [vmem:[%s3 + $0x60] sm:$0xff]
        %v280 = vld [vmem:[%s3 + $0x68] sm:$0xff]
        %v281 = vld [vmem:[%s3 + $0x70] sm:$0xff]
        %v282 = vld [vmem:[%s3 + $0x78] sm:$0xff]
        %v283 = vld [vmem:[%s4] sm:$0xff]
        %v284 = vld [vmem:[%s4 + $0x8] sm:$0xff]
        %s285 = scalar_lea.vmem %s4, 16
        %v286 = vld [vmem:[%s285] sm:$0xff]
        %v287 = vld [vmem:[%s285 + $0x8] sm:$0xff]
        %s288 = scalar_lea.vmem %s4, 32
        %v289 = vld [vmem:[%s288] sm:$0xff]
        %v290 = vld [vmem:[%s288 + $0x8] sm:$0xff]
        %s291 = scalar_lea.vmem %s4, 48
        %v292 = vld [vmem:[%s291] sm:$0xff]
        %v293 = vld [vmem:[%s291 + $0x8] sm:$0xff]
        %v294 = vld [vmem:[%s250] sm:$0x1]
        %v295 = vld [vmem:[%s250 + $0x2] sm:$0x1]
        %v296 = vld [vmem:[%s250 + $0x4] sm:$0x1]
        %v297 = vld [vmem:[%s250 + $0x6] sm:$0x1]
        %v302 = vrot.slane %v295, 7
        %vm303 = vcmask 1041409
        %v304 = vsel %vm303, %v302, %v294
        %v305 = vrot.slane %v296, 6
        %vm306 = vcmask 1042434
        %v307 = vsel %vm306, %v305, %v304
        %v308 = vrot.slane %v297, 5
        %vm309 = vcmask 1043459
        %v310 = vsel %vm309, %v308, %v307
        %vm311 = vcmask 31744
        %v313 = vsel %vm311, %v264, 0
        %v316 = vsel %vm311, %v265, 0
        %vm318 = vcmask 1043456
        %v319 = vsel %vm318, %v310, 0
        %321 = vmatprep.subr.mxu0 0.0
        %322 = vmatpush1.msra.mxu0 %v319
        %323 = vmatprep.subr.mxu0 0.0
        %324 = vmatpush1.msra.mxu0 0.0
        %325 = vmatprep.subr.mxu0 0.0
        %326 = vmatpush1.msra.mxu0 0.0
        %327 = vmatprep.subr.mxu0 0.0
        %328 = vmatpush1.msra.mxu0 0.0
        %329 = vmatprep.subr.mxu0 0.0
        %330 = vmatpush1.msra.mxu0 0.0
        %331 = vmatprep.subr.mxu0 0.0
        %332 = vmatpush1.msra.mxu0 0.0
        %333 = vmatprep.subr.mxu0 0.0
        %334 = vmatpush1.msra.mxu0 0.0
        %335 = vmatprep.subr.mxu0 0.0
        %336 = vmatpush1.msra.mxu0 0.0
        %337 = vmatprep.subr.mxu0 0.0
        %338 = vmatpush1.msra.mxu0 0.0
        %339 = vmatprep.subr.mxu0 0.0
        %340 = vmatpush1.msra.mxu0 0.0
        %341 = vmatprep.subr.mxu0 0.0
        %342 = vmatpush1.msra.mxu0 0.0
        %343 = vmatprep.subr.mxu0 0.0
        %344 = vmatpush1.msra.mxu0 0.0
        %345 = vmatprep.subr.mxu0 0.0
        %346 = vmatpush1.msra.mxu0 0.0
        %347 = vmatprep.subr.mxu0 0.0
        %348 = vmatpush1.msra.mxu0 0.0
        %349 = vmatprep.subr.mxu0 0.0
        %350 = vmatpush1.msra.mxu0 0.0
        %351 = vmatprep.subr.mxu0 0.0
        %352 = vmatpush1.msra.mxu0 0.0
        %353 = vmatprep.subr.mxu0 0.0
        %354 = vmatpush1.msra.mxu0 0.0
        %355 = vmatprep.subr.mxu0 0.0
        %356 = vmatpush1.msra.mxu0 0.0
        %357 = vmatprep.subr.mxu0 0.0
        %358 = vmatpush1.msra.mxu0 0.0
        %359 = vmatprep.subr.mxu0 0.0
        %360 = vmatpush1.msra.mxu0 0.0
        %361 = vmatprep.subr.mxu0 0.0
        %362 = vmatpush1.msra.mxu0 0.0
        %363 = vmatprep.subr.mxu0 0.0
        %364 = vmatpush1.msra.mxu0 0.0
        %365 = vmatprep.subr.mxu0 0.0
        %366 = vmatpush1.msra.mxu0 0.0
        %367 = vmatprep.subr.mxu0 0.0
        %368 = vmatpush1.msra.mxu0 0.0
        %369 = vmatprep.subr.mxu0 0.0
        %370 = vmatpush1.msra.mxu0 0.0
        %371 = vmatprep.subr.mxu0 0.0
        %372 = vmatpush1.msra.mxu0 0.0
        %373 = vmatprep.subr.mxu0 0.0
        %374 = vmatpush1.msra.mxu0 0.0
        %375 = vmatprep.subr.mxu0 0.0
        %376 = vmatpush1.msra.mxu0 0.0
        %377 = vmatprep.subr.mxu0 0.0
        %378 = vmatpush1.msra.mxu0 0.0
        %379 = vmatprep.subr.mxu0 0.0
        %380 = vmatpush1.msra.mxu0 0.0
        %381 = vmatprep.subr.mxu0 0.0
        %382 = vmatpush1.msra.mxu0 0.0
        %383 = vmatprep.subr.mxu0 0.0
        %384 = vmatpush1.msra.mxu0 0.0
        %385 = vmatprep.mubr.f32.mxu0 0.0
        %386 = vmatmul.mubr.f32.gmra.mrb[0].mxu0 %v313
        %v387 = vpop.f32.mrb[0].mxu0
        %v388 = vadd.f32 0.0, %v387
        %v389 = vpop.f32.mrb[0].mxu0
        %390 = vmatprep.mubr.f32.mxu0 0.0
        %391 = vmatmul.mubr.f32.gmra.mrb[0].mxu0 %v316
        %v392 = vpop.f32.mrb[0].mxu0
        %v393 = vadd.f32 0.0, %v392
        %v394 = vpop.f32.mrb[0].mxu0
        %395 = vdwg.mxu0
        %v398 = vcombine.high %v388, %v388
        %v400 = vunpack.c.l.s4 1966171168
        %v401 = vunpack.c.0.s8 %v400
        %v402 = vlaneseq
        %v403 = vshrl.u32 %v402, 7
        %v404 = vsub.s32 %v401, %v403
        %v405 = vrot.slane %v388, %v404
        %v407 = vunpack.c.l.s4 1966171168
        %v408 = vunpack.c.0.s8 %v407
        %v409 = vlaneseq
        %v410 = vshrl.u32 %v409, 7
        %v411 = vsub.s32 %v408, %v410
        %v412 = vrot.slane %v398, %v411
        %v413 = vcombine.high %v405, %v405
        %v414 = vcombine.high %v412, %v412
        %v416 = vunpack.c.l.s4 1966171168
        %v417 = vunpack.c.0.s8 %v416
        %v418 = vlaneseq
        %v419 = vshrl.u32 %v418, 7
        %v420 = vsub.s32 %v417, %v419
        %v421 = vrot.slane %v405, %v420
        %v423 = vunpack.c.l.s4 1966171168
        %v424 = vunpack.c.0.s8 %v423
        %v425 = vlaneseq
        %v426 = vshrl.u32 %v425, 7
        %v427 = vsub.s32 %v424, %v426
        %v428 = vrot.slane %v412, %v427
        %v430 = vunpack.c.l.s4 1966171168
        %v431 = vunpack.c.0.s8 %v430
        %v432 = vlaneseq
        %v433 = vshrl.u32 %v432, 7
        %v434 = vsub.s32 %v431, %v433
        %v435 = vrot.slane %v413, %v434
        %v437 = vunpack.c.l.s4 1966171168
        %v438 = vunpack.c.0.s8 %v437
        %v439 = vlaneseq
        %v440 = vshrl.u32 %v439, 7
        %v441 = vsub.s32 %v438, %v440
        %v442 = vrot.slane %v414, %v441
        %v443 = vcombine.high %v421, %v421
        %v444 = vcombine.high %v428, %v428
        %v445 = vcombine.high %v435, %v435
        %v446 = vcombine.high %v442, %v442
        %v447 = vcombine.high %v393, %v393
        %v449 = vunpack.c.l.s4 1966171168
        %v450 = vunpack.c.0.s8 %v449
        %v451 = vlaneseq
        %v452 = vshrl.u32 %v451, 7
        %v453 = vsub.s32 %v450, %v452
        %v454 = vrot.slane %v393, %v453
        %v456 = vunpack.c.l.s4 1966171168
        %v457 = vunpack.c.0.s8 %v456
        %v458 = vlaneseq
        %v459 = vshrl.u32 %v458, 7
        %v460 = vsub.s32 %v457, %v459
        %v461 = vrot.slane %v447, %v460
        %v462 = vcombine.high %v454, %v454
        %v463 = vcombine.high %v461, %v461
        %v465 = vunpack.c.l.s4 1966171168
        %v466 = vunpack.c.0.s8 %v465
        %v467 = vlaneseq
        %v468 = vshrl.u32 %v467, 7
        %v469 = vsub.s32 %v466, %v468
        %v470 = vrot.slane %v454, %v469
        %v472 = vunpack.c.l.s4 1966171168
        %v473 = vunpack.c.0.s8 %v472
        %v474 = vlaneseq
        %v475 = vshrl.u32 %v474, 7
        %v476 = vsub.s32 %v473, %v475
        %v477 = vrot.slane %v461, %v476
        %v479 = vunpack.c.l.s4 1966171168
        %v480 = vunpack.c.0.s8 %v479
        %v481 = vlaneseq
        %v482 = vshrl.u32 %v481, 7
        %v483 = vsub.s32 %v480, %v482
        %v484 = vrot.slane %v462, %v483
        %v486 = vunpack.c.l.s4 1966171168
        %v487 = vunpack.c.0.s8 %v486
        %v488 = vlaneseq
        %v489 = vshrl.u32 %v488, 7
        %v490 = vsub.s32 %v487, %v489
        %v491 = vrot.slane %v463, %v490
        %v492 = vcombine.high %v470, %v470
        %v493 = vcombine.high %v477, %v477
        %v494 = vcombine.high %v484, %v484
        %v495 = vcombine.high %v491, %v491
        %vm512 = vcmask 57344
        %513 = vst.msk [vmem:[#allocation2] sm:$0x1] %vm512, %v421
        %514 = vst.msk [vmem:[#allocation2 + $0x2] sm:$0x1] %vm512, %v435
        %515 = vst.msk [vmem:[#allocation2 + $0x4] sm:$0x1] %vm512, %v443
        %516 = vst.msk [vmem:[#allocation2 + $0x6] sm:$0x1] %vm512, %v445
        %517 = vst.msk [vmem:[#allocation2 + $0x8] sm:$0x1] %vm512, %v428
        %518 = vst.msk [vmem:[#allocation2 + $0xa] sm:$0x1] %vm512, %v442
        %519 = vst.msk [vmem:[#allocation2 + $0xc] sm:$0x1] %vm512, %v444
        %520 = vst.msk [vmem:[#allocation2 + $0xe] sm:$0x1] %vm512, %v446
        %521 = vst.msk [vmem:[#allocation2 + $0x10] sm:$0x1] %vm512, %v470
        %522 = vst.msk [vmem:[#allocation2 + $0x12] sm:$0x1] %vm512, %v484
        %523 = vst.msk [vmem:[#allocation2 + $0x14] sm:$0x1] %vm512, %v492
        %524 = vst.msk [vmem:[#allocation2 + $0x16] sm:$0x1] %vm512, %v494
        %525 = vst.msk [vmem:[#allocation2 + $0x18] sm:$0x1] %vm512, %v477
        %526 = vst.msk [vmem:[#allocation2 + $0x1a] sm:$0x1] %vm512, %v491
        %527 = vst.msk [vmem:[#allocation2 + $0x1c] sm:$0x1] %vm512, %v493
        %528 = vst.msk [vmem:[#allocation2 + $0x1e] sm:$0x1] %vm512, %v495
        %v529 = vld [vmem:[%s250 + $0x1] sm:$0x1]
        %v530 = vld [vmem:[%s250 + $0x3] sm:$0x1]
        %v531 = vld [vmem:[%s250 + $0x5] sm:$0x1]
        %v532 = vld [vmem:[%s250 + $0x7] sm:$0x1]
        %v537 = vrot.slane %v530, 7
        %v538 = vsel %vm303, %v537, %v529
        %v539 = vrot.slane %v531, 6
        %v540 = vsel %vm306, %v539, %v538
        %v541 = vrot.slane %v532, 5
        %v542 = vsel %vm309, %v541, %v540
        %v543 = vsel %vm318, %v542, 0
        %545 = vmatprep.subr.mxu0 0.0
        %546 = vmatpush1.msra.mxu0 %v543
        %547 = vmatprep.subr.mxu0 0.0
        %548 = vmatpush1.msra.mxu0 0.0
        %549 = vmatprep.subr.mxu0 0.0
        %550 = vmatpush1.msra.mxu0 0.0
        %551 = vmatprep.subr.mxu0 0.0
        %552 = vmatpush1.msra.mxu0 0.0
        %553 = vmatprep.subr.mxu0 0.0
        %554 = vmatpush1.msra.mxu0 0.0
        %555 = vmatprep.subr.mxu0 0.0
        %556 = vmatpush1.msra.mxu0 0.0
        %557 = vmatprep.subr.mxu0 0.0
        %558 = vmatpush1.msra.mxu0 0.0
        %559 = vmatprep.subr.mxu0 0.0
        %560 = vmatpush1.msra.mxu0 0.0
        %561 = vmatprep.subr.mxu0 0.0
        %562 = vmatpush1.msra.mxu0 0.0
        %563 = vmatprep.subr.mxu0 0.0
        %564 = vmatpush1.msra.mxu0 0.0
        %565 = vmatprep.subr.mxu0 0.0
        %566 = vmatpush1.msra.mxu0 0.0
        %567 = vmatprep.subr.mxu0 0.0
        %568 = vmatpush1.msra.mxu0 0.0
        %569 = vmatprep.subr.mxu0 0.0
        %570 = vmatpush1.msra.mxu0 0.0
        %571 = vmatprep.subr.mxu0 0.0
        %572 = vmatpush1.msra.mxu0 0.0
        %573 = vmatprep.subr.mxu0 0.0
        %574 = vmatpush1.msra.mxu0 0.0
        %575 = vmatprep.subr.mxu0 0.0
        %576 = vmatpush1.msra.mxu0 0.0
        %577 = vmatprep.subr.mxu0 0.0
        %578 = vmatpush1.msra.mxu0 0.0
        %579 = vmatprep.subr.mxu0 0.0
        %580 = vmatpush1.msra.mxu0 0.0
        %581 = vmatprep.subr.mxu0 0.0
        %582 = vmatpush1.msra.mxu0 0.0
        %583 = vmatprep.subr.mxu0 0.0
        %584 = vmatpush1.msra.mxu0 0.0
        %585 = vmatprep.subr.mxu0 0.0
        %586 = vmatpush1.msra.mxu0 0.0
        %587 = vmatprep.subr.mxu0 0.0
        %588 = vmatpush1.msra.mxu0 0.0
        %589 = vmatprep.subr.mxu0 0.0
        %590 = vmatpush1.msra.mxu0 0.0
        %591 = vmatprep.subr.mxu0 0.0
        %592 = vmatpush1.msra.mxu0 0.0
        %593 = vmatprep.subr.mxu0 0.0
        %594 = vmatpush1.msra.mxu0 0.0
        %595 = vmatprep.subr.mxu0 0.0
        %596 = vmatpush1.msra.mxu0 0.0
        %597 = vmatprep.subr.mxu0 0.0
        %598 = vmatpush1.msra.mxu0 0.0
        %599 = vmatprep.subr.mxu0 0.0
        %600 = vmatpush1.msra.mxu0 0.0
        %601 = vmatprep.subr.mxu0 0.0
        %602 = vmatpush1.msra.mxu0 0.0
        %603 = vmatprep.subr.mxu0 0.0
        %604 = vmatpush1.msra.mxu0 0.0
        %605 = vmatprep.subr.mxu0 0.0
        %606 = vmatpush1.msra.mxu0 0.0
        %607 = vmatprep.subr.mxu0 0.0
        %608 = vmatpush1.msra.mxu0 0.0
        %609 = vmatprep.mubr.f32.mxu0 0.0
        %610 = vmatmul.mubr.f32.gmra.mrb[0].mxu0 %v313
        %v611 = vpop.f32.mrb[0].mxu0
        %v612 = vadd.f32 0.0, %v611
        %v613 = vpop.f32.mrb[0].mxu0
        %614 = vmatprep.mubr.f32.mxu0 0.0
        %615 = vmatmul.mubr.f32.gmra.mrb[0].mxu0 %v316
        %v616 = vpop.f32.mrb[0].mxu0
        %v617 = vadd.f32 0.0, %v616
        %v618 = vpop.f32.mrb[0].mxu0
        %619 = vdwg.mxu0
        %v622 = vcombine.high %v612, %v612
        %v624 = vunpack.c.l.s4 1966171168
        %v625 = vunpack.c.0.s8 %v624
        %v626 = vlaneseq
        %v627 = vshrl.u32 %v626, 7
        %v628 = vsub.s32 %v625, %v627
        %v629 = vrot.slane %v612, %v628
        %v631 = vunpack.c.l.s4 1966171168
        %v632 = vunpack.c.0.s8 %v631
        %v633 = vlaneseq
        %v634 = vshrl.u32 %v633, 7
        %v635 = vsub.s32 %v632, %v634
        %v636 = vrot.slane %v622, %v635
        %v637 = vcombine.high %v629, %v629
        %v638 = vcombine.high %v636, %v636
        %v640 = vunpack.c.l.s4 1966171168
        %v641 = vunpack.c.0.s8 %v640
        %v642 = vlaneseq
        %v643 = vshrl.u32 %v642, 7
        %v644 = vsub.s32 %v641, %v643
        %v645 = vrot.slane %v629, %v644
        %v647 = vunpack.c.l.s4 1966171168
        %v648 = vunpack.c.0.s8 %v647
        %v649 = vlaneseq
        %v650 = vshrl.u32 %v649, 7
        %v651 = vsub.s32 %v648, %v650
        %v652 = vrot.slane %v636, %v651
        %v654 = vunpack.c.l.s4 1966171168
        %v655 = vunpack.c.0.s8 %v654
        %v656 = vlaneseq
        %v657 = vshrl.u32 %v656, 7
        %v658 = vsub.s32 %v655, %v657
        %v659 = vrot.slane %v637, %v658
        %v661 = vunpack.c.l.s4 1966171168
        %v662 = vunpack.c.0.s8 %v661
        %v663 = vlaneseq
        %v664 = vshrl.u32 %v663, 7
        %v665 = vsub.s32 %v662, %v664
        %v666 = vrot.slane %v638, %v665
        %v667 = vcombine.high %v645, %v645
        %v668 = vcombine.high %v652, %v652
        %v669 = vcombine.high %v659, %v659
        %v670 = vcombine.high %v666, %v666
        %v671 = vcombine.high %v617, %v617
        %v673 = vunpack.c.l.s4 1966171168
        %v674 = vunpack.c.0.s8 %v673
        %v675 = vlaneseq
        %v676 = vshrl.u32 %v675, 7
        %v677 = vsub.s32 %v674, %v676
        %v678 = vrot.slane %v617, %v677
        %v680 = vunpack.c.l.s4 1966171168
        %v681 = vunpack.c.0.s8 %v680
        %v682 = vlaneseq
        %v683 = vshrl.u32 %v682, 7
        %v684 = vsub.s32 %v681, %v683
        %v685 = vrot.slane %v671, %v684
        %v686 = vcombine.high %v678, %v678
        %v687 = vcombine.high %v685, %v685
        %v689 = vunpack.c.l.s4 1966171168
        %v690 = vunpack.c.0.s8 %v689
        %v691 = vlaneseq
        %v692 = vshrl.u32 %v691, 7
        %v693 = vsub.s32 %v690, %v692
        %v694 = vrot.slane %v678, %v693
        %v696 = vunpack.c.l.s4 1966171168
        %v697 = vunpack.c.0.s8 %v696
        %v698 = vlaneseq
        %v699 = vshrl.u32 %v698, 7
        %v700 = vsub.s32 %v697, %v699
        %v701 = vrot.slane %v685, %v700
        %v703 = vunpack.c.l.s4 1966171168
        %v704 = vunpack.c.0.s8 %v703
        %v705 = vlaneseq
        %v706 = vshrl.u32 %v705, 7
        %v707 = vsub.s32 %v704, %v706
        %v708 = vrot.slane %v686, %v707
        %v710 = vunpack.c.l.s4 1966171168
        %v711 = vunpack.c.0.s8 %v710
        %v712 = vlaneseq
        %v713 = vshrl.u32 %v712, 7
        %v714 = vsub.s32 %v711, %v713
        %v715 = vrot.slane %v687, %v714
        %v716 = vcombine.high %v694, %v694
        %v717 = vcombine.high %v701, %v701
        %v718 = vcombine.high %v708, %v708
        %v719 = vcombine.high %v715, %v715
        %736 = vst.msk [vmem:[#allocation2 + $0x1] sm:$0x1] %vm512, %v645
        %737 = vst.msk [vmem:[#allocation2 + $0x3] sm:$0x1] %vm512, %v659
        %738 = vst.msk [vmem:[#allocation2 + $0x5] sm:$0x1] %vm512, %v667
        %739 = vst.msk [vmem:[#allocation2 + $0x7] sm:$0x1] %vm512, %v669
        %740 = vst.msk [vmem:[#allocation2 + $0x9] sm:$0x1] %vm512, %v652
        %741 = vst.msk [vmem:[#allocation2 + $0xb] sm:$0x1] %vm512, %v666
        %742 = vst.msk [vmem:[#allocation2 + $0xd] sm:$0x1] %vm512, %v668
        %743 = vst.msk [vmem:[#allocation2 + $0xf] sm:$0x1] %vm512, %v670
        %744 = vst.msk [vmem:[#allocation2 + $0x11] sm:$0x1] %vm512, %v694
        %745 = vst.msk [vmem:[#allocation2 + $0x13] sm:$0x1] %vm512, %v708
        %746 = vst.msk [vmem:[#allocation2 + $0x15] sm:$0x1] %vm512, %v716
        %747 = vst.msk [vmem:[#allocation2 + $0x17] sm:$0x1] %vm512, %v718
        %748 = vst.msk [vmem:[#allocation2 + $0x19] sm:$0x1] %vm512, %v701
        %749 = vst.msk [vmem:[#allocation2 + $0x1b] sm:$0x1] %vm512, %v715
        %750 = vst.msk [vmem:[#allocation2 + $0x1d] sm:$0x1] %vm512, %v717
        %751 = vst.msk [vmem:[#allocation2 + $0x1f] sm:$0x1] %vm512, %v719
        %v752 = vld [vmem:[#allocation2] sm:$0x3]
        %v753 = vld [vmem:[#allocation2 + $0x2] sm:$0x3]
        %v754 = vld [vmem:[#allocation2 + $0x4] sm:$0x3]
        %v755 = vld [vmem:[#allocation2 + $0x6] sm:$0x3]
        %v756 = vld [vmem:[#allocation2 + $0x8] sm:$0x3]
        %v757 = vld [vmem:[#allocation2 + $0xa] sm:$0x3]
        %v758 = vld [vmem:[#allocation2 + $0xc] sm:$0x3]
        %v759 = vld [vmem:[#allocation2 + $0xe] sm:$0x3]
        %v760 = vld [vmem:[#allocation2 + $0x10] sm:$0x3]
        %v761 = vld [vmem:[#allocation2 + $0x12] sm:$0x3]
        %v762 = vld [vmem:[#allocation2 + $0x14] sm:$0x3]
        %v763 = vld [vmem:[#allocation2 + $0x16] sm:$0x3]
        %v764 = vld [vmem:[#allocation2 + $0x18] sm:$0x3]
        %v765 = vld [vmem:[#allocation2 + $0x1a] sm:$0x3]
        %v766 = vld [vmem:[#allocation2 + $0x1c] sm:$0x3]
        %v767 = vld [vmem:[#allocation2 + $0x1e] sm:$0x3]
        %v770 = vcombine.high %v283, %v283
        %v772 = vunpack.c.l.s4 1966171168
        %v773 = vunpack.c.0.s8 %v772
        %v774 = vlaneseq
        %v775 = vshrl.u32 %v774, 7
        %v776 = vsub.s32 %v773, %v775
        %v777 = vrot.slane %v283, %v776
        %v779 = vunpack.c.l.s4 1966171168
        %v780 = vunpack.c.0.s8 %v779
        %v781 = vlaneseq
        %v782 = vshrl.u32 %v781, 7
        %v783 = vsub.s32 %v780, %v782
        %v784 = vrot.slane %v770, %v783
        %v785 = vcombine.high %v777, %v777
        %v786 = vcombine.high %v784, %v784
        %v788 = vunpack.c.l.s4 1966171168
        %v789 = vunpack.c.0.s8 %v788
        %v790 = vlaneseq
        %v791 = vshrl.u32 %v790, 7
        %v792 = vsub.s32 %v789, %v791
        %v793 = vrot.slane %v777, %v792
        %v795 = vunpack.c.l.s4 1966171168
        %v796 = vunpack.c.0.s8 %v795
        %v797 = vlaneseq
        %v798 = vshrl.u32 %v797, 7
        %v799 = vsub.s32 %v796, %v798
        %v800 = vrot.slane %v784, %v799
        %v802 = vunpack.c.l.s4 1966171168
        %v803 = vunpack.c.0.s8 %v802
        %v804 = vlaneseq
        %v805 = vshrl.u32 %v804, 7
        %v806 = vsub.s32 %v803, %v805
        %v807 = vrot.slane %v785, %v806
        %v809 = vunpack.c.l.s4 1966171168
        %v810 = vunpack.c.0.s8 %v809
        %v811 = vlaneseq
        %v812 = vshrl.u32 %v811, 7
        %v813 = vsub.s32 %v810, %v812
        %v814 = vrot.slane %v786, %v813
        %v815 = vcombine.high %v793, %v793
        %v816 = vcombine.high %v800, %v800
        %v817 = vcombine.high %v807, %v807
        %v818 = vcombine.high %v814, %v814
        %v819 = vcombine.high %v284, %v284
        %v821 = vunpack.c.l.s4 1966171168
        %v822 = vunpack.c.0.s8 %v821
        %v823 = vlaneseq
        %v824 = vshrl.u32 %v823, 7
        %v825 = vsub.s32 %v822, %v824
        %v826 = vrot.slane %v284, %v825
        %v828 = vunpack.c.l.s4 1966171168
        %v829 = vunpack.c.0.s8 %v828
        %v830 = vlaneseq
        %v831 = vshrl.u32 %v830, 7
        %v832 = vsub.s32 %v829, %v831
        %v833 = vrot.slane %v819, %v832
        %v834 = vcombine.high %v826, %v826
        %v835 = vcombine.high %v833, %v833
        %v837 = vunpack.c.l.s4 1966171168
        %v838 = vunpack.c.0.s8 %v837
        %v839 = vlaneseq
        %v840 = vshrl.u32 %v839, 7
        %v841 = vsub.s32 %v838, %v840
        %v842 = vrot.slane %v826, %v841
        %v844 = vunpack.c.l.s4 1966171168
        %v845 = vunpack.c.0.s8 %v844
        %v846 = vlaneseq
        %v847 = vshrl.u32 %v846, 7
        %v848 = vsub.s32 %v845, %v847
        %v849 = vrot.slane %v833, %v848
        %v851 = vunpack.c.l.s4 1966171168
        %v852 = vunpack.c.0.s8 %v851
        %v853 = vlaneseq
        %v854 = vshrl.u32 %v853, 7
        %v855 = vsub.s32 %v852, %v854
        %v856 = vrot.slane %v834, %v855
        %v858 = vunpack.c.l.s4 1966171168
        %v859 = vunpack.c.0.s8 %v858
        %v860 = vlaneseq
        %v861 = vshrl.u32 %v860, 7
        %v862 = vsub.s32 %v859, %v861
        %v863 = vrot.slane %v835, %v862
        %v864 = vcombine.high %v842, %v842
        %v865 = vcombine.high %v849, %v849
        %v866 = vcombine.high %v856, %v856
        %v867 = vcombine.high %v863, %v863
        %v868 = vld [vmem:[#allocation3] sm:$0xff]
        %v869 = vld [vmem:[#allocation3 + $0x8] sm:$0xff]
        %v870 = vlaneseq
        %v871 = vshrl.u32 %v870, 7
        %v872 = vsub.s32 0, %v871
        %v873 = vrot.slane %v868, %v872
        %875 = vbcast.lane.b32.xlu0 %v873, 256
        %v876 = vpop.permute.xlu0 %875
        %v877 = vlaneseq
        %v878 = vshrl.u32 %v877, 7
        %v879 = vsub.s32 1, %v878
        %v880 = vrot.slane %v868, %v879
        %882 = vbcast.lane.b32.xlu0 %v880, 256
        %v883 = vpop.permute.xlu0 %882
        %v884 = vlaneseq
        %v885 = vshrl.u32 %v884, 7
        %v886 = vsub.s32 2, %v885
        %v887 = vrot.slane %v868, %v886
        %889 = vbcast.lane.b32.xlu0 %v887, 256
        %v890 = vpop.permute.xlu0 %889
        %v891 = vlaneseq
        %v892 = vshrl.u32 %v891, 7
        %v893 = vsub.s32 3, %v892
        %v894 = vrot.slane %v868, %v893
        %896 = vbcast.lane.b32.xlu0 %v894, 256
        %v897 = vpop.permute.xlu0 %896
        %v898 = vlaneseq
        %v899 = vshrl.u32 %v898, 7
        %v900 = vsub.s32 4, %v899
        %v901 = vrot.slane %v868, %v900
        %903 = vbcast.lane.b32.xlu0 %v901, 256
        %v904 = vpop.permute.xlu0 %903
        %v905 = vlaneseq
        %v906 = vshrl.u32 %v905, 7
        %v907 = vsub.s32 5, %v906
        %v908 = vrot.slane %v868, %v907
        %910 = vbcast.lane.b32.xlu0 %v908, 256
        %v911 = vpop.permute.xlu0 %910
        %v912 = vlaneseq
        %v913 = vshrl.u32 %v912, 7
        %v914 = vsub.s32 6, %v913
        %v915 = vrot.slane %v868, %v914
        %917 = vbcast.lane.b32.xlu0 %v915, 256
        %v918 = vpop.permute.xlu0 %917
        %v919 = vlaneseq
        %v920 = vshrl.u32 %v919, 7
        %v921 = vsub.s32 7, %v920
        %v922 = vrot.slane %v868, %v921
        %924 = vbcast.lane.b32.xlu0 %v922, 256
        %v925 = vpop.permute.xlu0 %924
        %v926 = vlaneseq
        %v927 = vshrl.u32 %v926, 7
        %v928 = vsub.s32 0, %v927
        %v929 = vrot.slane %v869, %v928
        %931 = vbcast.lane.b32.xlu0 %v929, 256
        %v932 = vpop.permute.xlu0 %931
        %v933 = vlaneseq
        %v934 = vshrl.u32 %v933, 7
        %v935 = vsub.s32 1, %v934
        %v936 = vrot.slane %v869, %v935
        %938 = vbcast.lane.b32.xlu0 %v936, 256
        %v939 = vpop.permute.xlu0 %938
        %v940 = vlaneseq
        %v941 = vshrl.u32 %v940, 7
        %v942 = vsub.s32 2, %v941
        %v943 = vrot.slane %v869, %v942
        %945 = vbcast.lane.b32.xlu0 %v943, 256
        %v946 = vpop.permute.xlu0 %945
        %v947 = vlaneseq
        %v948 = vshrl.u32 %v947, 7
        %v949 = vsub.s32 3, %v948
        %v950 = vrot.slane %v869, %v949
        %952 = vbcast.lane.b32.xlu0 %v950, 256
        %v953 = vpop.permute.xlu0 %952
        %v954 = vlaneseq
        %v955 = vshrl.u32 %v954, 7
        %v956 = vsub.s32 4, %v955
        %v957 = vrot.slane %v869, %v956
        %959 = vbcast.lane.b32.xlu0 %v957, 256
        %v960 = vpop.permute.xlu0 %959
        %v961 = vlaneseq
        %v962 = vshrl.u32 %v961, 7
        %v963 = vsub.s32 5, %v962
        %v964 = vrot.slane %v869, %v963
        %966 = vbcast.lane.b32.xlu0 %v964, 256
        %v967 = vpop.permute.xlu0 %966
        %v968 = vlaneseq
        %v969 = vshrl.u32 %v968, 7
        %v970 = vsub.s32 6, %v969
        %v971 = vrot.slane %v869, %v970
        %973 = vbcast.lane.b32.xlu0 %v971, 256
        %v974 = vpop.permute.xlu0 %973
        %v975 = vlaneseq
        %v976 = vshrl.u32 %v975, 7
        %v977 = vsub.s32 7, %v976
        %v978 = vrot.slane %v869, %v977
        %980 = vbcast.lane.b32.xlu0 %v978, 256
        %v981 = vpop.permute.xlu0 %980
        %v982 = vlaneseq
        %v983 = vshrl.u32 %v982, 7
        %v984 = vsub.s32 0, %v983
        %v985 = vrot.slane %v793, %v984
        %v986 = vlaneseq
        %v987 = vshrl.u32 %v986, 7
        %v988 = vsub.s32 0, %v987
        %v989 = vrot.slane %v807, %v988
        %v990 = vlaneseq
        %v991 = vshrl.u32 %v990, 7
        %v992 = vsub.s32 0, %v991
        %v993 = vrot.slane %v815, %v992
        %v994 = vlaneseq
        %v995 = vshrl.u32 %v994, 7
        %v996 = vsub.s32 0, %v995
        %v997 = vrot.slane %v817, %v996
        %v998 = vlaneseq
        %v999 = vshrl.u32 %v998, 7
        %v1000 = vsub.s32 0, %v999
        %v1001 = vrot.slane %v800, %v1000
        %v1002 = vlaneseq
        %v1003 = vshrl.u32 %v1002, 7
        %v1004 = vsub.s32 0, %v1003
        %v1005 = vrot.slane %v814, %v1004
        %v1006 = vlaneseq
        %v1007 = vshrl.u32 %v1006, 7
        %v1008 = vsub.s32 0, %v1007
        %v1009 = vrot.slane %v816, %v1008
        %v1010 = vlaneseq
        %v1011 = vshrl.u32 %v1010, 7
        %v1012 = vsub.s32 0, %v1011
        %v1013 = vrot.slane %v818, %v1012
        %v1014 = vlaneseq
        %v1015 = vshrl.u32 %v1014, 7
        %v1016 = vsub.s32 0, %v1015
        %v1017 = vrot.slane %v842, %v1016
        %v1018 = vlaneseq
        %v1019 = vshrl.u32 %v1018, 7
        %v1020 = vsub.s32 0, %v1019
        %v1021 = vrot.slane %v856, %v1020
        %v1022 = vlaneseq
        %v1023 = vshrl.u32 %v1022, 7
        %v1024 = vsub.s32 0, %v1023
        %v1025 = vrot.slane %v864, %v1024
        %v1026 = vlaneseq
        %v1027 = vshrl.u32 %v1026, 7
        %v1028 = vsub.s32 0, %v1027
        %v1029 = vrot.slane %v866, %v1028
        %v1030 = vlaneseq
        %v1031 = vshrl.u32 %v1030, 7
        %v1032 = vsub.s32 0, %v1031
        %v1033 = vrot.slane %v849, %v1032
        %v1034 = vlaneseq
        %v1035 = vshrl.u32 %v1034, 7
        %v1036 = vsub.s32 0, %v1035
        %v1037 = vrot.slane %v863, %v1036
        %v1038 = vlaneseq
        %v1039 = vshrl.u32 %v1038, 7
        %v1040 = vsub.s32 0, %v1039
        %v1041 = vrot.slane %v865, %v1040
        %v1042 = vlaneseq
        %v1043 = vshrl.u32 %v1042, 7
        %v1044 = vsub.s32 0, %v1043
        %v1045 = vrot.slane %v867, %v1044
        %v1062 = vmul.f32 %v985, %v876
        %v1063 = vmul.f32 %v989, %v883
        %v1064 = vmul.f32 %v993, %v890
        %v1065 = vmul.f32 %v997, %v897
        %v1066 = vmul.f32 %v1001, %v904
        %v1067 = vmul.f32 %v1005, %v911
        %v1068 = vmul.f32 %v1009, %v918
        %v1069 = vmul.f32 %v1013, %v925
        %v1070 = vmul.f32 %v1017, %v932
        %v1071 = vmul.f32 %v1021, %v939
        %v1072 = vmul.f32 %v1025, %v946
        %v1073 = vmul.f32 %v1029, %v953
        %v1074 = vmul.f32 %v1033, %v960
        %v1075 = vmul.f32 %v1037, %v967
        %v1076 = vmul.f32 %v1041, %v974
        %v1077 = vmul.f32 %v1045, %v981
        %v1080 = vcombine.high %v286, %v286
        %v1082 = vunpack.c.l.s4 1966171168
        %v1083 = vunpack.c.0.s8 %v1082
        %v1084 = vlaneseq
        %v1085 = vshrl.u32 %v1084, 7
        %v1086 = vsub.s32 %v1083, %v1085
        %v1087 = vrot.slane %v286, %v1086
        %v1089 = vunpack.c.l.s4 1966171168
        %v1090 = vunpack.c.0.s8 %v1089
        %v1091 = vlaneseq
        %v1092 = vshrl.u32 %v1091, 7
        %v1093 = vsub.s32 %v1090, %v1092
        %v1094 = vrot.slane %v1080, %v1093
        %v1095 = vcombine.high %v1087, %v1087
        %v1096 = vcombine.high %v1094, %v1094
        %v1098 = vunpack.c.l.s4 1966171168
        %v1099 = vunpack.c.0.s8 %v1098
        %v1100 = vlaneseq
        %v1101 = vshrl.u32 %v1100, 7
        %v1102 = vsub.s32 %v1099, %v1101
        %v1103 = vrot.slane %v1087, %v1102
        %v1105 = vunpack.c.l.s4 1966171168
        %v1106 = vunpack.c.0.s8 %v1105
        %v1107 = vlaneseq
        %v1108 = vshrl.u32 %v1107, 7
        %v1109 = vsub.s32 %v1106, %v1108
        %v1110 = vrot.slane %v1094, %v1109
        %v1112 = vunpack.c.l.s4 1966171168
        %v1113 = vunpack.c.0.s8 %v1112
        %v1114 = vlaneseq
        %v1115 = vshrl.u32 %v1114, 7
        %v1116 = vsub.s32 %v1113, %v1115
        %v1117 = vrot.slane %v1095, %v1116
        %v1119 = vunpack.c.l.s4 1966171168
        %v1120 = vunpack.c.0.s8 %v1119
        %v1121 = vlaneseq
        %v1122 = vshrl.u32 %v1121, 7
        %v1123 = vsub.s32 %v1120, %v1122
        %v1124 = vrot.slane %v1096, %v1123
        %v1125 = vcombine.high %v1103, %v1103
        %v1126 = vcombine.high %v1110, %v1110
        %v1127 = vcombine.high %v1117, %v1117
        %v1128 = vcombine.high %v1124, %v1124
        %v1129 = vcombine.high %v287, %v287
        %v1131 = vunpack.c.l.s4 1966171168
        %v1132 = vunpack.c.0.s8 %v1131
        %v1133 = vlaneseq
        %v1134 = vshrl.u32 %v1133, 7
        %v1135 = vsub.s32 %v1132, %v1134
        %v1136 = vrot.slane %v287, %v1135
        %v1138 = vunpack.c.l.s4 1966171168
        %v1139 = vunpack.c.0.s8 %v1138
        %v1140 = vlaneseq
        %v1141 = vshrl.u32 %v1140, 7
        %v1142 = vsub.s32 %v1139, %v1141
        %v1143 = vrot.slane %v1129, %v1142
        %v1144 = vcombine.high %v1136, %v1136
        %v1145 = vcombine.high %v1143, %v1143
        %v1147 = vunpack.c.l.s4 1966171168
        %v1148 = vunpack.c.0.s8 %v1147
        %v1149 = vlaneseq
        %v1150 = vshrl.u32 %v1149, 7
        %v1151 = vsub.s32 %v1148, %v1150
        %v1152 = vrot.slane %v1136, %v1151
        %v1154 = vunpack.c.l.s4 1966171168
        %v1155 = vunpack.c.0.s8 %v1154
        %v1156 = vlaneseq
        %v1157 = vshrl.u32 %v1156, 7
        %v1158 = vsub.s32 %v1155, %v1157
        %v1159 = vrot.slane %v1143, %v1158
        %v1161 = vunpack.c.l.s4 1966171168
        %v1162 = vunpack.c.0.s8 %v1161
        %v1163 = vlaneseq
        %v1164 = vshrl.u32 %v1163, 7
        %v1165 = vsub.s32 %v1162, %v1164
        %v1166 = vrot.slane %v1144, %v1165
        %v1168 = vunpack.c.l.s4 1966171168
        %v1169 = vunpack.c.0.s8 %v1168
        %v1170 = vlaneseq
        %v1171 = vshrl.u32 %v1170, 7
        %v1172 = vsub.s32 %v1169, %v1171
        %v1173 = vrot.slane %v1145, %v1172
        %v1174 = vcombine.high %v1152, %v1152
        %v1175 = vcombine.high %v1159, %v1159
        %v1176 = vcombine.high %v1166, %v1166
        %v1177 = vcombine.high %v1173, %v1173
        %v1178 = vld [vmem:[#allocation4] sm:$0xff]
        %v1179 = vld [vmem:[#allocation4 + $0x8] sm:$0xff]
        %v1180 = vlaneseq
        %v1181 = vshrl.u32 %v1180, 7
        %v1182 = vsub.s32 0, %v1181
        %v1183 = vrot.slane %v1178, %v1182
        %1185 = vbcast.lane.b32.xlu0 %v1183, 256
        %v1186 = vpop.permute.xlu0 %1185
        %v1187 = vlaneseq
        %v1188 = vshrl.u32 %v1187, 7
        %v1189 = vsub.s32 1, %v1188
        %v1190 = vrot.slane %v1178, %v1189
        %1192 = vbcast.lane.b32.xlu0 %v1190, 256
        %v1193 = vpop.permute.xlu0 %1192
        %v1194 = vlaneseq
        %v1195 = vshrl.u32 %v1194, 7
        %v1196 = vsub.s32 2, %v1195
        %v1197 = vrot.slane %v1178, %v1196
        %1199 = vbcast.lane.b32.xlu0 %v1197, 256
        %v1200 = vpop.permute.xlu0 %1199
        %v1201 = vlaneseq
        %v1202 = vshrl.u32 %v1201, 7
        %v1203 = vsub.s32 3, %v1202
        %v1204 = vrot.slane %v1178, %v1203
        %1206 = vbcast.lane.b32.xlu0 %v1204, 256
        %v1207 = vpop.permute.xlu0 %1206
        %v1208 = vlaneseq
        %v1209 = vshrl.u32 %v1208, 7
        %v1210 = vsub.s32 4, %v1209
        %v1211 = vrot.slane %v1178, %v1210
        %1213 = vbcast.lane.b32.xlu0 %v1211, 256
        %v1214 = vpop.permute.xlu0 %1213
        %v1215 = vlaneseq
        %v1216 = vshrl.u32 %v1215, 7
        %v1217 = vsub.s32 5, %v1216
        %v1218 = vrot.slane %v1178, %v1217
        %1220 = vbcast.lane.b32.xlu0 %v1218, 256
        %v1221 = vpop.permute.xlu0 %1220
        %v1222 = vlaneseq
        %v1223 = vshrl.u32 %v1222, 7
        %v1224 = vsub.s32 6, %v1223
        %v1225 = vrot.slane %v1178, %v1224
        %1227 = vbcast.lane.b32.xlu0 %v1225, 256
        %v1228 = vpop.permute.xlu0 %1227
        %v1229 = vlaneseq
        %v1230 = vshrl.u32 %v1229, 7
        %v1231 = vsub.s32 7, %v1230
        %v1232 = vrot.slane %v1178, %v1231
        %1234 = vbcast.lane.b32.xlu0 %v1232, 256
        %v1235 = vpop.permute.xlu0 %1234
        %v1236 = vlaneseq
        %v1237 = vshrl.u32 %v1236, 7
        %v1238 = vsub.s32 0, %v1237
        %v1239 = vrot.slane %v1179, %v1238
        %1241 = vbcast.lane.b32.xlu0 %v1239, 256
        %v1242 = vpop.permute.xlu0 %1241
        %v1243 = vlaneseq
        %v1244 = vshrl.u32 %v1243, 7
        %v1245 = vsub.s32 1, %v1244
        %v1246 = vrot.slane %v1179, %v1245
        %1248 = vbcast.lane.b32.xlu0 %v1246, 256
        %v1249 = vpop.permute.xlu0 %1248
        %v1250 = vlaneseq
        %v1251 = vshrl.u32 %v1250, 7
        %v1252 = vsub.s32 2, %v1251
        %v1253 = vrot.slane %v1179, %v1252
        %1255 = vbcast.lane.b32.xlu0 %v1253, 256
        %v1256 = vpop.permute.xlu0 %1255
        %v1257 = vlaneseq
        %v1258 = vshrl.u32 %v1257, 7
        %v1259 = vsub.s32 3, %v1258
        %v1260 = vrot.slane %v1179, %v1259
        %1262 = vbcast.lane.b32.xlu0 %v1260, 256
        %v1263 = vpop.permute.xlu0 %1262
        %v1264 = vlaneseq
        %v1265 = vshrl.u32 %v1264, 7
        %v1266 = vsub.s32 4, %v1265
        %v1267 = vrot.slane %v1179, %v1266
        %1269 = vbcast.lane.b32.xlu0 %v1267, 256
        %v1270 = vpop.permute.xlu0 %1269
        %v1271 = vlaneseq
        %v1272 = vshrl.u32 %v1271, 7
        %v1273 = vsub.s32 5, %v1272
        %v1274 = vrot.slane %v1179, %v1273
        %1276 = vbcast.lane.b32.xlu0 %v1274, 256
        %v1277 = vpop.permute.xlu0 %1276
        %v1278 = vlaneseq
        %v1279 = vshrl.u32 %v1278, 7
        %v1280 = vsub.s32 6, %v1279
        %v1281 = vrot.slane %v1179, %v1280
        %1283 = vbcast.lane.b32.xlu0 %v1281, 256
        %v1284 = vpop.permute.xlu0 %1283
        %v1285 = vlaneseq
        %v1286 = vshrl.u32 %v1285, 7
        %v1287 = vsub.s32 7, %v1286
        %v1288 = vrot.slane %v1179, %v1287
        %1290 = vbcast.lane.b32.xlu0 %v1288, 256
        %v1291 = vpop.permute.xlu0 %1290
        %v1292 = vlaneseq
        %v1293 = vshrl.u32 %v1292, 7
        %v1294 = vsub.s32 0, %v1293
        %v1295 = vrot.slane %v1103, %v1294
        %v1296 = vlaneseq
        %v1297 = vshrl.u32 %v1296, 7
        %v1298 = vsub.s32 0, %v1297
        %v1299 = vrot.slane %v1117, %v1298
        %v1300 = vlaneseq
        %v1301 = vshrl.u32 %v1300, 7
        %v1302 = vsub.s32 0, %v1301
        %v1303 = vrot.slane %v1125, %v1302
        %v1304 = vlaneseq
        %v1305 = vshrl.u32 %v1304, 7
        %v1306 = vsub.s32 0, %v1305
        %v1307 = vrot.slane %v1127, %v1306
        %v1308 = vlaneseq
        %v1309 = vshrl.u32 %v1308, 7
        %v1310 = vsub.s32 0, %v1309
        %v1311 = vrot.slane %v1110, %v1310
        %v1312 = vlaneseq
        %v1313 = vshrl.u32 %v1312, 7
        %v1314 = vsub.s32 0, %v1313
        %v1315 = vrot.slane %v1124, %v1314
        %v1316 = vlaneseq
        %v1317 = vshrl.u32 %v1316, 7
        %v1318 = vsub.s32 0, %v1317
        %v1319 = vrot.slane %v1126, %v1318
        %v1320 = vlaneseq
        %v1321 = vshrl.u32 %v1320, 7
        %v1322 = vsub.s32 0, %v1321
        %v1323 = vrot.slane %v1128, %v1322
        %v1324 = vlaneseq
        %v1325 = vshrl.u32 %v1324, 7
        %v1326 = vsub.s32 0, %v1325
        %v1327 = vrot.slane %v1152, %v1326
        %v1328 = vlaneseq
        %v1329 = vshrl.u32 %v1328, 7
        %v1330 = vsub.s32 0, %v1329
        %v1331 = vrot.slane %v1166, %v1330
        %v1332 = vlaneseq
        %v1333 = vshrl.u32 %v1332, 7
        %v1334 = vsub.s32 0, %v1333
        %v1335 = vrot.slane %v1174, %v1334
        %v1336 = vlaneseq
        %v1337 = vshrl.u32 %v1336, 7
        %v1338 = vsub.s32 0, %v1337
        %v1339 = vrot.slane %v1176, %v1338
        %v1340 = vlaneseq
        %v1341 = vshrl.u32 %v1340, 7
        %v1342 = vsub.s32 0, %v1341
        %v1343 = vrot.slane %v1159, %v1342
        %v1344 = vlaneseq
        %v1345 = vshrl.u32 %v1344, 7
        %v1346 = vsub.s32 0, %v1345
        %v1347 = vrot.slane %v1173, %v1346
        %v1348 = vlaneseq
        %v1349 = vshrl.u32 %v1348, 7
        %v1350 = vsub.s32 0, %v1349
        %v1351 = vrot.slane %v1175, %v1350
        %v1352 = vlaneseq
        %v1353 = vshrl.u32 %v1352, 7
        %v1354 = vsub.s32 0, %v1353
        %v1355 = vrot.slane %v1177, %v1354
        %v1372 = vmul.f32 %v1295, %v1186
        %v1373 = vmul.f32 %v1299, %v1193
        %v1374 = vmul.f32 %v1303, %v1200
        %v1375 = vmul.f32 %v1307, %v1207
        %v1376 = vmul.f32 %v1311, %v1214
        %v1377 = vmul.f32 %v1315, %v1221
        %v1378 = vmul.f32 %v1319, %v1228
        %v1379 = vmul.f32 %v1323, %v1235
        %v1380 = vmul.f32 %v1327, %v1242
        %v1381 = vmul.f32 %v1331, %v1249
        %v1382 = vmul.f32 %v1335, %v1256
        %v1383 = vmul.f32 %v1339, %v1263
        %v1384 = vmul.f32 %v1343, %v1270
        %v1385 = vmul.f32 %v1347, %v1277
        %v1386 = vmul.f32 %v1351, %v1284
        %v1387 = vmul.f32 %v1355, %v1291
        %v1388 = vsub.f32 %v1062, %v1372
        %v1389 = vsub.f32 %v1063, %v1373
        %v1390 = vsub.f32 %v1064, %v1374
        %v1391 = vsub.f32 %v1065, %v1375
        %v1392 = vsub.f32 %v1066, %v1376
        %v1393 = vsub.f32 %v1067, %v1377
        %v1394 = vsub.f32 %v1068, %v1378
        %v1395 = vsub.f32 %v1069, %v1379
        %v1396 = vsub.f32 %v1070, %v1380
        %v1397 = vsub.f32 %v1071, %v1381
        %v1398 = vsub.f32 %v1072, %v1382
        %v1399 = vsub.f32 %v1073, %v1383
        %v1400 = vsub.f32 %v1074, %v1384
        %v1401 = vsub.f32 %v1075, %v1385
        %v1402 = vsub.f32 %v1076, %v1386
        %v1403 = vsub.f32 %v1077, %v1387
        %vm1404 = vcmask 64512
        %v1406 = vsel %vm1404, %v752, 0
        %v1409 = vsel %vm1404, %v267, 0
        %1411 = vmatprep.subr.mxu0 0.0
        %1412 = vmatpush1.xpose.msra.mxu0 %v1409
        %1413 = vmatprep.subr.mxu0 0.0
        %1414 = vmatpush1.xpose.msra.mxu0 0.0
        %1415 = vmatprep.subr.mxu0 0.0
        %1416 = vmatpush1.xpose.msra.mxu0 0.0
        %1417 = vmatprep.subr.mxu0 0.0
        %1418 = vmatpush1.xpose.msra.mxu0 0.0
        %1419 = vmatprep.subr.mxu0 0.0
        %1420 = vmatpush1.xpose.msra.mxu0 0.0
        %1421 = vmatprep.subr.mxu0 0.0
        %1422 = vmatpush1.xpose.msra.mxu0 0.0
        %1423 = vmatprep.subr.mxu0 0.0
        %1424 = vmatpush1.xpose.msra.mxu0 0.0
        %1425 = vmatprep.subr.mxu0 0.0
        %1426 = vmatpush1.xpose.msra.mxu0 0.0
        %1427 = vmatprep.subr.mxu0 0.0
        %1428 = vmatpush1.xpose.msra.mxu0 0.0
        %1429 = vmatprep.subr.mxu0 0.0
        %1430 = vmatpush1.xpose.msra.mxu0 0.0
        %1431 = vmatprep.subr.mxu0 0.0
        %1432 = vmatpush1.xpose.msra.mxu0 0.0
        %1433 = vmatprep.subr.mxu0 0.0
        %1434 = vmatpush1.xpose.msra.mxu0 0.0
        %1435 = vmatprep.subr.mxu0 0.0
        %1436 = vmatpush1.xpose.msra.mxu0 0.0
        %1437 = vmatprep.subr.mxu0 0.0
        %1438 = vmatpush1.xpose.msra.mxu0 0.0
        %1439 = vmatprep.subr.mxu0 0.0
        %1440 = vmatpush1.xpose.msra.mxu0 0.0
        %1441 = vmatprep.subr.mxu0 0.0
        %1442 = vmatpush1.xpose.msra.mxu0 0.0
        %1443 = vmatprep.subr.mxu0 0.0
        %1444 = vmatpush1.xpose.msra.mxu0 0.0
        %1445 = vmatprep.subr.mxu0 0.0
        %1446 = vmatpush1.xpose.msra.mxu0 0.0
        %1447 = vmatprep.subr.mxu0 0.0
        %1448 = vmatpush1.xpose.msra.mxu0 0.0
        %1449 = vmatprep.subr.mxu0 0.0
        %1450 = vmatpush1.xpose.msra.mxu0 0.0
        %1451 = vmatprep.subr.mxu0 0.0
        %1452 = vmatpush1.xpose.msra.mxu0 0.0
        %1453 = vmatprep.subr.mxu0 0.0
        %1454 = vmatpush1.xpose.msra.mxu0 0.0
        %1455 = vmatprep.subr.mxu0 0.0
        %1456 = vmatpush1.xpose.msra.mxu0 0.0
        %1457 = vmatprep.subr.mxu0 0.0
        %1458 = vmatpush1.xpose.msra.mxu0 0.0
        %1459 = vmatprep.subr.mxu0 0.0
        %1460 = vmatpush1.xpose.msra.mxu0 0.0
        %1461 = vmatprep.subr.mxu0 0.0
        %1462 = vmatpush1.xpose.msra.mxu0 0.0
        %1463 = vmatprep.subr.mxu0 0.0
        %1464 = vmatpush1.xpose.msra.mxu0 0.0
        %1465 = vmatprep.subr.mxu0 0.0
        %1466 = vmatpush1.xpose.msra.mxu0 0.0
        %1467 = vmatprep.subr.mxu0 0.0
        %1468 = vmatpush1.xpose.msra.mxu0 0.0
        %1469 = vmatprep.subr.mxu0 0.0
        %1470 = vmatpush1.xpose.msra.mxu0 0.0
        %1471 = vmatprep.subr.mxu0 0.0
        %1472 = vmatpush1.xpose.msra.mxu0 0.0
        %1473 = vmatprep.subr.mxu0 0.0
        %1474 = vmatpush1.xpose.msra.mxu0 0.0
        %1475 = vmatprep.mubr.f32.mxu0 0.0
        %1476 = vmatmul.mubr.f32.gmra.mrb[0].mxu0 %v1406
        %v1477 = vpop.f32.mrb[0].mxu0
        %v1478 = vadd.f32 %v1388, %v1477
        %v1479 = vpop.f32.mrb[0].mxu0
        %1480 = vdwg.mxu0
        %v1482 = vsel %vm1404, %v753, 0
        %v1485 = vsel %vm1404, %v268, 0
        %1487 = vmatprep.subr.mxu0 0.0
        %1488 = vmatpush1.xpose.msra.mxu0 %v1485
        %1489 = vmatprep.subr.mxu0 0.0
        %1490 = vmatpush1.xpose.msra.mxu0 0.0
        %1491 = vmatprep.subr.mxu0 0.0
        %1492 = vmatpush1.xpose.msra.mxu0 0.0
        %1493 = vmatprep.subr.mxu0 0.0
        %1494 = vmatpush1.xpose.msra.mxu0 0.0
        %1495 = vmatprep.subr.mxu0 0.0
        %1496 = vmatpush1.xpose.msra.mxu0 0.0
        %1497 = vmatprep.subr.mxu0 0.0
        %1498 = vmatpush1.xpose.msra.mxu0 0.0
        %1499 = vmatprep.subr.mxu0 0.0
        %1500 = vmatpush1.xpose.msra.mxu0 0.0
        %1501 = vmatprep.subr.mxu0 0.0
        %1502 = vmatpush1.xpose.msra.mxu0 0.0
        %1503 = vmatprep.subr.mxu0 0.0
        %1504 = vmatpush1.xpose.msra.mxu0 0.0
        %1505 = vmatprep.subr.mxu0 0.0
        %1506 = vmatpush1.xpose.msra.mxu0 0.0
        %1507 = vmatprep.subr.mxu0 0.0
        %1508 = vmatpush1.xpose.msra.mxu0 0.0
        %1509 = vmatprep.subr.mxu0 0.0
        %1510 = vmatpush1.xpose.msra.mxu0 0.0
        %1511 = vmatprep.subr.mxu0 0.0
        %1512 = vmatpush1.xpose.msra.mxu0 0.0
        %1513 = vmatprep.subr.mxu0 0.0
        %1514 = vmatpush1.xpose.msra.mxu0 0.0
        %1515 = vmatprep.subr.mxu0 0.0
        %1516 = vmatpush1.xpose.msra.mxu0 0.0
        %1517 = vmatprep.subr.mxu0 0.0
        %1518 = vmatpush1.xpose.msra.mxu0 0.0
        %1519 = vmatprep.subr.mxu0 0.0
        %1520 = vmatpush1.xpose.msra.mxu0 0.0
        %1521 = vmatprep.subr.mxu0 0.0
        %1522 = vmatpush1.xpose.msra.mxu0 0.0
        %1523 = vmatprep.subr.mxu0 0.0
        %1524 = vmatpush1.xpose.msra.mxu0 0.0
        %1525 = vmatprep.subr.mxu0 0.0
        %1526 = vmatpush1.xpose.msra.mxu0 0.0
        %1527 = vmatprep.subr.mxu0 0.0
        %1528 = vmatpush1.xpose.msra.mxu0 0.0
        %1529 = vmatprep.subr.mxu0 0.0
        %1530 = vmatpush1.xpose.msra.mxu0 0.0
        %1531 = vmatprep.subr.mxu0 0.0
        %1532 = vmatpush1.xpose.msra.mxu0 0.0
        %1533 = vmatprep.subr.mxu0 0.0
        %1534 = vmatpush1.xpose.msra.mxu0 0.0
        %1535 = vmatprep.subr.mxu0 0.0
        %1536 = vmatpush1.xpose.msra.mxu0 0.0
        %1537 = vmatprep.subr.mxu0 0.0
        %1538 = vmatpush1.xpose.msra.mxu0 0.0
        %1539 = vmatprep.subr.mxu0 0.0
        %1540 = vmatpush1.xpose.msra.mxu0 0.0
        %1541 = vmatprep.subr.mxu0 0.0
        %1542 = vmatpush1.xpose.msra.mxu0 0.0
        %1543 = vmatprep.subr.mxu0 0.0
        %1544 = vmatpush1.xpose.msra.mxu0 0.0
        %1545 = vmatprep.subr.mxu0 0.0
        %1546 = vmatpush1.xpose.msra.mxu0 0.0
        %1547 = vmatprep.subr.mxu0 0.0
        %1548 = vmatpush1.xpose.msra.mxu0 0.0
        %1549 = vmatprep.subr.mxu0 0.0
        %1550 = vmatpush1.xpose.msra.mxu0 0.0
        %1551 = vmatprep.mubr.f32.mxu0 0.0
        %1552 = vmatmul.mubr.f32.gmra.mrb[0].mxu0 %v1482
        %v1553 = vpop.f32.mrb[0].mxu0
        %v1554 = vadd.f32 %v1389, %v1553
        %v1555 = vpop.f32.mrb[0].mxu0
        %1556 = vdwg.mxu0
        %v1558 = vsel %vm1404, %v754, 0
        %v1561 = vsel %vm1404, %v269, 0
        %1563 = vmatprep.subr.mxu0 0.0
        %1564 = vmatpush1.xpose.msra.mxu0 %v1561
        %1565 = vmatprep.subr.mxu0 0.0
        %1566 = vmatpush1.xpose.msra.mxu0 0.0
        %1567 = vmatprep.subr.mxu0 0.0
        %1568 = vmatpush1.xpose.msra.mxu0 0.0
        %1569 = vmatprep.subr.mxu0 0.0
        %1570 = vmatpush1.xpose.msra.mxu0 0.0
        %1571 = vmatprep.subr.mxu0 0.0
        %1572 = vmatpush1.xpose.msra.mxu0 0.0
        %1573 = vmatprep.subr.mxu0 0.0
        %1574 = vmatpush1.xpose.msra.mxu0 0.0
        %1575 = vmatprep.subr.mxu0 0.0
        %1576 = vmatpush1.xpose.msra.mxu0 0.0
        %1577 = vmatprep.subr.mxu0 0.0
        %1578 = vmatpush1.xpose.msra.mxu0 0.0
        %1579 = vmatprep.subr.mxu0 0.0
        %1580 = vmatpush1.xpose.msra.mxu0 0.0
        %1581 = vmatprep.subr.mxu0 0.0
        %1582 = vmatpush1.xpose.msra.mxu0 0.0
        %1583 = vmatprep.subr.mxu0 0.0
        %1584 = vmatpush1.xpose.msra.mxu0 0.0
        %1585 = vmatprep.subr.mxu0 0.0
        %1586 = vmatpush1.xpose.msra.mxu0 0.0
        %1587 = vmatprep.subr.mxu0 0.0
        %1588 = vmatpush1.xpose.msra.mxu0 0.0
        %1589 = vmatprep.subr.mxu0 0.0
        %1590 = vmatpush1.xpose.msra.mxu0 0.0
        %1591 = vmatprep.subr.mxu0 0.0
        %1592 = vmatpush1.xpose.msra.mxu0 0.0
        %1593 = vmatprep.subr.mxu0 0.0
        %1594 = vmatpush1.xpose.msra.mxu0 0.0
        %1595 = vmatprep.subr.mxu0 0.0
        %1596 = vmatpush1.xpose.msra.mxu0 0.0
        %1597 = vmatprep.subr.mxu0 0.0
        %1598 = vmatpush1.xpose.msra.mxu0 0.0
        %1599 = vmatprep.subr.mxu0 0.0
        %1600 = vmatpush1.xpose.msra.mxu0 0.0
        %1601 = vmatprep.subr.mxu0 0.0
        %1602 = vmatpush1.xpose.msra.mxu0 0.0
        %1603 = vmatprep.subr.mxu0 0.0
        %1604 = vmatpush1.xpose.msra.mxu0 0.0
        %1605 = vmatprep.subr.mxu0 0.0
        %1606 = vmatpush1.xpose.msra.mxu0 0.0
        %1607 = vmatprep.subr.mxu0 0.0
        %1608 = vmatpush1.xpose.msra.mxu0 0.0
        %1609 = vmatprep.subr.mxu0 0.0
        %1610 = vmatpush1.xpose.msra.mxu0 0.0
        %1611 = vmatprep.subr.mxu0 0.0
        %1612 = vmatpush1.xpose.msra.mxu0 0.0
        %1613 = vmatprep.subr.mxu0 0.0
        %1614 = vmatpush1.xpose.msra.mxu0 0.0
        %1615 = vmatprep.subr.mxu0 0.0
        %1616 = vmatpush1.xpose.msra.mxu0 0.0
        %1617 = vmatprep.subr.mxu0 0.0
        %1618 = vmatpush1.xpose.msra.mxu0 0.0
        %1619 = vmatprep.subr.mxu0 0.0
        %1620 = vmatpush1.xpose.msra.mxu0 0.0
        %1621 = vmatprep.subr.mxu0 0.0
        %1622 = vmatpush1.xpose.msra.mxu0 0.0
        %1623 = vmatprep.subr.mxu0 0.0
        %1624 = vmatpush1.xpose.msra.mxu0 0.0
        %1625 = vmatprep.subr.mxu0 0.0
        %1626 = vmatpush1.xpose.msra.mxu0 0.0
        %1627 = vmatprep.mubr.f32.mxu0 0.0
        %1628 = vmatmul.mubr.f32.gmra.mrb[0].mxu0 %v1558
        %v1629 = vpop.f32.mrb[0].mxu0
        %v1630 = vadd.f32 %v1390, %v1629
        %v1631 = vpop.f32.mrb[0].mxu0
        %1632 = vdwg.mxu0
        %v1634 = vsel %vm1404, %v755, 0
        %v1637 = vsel %vm1404, %v270, 0
        %1639 = vmatprep.subr.mxu0 0.0
        %1640 = vmatpush1.xpose.msra.mxu0 %v1637
        %1641 = vmatprep.subr.mxu0 0.0
        %1642 = vmatpush1.xpose.msra.mxu0 0.0
        %1643 = vmatprep.subr.mxu0 0.0
        %1644 = vmatpush1.xpose.msra.mxu0 0.0
        %1645 = vmatprep.subr.mxu0 0.0
        %1646 = vmatpush1.xpose.msra.mxu0 0.0
        %1647 = vmatprep.subr.mxu0 0.0
        %1648 = vmatpush1.xpose.msra.mxu0 0.0
        %1649 = vmatprep.subr.mxu0 0.0
        %1650 = vmatpush1.xpose.msra.mxu0 0.0
        %1651 = vmatprep.subr.mxu0 0.0
        %1652 = vmatpush1.xpose.msra.mxu0 0.0
        %1653 = vmatprep.subr.mxu0 0.0
        %1654 = vmatpush1.xpose.msra.mxu0 0.0
        %1655 = vmatprep.subr.mxu0 0.0
        %1656 = vmatpush1.xpose.msra.mxu0 0.0
        %1657 = vmatprep.subr.mxu0 0.0
        %1658 = vmatpush1.xpose.msra.mxu0 0.0
        %1659 = vmatprep.subr.mxu0 0.0
        %1660 = vmatpush1.xpose.msra.mxu0 0.0
        %1661 = vmatprep.subr.mxu0 0.0
        %1662 = vmatpush1.xpose.msra.mxu0 0.0
        %1663 = vmatprep.subr.mxu0 0.0
        %1664 = vmatpush1.xpose.msra.mxu0 0.0
        %1665 = vmatprep.subr.mxu0 0.0
        %1666 = vmatpush1.xpose.msra.mxu0 0.0
        %1667 = vmatprep.subr.mxu0 0.0
        %1668 = vmatpush1.xpose.msra.mxu0 0.0
        %1669 = vmatprep.subr.mxu0 0.0
        %1670 = vmatpush1.xpose.msra.mxu0 0.0
        %1671 = vmatprep.subr.mxu0 0.0
        %1672 = vmatpush1.xpose.msra.mxu0 0.0
        %1673 = vmatprep.subr.mxu0 0.0
        %1674 = vmatpush1.xpose.msra.mxu0 0.0
        %1675 = vmatprep.subr.mxu0 0.0
        %1676 = vmatpush1.xpose.msra.mxu0 0.0
        %1677 = vmatprep.subr.mxu0 0.0
        %1678 = vmatpush1.xpose.msra.mxu0 0.0
        %1679 = vmatprep.subr.mxu0 0.0
        %1680 = vmatpush1.xpose.msra.mxu0 0.0
        %1681 = vmatprep.subr.mxu0 0.0
        %1682 = vmatpush1.xpose.msra.mxu0 0.0
        %1683 = vmatprep.subr.mxu0 0.0
        %1684 = vmatpush1.xpose.msra.mxu0 0.0
        %1685 = vmatprep.subr.mxu0 0.0
        %1686 = vmatpush1.xpose.msra.mxu0 0.0
        %1687 = vmatprep.subr.mxu0 0.0
        %1688 = vmatpush1.xpose.msra.mxu0 0.0
        %1689 = vmatprep.subr.mxu0 0.0
        %1690 = vmatpush1.xpose.msra.mxu0 0.0
        %1691 = vmatprep.subr.mxu0 0.0
        %1692 = vmatpush1.xpose.msra.mxu0 0.0
        %1693 = vmatprep.subr.mxu0 0.0
        %1694 = vmatpush1.xpose.msra.mxu0 0.0
        %1695 = vmatprep.subr.mxu0 0.0
        %1696 = vmatpush1.xpose.msra.mxu0 0.0
        %1697 = vmatprep.subr.mxu0 0.0
        %1698 = vmatpush1.xpose.msra.mxu0 0.0
        %1699 = vmatprep.subr.mxu0 0.0
        %1700 = vmatpush1.xpose.msra.mxu0 0.0
        %1701 = vmatprep.subr.mxu0 0.0
        %1702 = vmatpush1.xpose.msra.mxu0 0.0
        %1703 = vmatprep.mubr.f32.mxu0 0.0
        %1704 = vmatmul.mubr.f32.gmra.mrb[0].mxu0 %v1634
        %v1705 = vpop.f32.mrb[0].mxu0
        %v1706 = vadd.f32 %v1391, %v1705
        %v1707 = vpop.f32.mrb[0].mxu0
        %1708 = vdwg.mxu0
        %v1710 = vsel %vm1404, %v756, 0
        %v1713 = vsel %vm1404, %v271, 0
        %1715 = vmatprep.subr.mxu0 0.0
        %1716 = vmatpush1.xpose.msra.mxu0 %v1713
        %1717 = vmatprep.subr.mxu0 0.0
        %1718 = vmatpush1.xpose.msra.mxu0 0.0
        %1719 = vmatprep.subr.mxu0 0.0
        %1720 = vmatpush1.xpose.msra.mxu0 0.0
        %1721 = vmatprep.subr.mxu0 0.0
        %1722 = vmatpush1.xpose.msra.mxu0 0.0
        %1723 = vmatprep.subr.mxu0 0.0
        %1724 = vmatpush1.xpose.msra.mxu0 0.0
        %1725 = vmatprep.subr.mxu0 0.0
        %1726 = vmatpush1.xpose.msra.mxu0 0.0
        %1727 = vmatprep.subr.mxu0 0.0
        %1728 = vmatpush1.xpose.msra.mxu0 0.0
        %1729 = vmatprep.subr.mxu0 0.0
        %1730 = vmatpush1.xpose.msra.mxu0 0.0
        %1731 = vmatprep.subr.mxu0 0.0
        %1732 = vmatpush1.xpose.msra.mxu0 0.0
        %1733 = vmatprep.subr.mxu0 0.0
        %1734 = vmatpush1.xpose.msra.mxu0 0.0
        %1735 = vmatprep.subr.mxu0 0.0
        %1736 = vmatpush1.xpose.msra.mxu0 0.0
        %1737 = vmatprep.subr.mxu0 0.0
        %1738 = vmatpush1.xpose.msra.mxu0 0.0
        %1739 = vmatprep.subr.mxu0 0.0
        %1740 = vmatpush1.xpose.msra.mxu0 0.0
        %1741 = vmatprep.subr.mxu0 0.0
        %1742 = vmatpush1.xpose.msra.mxu0 0.0
        %1743 = vmatprep.subr.mxu0 0.0
        %1744 = vmatpush1.xpose.msra.mxu0 0.0
        %1745 = vmatprep.subr.mxu0 0.0
        %1746 = vmatpush1.xpose.msra.mxu0 0.0
        %1747 = vmatprep.subr.mxu0 0.0
        %1748 = vmatpush1.xpose.msra.mxu0 0.0
        %1749 = vmatprep.subr.mxu0 0.0
        %1750 = vmatpush1.xpose.msra.mxu0 0.0
        %1751 = vmatprep.subr.mxu0 0.0
        %1752 = vmatpush1.xpose.msra.mxu0 0.0
        %1753 = vmatprep.subr.mxu0 0.0
        %1754 = vmatpush1.xpose.msra.mxu0 0.0
        %1755 = vmatprep.subr.mxu0 0.0
        %1756 = vmatpush1.xpose.msra.mxu0 0.0
        %1757 = vmatprep.subr.mxu0 0.0
        %1758 = vmatpush1.xpose.msra.mxu0 0.0
        %1759 = vmatprep.subr.mxu0 0.0
        %1760 = vmatpush1.xpose.msra.mxu0 0.0
        %1761 = vmatprep.subr.mxu0 0.0
        %1762 = vmatpush1.xpose.msra.mxu0 0.0
        %1763 = vmatprep.subr.mxu0 0.0
        %1764 = vmatpush1.xpose.msra.mxu0 0.0
        %1765 = vmatprep.subr.mxu0 0.0
        %1766 = vmatpush1.xpose.msra.mxu0 0.0
        %1767 = vmatprep.subr.mxu0 0.0
        %1768 = vmatpush1.xpose.msra.mxu0 0.0
        %1769 = vmatprep.subr.mxu0 0.0
        %1770 = vmatpush1.xpose.msra.mxu0 0.0
        %1771 = vmatprep.subr.mxu0 0.0
        %1772 = vmatpush1.xpose.msra.mxu0 0.0
        %1773 = vmatprep.subr.mxu0 0.0
        %1774 = vmatpush1.xpose.msra.mxu0 0.0
        %1775 = vmatprep.subr.mxu0 0.0
        %1776 = vmatpush1.xpose.msra.mxu0 0.0
        %1777 = vmatprep.subr.mxu0 0.0
        %1778 = vmatpush1.xpose.msra.mxu0 0.0
        %1779 = vmatprep.mubr.f32.mxu0 0.0
        %1780 = vmatmul.mubr.f32.gmra.mrb[0].mxu0 %v1710
        %v1781 = vpop.f32.mrb[0].mxu0
        %v1782 = vadd.f32 %v1392, %v1781
        %v1783 = vpop.f32.mrb[0].mxu0
        %1784 = vdwg.mxu0
        %v1786 = vsel %vm1404, %v757, 0
        %v1789 = vsel %vm1404, %v272, 0
        %1791 = vmatprep.subr.mxu0 0.0
        %1792 = vmatpush1.xpose.msra.mxu0 %v1789
        %1793 = vmatprep.subr.mxu0 0.0
        %1794 = vmatpush1.xpose.msra.mxu0 0.0
        %1795 = vmatprep.subr.mxu0 0.0
        %1796 = vmatpush1.xpose.msra.mxu0 0.0
        %1797 = vmatprep.subr.mxu0 0.0
        %1798 = vmatpush1.xpose.msra.mxu0 0.0
        %1799 = vmatprep.subr.mxu0 0.0
        %1800 = vmatpush1.xpose.msra.mxu0 0.0
        %1801 = vmatprep.subr.mxu0 0.0
        %1802 = vmatpush1.xpose.msra.mxu0 0.0
        %1803 = vmatprep.subr.mxu0 0.0
        %1804 = vmatpush1.xpose.msra.mxu0 0.0
        %1805 = vmatprep.subr.mxu0 0.0
        %1806 = vmatpush1.xpose.msra.mxu0 0.0
        %1807 = vmatprep.subr.mxu0 0.0
        %1808 = vmatpush1.xpose.msra.mxu0 0.0
        %1809 = vmatprep.subr.mxu0 0.0
        %1810 = vmatpush1.xpose.msra.mxu0 0.0
        %1811 = vmatprep.subr.mxu0 0.0
        %1812 = vmatpush1.xpose.msra.mxu0 0.0
        %1813 = vmatprep.subr.mxu0 0.0
        %1814 = vmatpush1.xpose.msra.mxu0 0.0
        %1815 = vmatprep.subr.mxu0 0.0
        %1816 = vmatpush1.xpose.msra.mxu0 0.0
        %1817 = vmatprep.subr.mxu0 0.0
        %1818 = vmatpush1.xpose.msra.mxu0 0.0
        %1819 = vmatprep.subr.mxu0 0.0
        %1820 = vmatpush1.xpose.msra.mxu0 0.0
        %1821 = vmatprep.subr.mxu0 0.0
        %1822 = vmatpush1.xpose.msra.mxu0 0.0
        %1823 = vmatprep.subr.mxu0 0.0
        %1824 = vmatpush1.xpose.msra.mxu0 0.0
        %1825 = vmatprep.subr.mxu0 0.0
        %1826 = vmatpush1.xpose.msra.mxu0 0.0
        %1827 = vmatprep.subr.mxu0 0.0
        %1828 = vmatpush1.xpose.msra.mxu0 0.0
        %1829 = vmatprep.subr.mxu0 0.0
        %1830 = vmatpush1.xpose.msra.mxu0 0.0
        %1831 = vmatprep.subr.mxu0 0.0
        %1832 = vmatpush1.xpose.msra.mxu0 0.0
        %1833 = vmatprep.subr.mxu0 0.0
        %1834 = vmatpush1.xpose.msra.mxu0 0.0
        %1835 = vmatprep.subr.mxu0 0.0
        %1836 = vmatpush1.xpose.msra.mxu0 0.0
        %1837 = vmatprep.subr.mxu0 0.0
        %1838 = vmatpush1.xpose.msra.mxu0 0.0
        %1839 = vmatprep.subr.mxu0 0.0
        %1840 = vmatpush1.xpose.msra.mxu0 0.0
        %1841 = vmatprep.subr.mxu0 0.0
        %1842 = vmatpush1.xpose.msra.mxu0 0.0
        %1843 = vmatprep.subr.mxu0 0.0
        %1844 = vmatpush1.xpose.msra.mxu0 0.0
        %1845 = vmatprep.subr.mxu0 0.0
        %1846 = vmatpush1.xpose.msra.mxu0 0.0
        %1847 = vmatprep.subr.mxu0 0.0
        %1848 = vmatpush1.xpose.msra.mxu0 0.0
        %1849 = vmatprep.subr.mxu0 0.0
        %1850 = vmatpush1.xpose.msra.mxu0 0.0
        %1851 = vmatprep.subr.mxu0 0.0
        %1852 = vmatpush1.xpose.msra.mxu0 0.0
        %1853 = vmatprep.subr.mxu0 0.0
        %1854 = vmatpush1.xpose.msra.mxu0 0.0
        %1855 = vmatprep.mubr.f32.mxu0 0.0
        %1856 = vmatmul.mubr.f32.gmra.mrb[0].mxu0 %v1786
        %v1857 = vpop.f32.mrb[0].mxu0
        %v1858 = vadd.f32 %v1393, %v1857
        %v1859 = vpop.f32.mrb[0].mxu0
        %1860 = vdwg.mxu0
        %v1862 = vsel %vm1404, %v758, 0
        %v1865 = vsel %vm1404, %v273, 0
        %1867 = vmatprep.subr.mxu0 0.0
        %1868 = vmatpush1.xpose.msra.mxu0 %v1865
        %1869 = vmatprep.subr.mxu0 0.0
        %1870 = vmatpush1.xpose.msra.mxu0 0.0
        %1871 = vmatprep.subr.mxu0 0.0
        %1872 = vmatpush1.xpose.msra.mxu0 0.0
        %1873 = vmatprep.subr.mxu0 0.0
        %1874 = vmatpush1.xpose.msra.mxu0 0.0
        %1875 = vmatprep.subr.mxu0 0.0
        %1876 = vmatpush1.xpose.msra.mxu0 0.0
        %1877 = vmatprep.subr.mxu0 0.0
        %1878 = vmatpush1.xpose.msra.mxu0 0.0
        %1879 = vmatprep.subr.mxu0 0.0
        %1880 = vmatpush1.xpose.msra.mxu0 0.0
        %1881 = vmatprep.subr.mxu0 0.0
        %1882 = vmatpush1.xpose.msra.mxu0 0.0
        %1883 = vmatprep.subr.mxu0 0.0
        %1884 = vmatpush1.xpose.msra.mxu0 0.0
        %1885 = vmatprep.subr.mxu0 0.0
        %1886 = vmatpush1.xpose.msra.mxu0 0.0
        %1887 = vmatprep.subr.mxu0 0.0
        %1888 = vmatpush1.xpose.msra.mxu0 0.0
        %1889 = vmatprep.subr.mxu0 0.0
        %1890 = vmatpush1.xpose.msra.mxu0 0.0
        %1891 = vmatprep.subr.mxu0 0.0
        %1892 = vmatpush1.xpose.msra.mxu0 0.0
        %1893 = vmatprep.subr.mxu0 0.0
        %1894 = vmatpush1.xpose.msra.mxu0 0.0
        %1895 = vmatprep.subr.mxu0 0.0
        %1896 = vmatpush1.xpose.msra.mxu0 0.0
        %1897 = vmatprep.subr.mxu0 0.0
        %1898 = vmatpush1.xpose.msra.mxu0 0.0
        %1899 = vmatprep.subr.mxu0 0.0
        %1900 = vmatpush1.xpose.msra.mxu0 0.0
        %1901 = vmatprep.subr.mxu0 0.0
        %1902 = vmatpush1.xpose.msra.mxu0 0.0
        %1903 = vmatprep.subr.mxu0 0.0
        %1904 = vmatpush1.xpose.msra.mxu0 0.0
        %1905 = vmatprep.subr.mxu0 0.0
        %1906 = vmatpush1.xpose.msra.mxu0 0.0
        %1907 = vmatprep.subr.mxu0 0.0
        %1908 = vmatpush1.xpose.msra.mxu0 0.0
        %1909 = vmatprep.subr.mxu0 0.0
        %1910 = vmatpush1.xpose.msra.mxu0 0.0
        %1911 = vmatprep.subr.mxu0 0.0
        %1912 = vmatpush1.xpose.msra.mxu0 0.0
        %1913 = vmatprep.subr.mxu0 0.0
        %1914 = vmatpush1.xpose.msra.mxu0 0.0
        %1915 = vmatprep.subr.mxu0 0.0
        %1916 = vmatpush1.xpose.msra.mxu0 0.0
        %1917 = vmatprep.subr.mxu0 0.0
        %1918 = vmatpush1.xpose.msra.mxu0 0.0
        %1919 = vmatprep.subr.mxu0 0.0
        %1920 = vmatpush1.xpose.msra.mxu0 0.0
        %1921 = vmatprep.subr.mxu0 0.0
        %1922 = vmatpush1.xpose.msra.mxu0 0.0
        %1923 = vmatprep.subr.mxu0 0.0
        %1924 = vmatpush1.xpose.msra.mxu0 0.0
        %1925 = vmatprep.subr.mxu0 0.0
        %1926 = vmatpush1.xpose.msra.mxu0 0.0
        %1927 = vmatprep.subr.mxu0 0.0
        %1928 = vmatpush1.xpose.msra.mxu0 0.0
        %1929 = vmatprep.subr.mxu0 0.0
        %1930 = vmatpush1.xpose.msra.mxu0 0.0
        %1931 = vmatprep.mubr.f32.mxu0 0.0
        %1932 = vmatmul.mubr.f32.gmra.mrb[0].mxu0 %v1862
        %v1933 = vpop.f32.mrb[0].mxu0
        %v1934 = vadd.f32 %v1394, %v1933
        %v1935 = vpop.f32.mrb[0].mxu0
        %1936 = vdwg.mxu0
        %v1938 = vsel %vm1404, %v759, 0
        %v1941 = vsel %vm1404, %v274, 0
        %1943 = vmatprep.subr.mxu0 0.0
        %1944 = vmatpush1.xpose.msra.mxu0 %v1941
        %1945 = vmatprep.subr.mxu0 0.0
        %1946 = vmatpush1.xpose.msra.mxu0 0.0
        %1947 = vmatprep.subr.mxu0 0.0
        %1948 = vmatpush1.xpose.msra.mxu0 0.0
        %1949 = vmatprep.subr.mxu0 0.0
        %1950 = vmatpush1.xpose.msra.mxu0 0.0
        %1951 = vmatprep.subr.mxu0 0.0
        %1952 = vmatpush1.xpose.msra.mxu0 0.0
        %1953 = vmatprep.subr.mxu0 0.0
        %1954 = vmatpush1.xpose.msra.mxu0 0.0
        %1955 = vmatprep.subr.mxu0 0.0
        %1956 = vmatpush1.xpose.msra.mxu0 0.0
        %1957 = vmatprep.subr.mxu0 0.0
        %1958 = vmatpush1.xpose.msra.mxu0 0.0
        %1959 = vmatprep.subr.mxu0 0.0
        %1960 = vmatpush1.xpose.msra.mxu0 0.0
        %1961 = vmatprep.subr.mxu0 0.0
        %1962 = vmatpush1.xpose.msra.mxu0 0.0
        %1963 = vmatprep.subr.mxu0 0.0
        %1964 = vmatpush1.xpose.msra.mxu0 0.0
        %1965 = vmatprep.subr.mxu0 0.0
        %1966 = vmatpush1.xpose.msra.mxu0 0.0
        %1967 = vmatprep.subr.mxu0 0.0
        %1968 = vmatpush1.xpose.msra.mxu0 0.0
        %1969 = vmatprep.subr.mxu0 0.0
        %1970 = vmatpush1.xpose.msra.mxu0 0.0
        %1971 = vmatprep.subr.mxu0 0.0
        %1972 = vmatpush1.xpose.msra.mxu0 0.0
        %1973 = vmatprep.subr.mxu0 0.0
        %1974 = vmatpush1.xpose.msra.mxu0 0.0
        %1975 = vmatprep.subr.mxu0 0.0
        %1976 = vmatpush1.xpose.msra.mxu0 0.0
        %1977 = vmatprep.subr.mxu0 0.0
        %1978 = vmatpush1.xpose.msra.mxu0 0.0
        %1979 = vmatprep.subr.mxu0 0.0
        %1980 = vmatpush1.xpose.msra.mxu0 0.0
        %1981 = vmatprep.subr.mxu0 0.0
        %1982 = vmatpush1.xpose.msra.mxu0 0.0
        %1983 = vmatprep.subr.mxu0 0.0
        %1984 = vmatpush1.xpose.msra.mxu0 0.0
        %1985 = vmatprep.subr.mxu0 0.0
        %1986 = vmatpush1.xpose.msra.mxu0 0.0
        %1987 = vmatprep.subr.mxu0 0.0
        %1988 = vmatpush1.xpose.msra.mxu0 0.0
        %1989 = vmatprep.subr.mxu0 0.0
        %1990 = vmatpush1.xpose.msra.mxu0 0.0
        %1991 = vmatprep.subr.mxu0 0.0
        %1992 = vmatpush1.xpose.msra.mxu0 0.0
        %1993 = vmatprep.subr.mxu0 0.0
        %1994 = vmatpush1.xpose.msra.mxu0 0.0
        %1995 = vmatprep.subr.mxu0 0.0
        %1996 = vmatpush1.xpose.msra.mxu0 0.0
        %1997 = vmatprep.subr.mxu0 0.0
        %1998 = vmatpush1.xpose.msra.mxu0 0.0
        %1999 = vmatprep.subr.mxu0 0.0
        %2000 = vmatpush1.xpose.msra.mxu0 0.0
        %2001 = vmatprep.subr.mxu0 0.0
        %2002 = vmatpush1.xpose.msra.mxu0 0.0
        %2003 = vmatprep.subr.mxu0 0.0
        %2004 = vmatpush1.xpose.msra.mxu0 0.0
        %2005 = vmatprep.subr.mxu0 0.0
        %2006 = vmatpush1.xpose.msra.mxu0 0.0
        %2007 = vmatprep.mubr.f32.mxu0 0.0
        %2008 = vmatmul.mubr.f32.gmra.mrb[0].mxu0 %v1938
        %v2009 = vpop.f32.mrb[0].mxu0
        %v2010 = vadd.f32 %v1395, %v2009
        %v2011 = vpop.f32.mrb[0].mxu0
        %2012 = vdwg.mxu0
        %v2014 = vsel %vm1404, %v760, 0
        %v2017 = vsel %vm1404, %v275, 0
        %2019 = vmatprep.subr.mxu0 0.0
        %2020 = vmatpush1.xpose.msra.mxu0 %v2017
        %2021 = vmatprep.subr.mxu0 0.0
        %2022 = vmatpush1.xpose.msra.mxu0 0.0
        %2023 = vmatprep.subr.mxu0 0.0
        %2024 = vmatpush1.xpose.msra.mxu0 0.0
        %2025 = vmatprep.subr.mxu0 0.0
        %2026 = vmatpush1.xpose.msra.mxu0 0.0
        %2027 = vmatprep.subr.mxu0 0.0
        %2028 = vmatpush1.xpose.msra.mxu0 0.0
        %2029 = vmatprep.subr.mxu0 0.0
        %2030 = vmatpush1.xpose.msra.mxu0 0.0
        %2031 = vmatprep.subr.mxu0 0.0
        %2032 = vmatpush1.xpose.msra.mxu0 0.0
        %2033 = vmatprep.subr.mxu0 0.0
        %2034 = vmatpush1.xpose.msra.mxu0 0.0
        %2035 = vmatprep.subr.mxu0 0.0
        %2036 = vmatpush1.xpose.msra.mxu0 0.0
        %2037 = vmatprep.subr.mxu0 0.0
        %2038 = vmatpush1.xpose.msra.mxu0 0.0
        %2039 = vmatprep.subr.mxu0 0.0
        %2040 = vmatpush1.xpose.msra.mxu0 0.0
        %2041 = vmatprep.subr.mxu0 0.0
        %2042 = vmatpush1.xpose.msra.mxu0 0.0
        %2043 = vmatprep.subr.mxu0 0.0
        %2044 = vmatpush1.xpose.msra.mxu0 0.0
        %2045 = vmatprep.subr.mxu0 0.0
        %2046 = vmatpush1.xpose.msra.mxu0 0.0
        %2047 = vmatprep.subr.mxu0 0.0
        %2048 = vmatpush1.xpose.msra.mxu0 0.0
        %2049 = vmatprep.subr.mxu0 0.0
        %2050 = vmatpush1.xpose.msra.mxu0 0.0
        %2051 = vmatprep.subr.mxu0 0.0
        %2052 = vmatpush1.xpose.msra.mxu0 0.0
        %2053 = vmatprep.subr.mxu0 0.0
        %2054 = vmatpush1.xpose.msra.mxu0 0.0
        %2055 = vmatprep.subr.mxu0 0.0
        %2056 = vmatpush1.xpose.msra.mxu0 0.0
        %2057 = vmatprep.subr.mxu0 0.0
        %2058 = vmatpush1.xpose.msra.mxu0 0.0
        %2059 = vmatprep.subr.mxu0 0.0
        %2060 = vmatpush1.xpose.msra.mxu0 0.0
        %2061 = vmatprep.subr.mxu0 0.0
        %2062 = vmatpush1.xpose.msra.mxu0 0.0
        %2063 = vmatprep.subr.mxu0 0.0
        %2064 = vmatpush1.xpose.msra.mxu0 0.0
        %2065 = vmatprep.subr.mxu0 0.0
        %2066 = vmatpush1.xpose.msra.mxu0 0.0
        %2067 = vmatprep.subr.mxu0 0.0
        %2068 = vmatpush1.xpose.msra.mxu0 0.0
        %2069 = vmatprep.subr.mxu0 0.0
        %2070 = vmatpush1.xpose.msra.mxu0 0.0
        %2071 = vmatprep.subr.mxu0 0.0
        %2072 = vmatpush1.xpose.msra.mxu0 0.0
        %2073 = vmatprep.subr.mxu0 0.0
        %2074 = vmatpush1.xpose.msra.mxu0 0.0
        %2075 = vmatprep.subr.mxu0 0.0
        %2076 = vmatpush1.xpose.msra.mxu0 0.0
        %2077 = vmatprep.subr.mxu0 0.0
        %2078 = vmatpush1.xpose.msra.mxu0 0.0
        %2079 = vmatprep.subr.mxu0 0.0
        %2080 = vmatpush1.xpose.msra.mxu0 0.0
        %2081 = vmatprep.subr.mxu0 0.0
        %2082 = vmatpush1.xpose.msra.mxu0 0.0
        %2083 = vmatprep.mubr.f32.mxu0 0.0
        %2084 = vmatmul.mubr.f32.gmra.mrb[0].mxu0 %v2014
        %v2085 = vpop.f32.mrb[0].mxu0
        %v2086 = vadd.f32 %v1396, %v2085
        %v2087 = vpop.f32.mrb[0].mxu0
        %2088 = vdwg.mxu0
        %v2090 = vsel %vm1404, %v761, 0
        %v2093 = vsel %vm1404, %v276, 0
        %2095 = vmatprep.subr.mxu0 0.0
        %2096 = vmatpush1.xpose.msra.mxu0 %v2093
        %2097 = vmatprep.subr.mxu0 0.0
        %2098 = vmatpush1.xpose.msra.mxu0 0.0
        %2099 = vmatprep.subr.mxu0 0.0
        %2100 = vmatpush1.xpose.msra.mxu0 0.0
        %2101 = vmatprep.subr.mxu0 0.0
        %2102 = vmatpush1.xpose.msra.mxu0 0.0
        %2103 = vmatprep.subr.mxu0 0.0
        %2104 = vmatpush1.xpose.msra.mxu0 0.0
        %2105 = vmatprep.subr.mxu0 0.0
        %2106 = vmatpush1.xpose.msra.mxu0 0.0
        %2107 = vmatprep.subr.mxu0 0.0
        %2108 = vmatpush1.xpose.msra.mxu0 0.0
        %2109 = vmatprep.subr.mxu0 0.0
        %2110 = vmatpush1.xpose.msra.mxu0 0.0
        %2111 = vmatprep.subr.mxu0 0.0
        %2112 = vmatpush1.xpose.msra.mxu0 0.0
        %2113 = vmatprep.subr.mxu0 0.0
        %2114 = vmatpush1.xpose.msra.mxu0 0.0
        %2115 = vmatprep.subr.mxu0 0.0
        %2116 = vmatpush1.xpose.msra.mxu0 0.0
        %2117 = vmatprep.subr.mxu0 0.0
        %2118 = vmatpush1.xpose.msra.mxu0 0.0
        %2119 = vmatprep.subr.mxu0 0.0
        %2120 = vmatpush1.xpose.msra.mxu0 0.0
        %2121 = vmatprep.subr.mxu0 0.0
        %2122 = vmatpush1.xpose.msra.mxu0 0.0
        %2123 = vmatprep.subr.mxu0 0.0
        %2124 = vmatpush1.xpose.msra.mxu0 0.0
        %2125 = vmatprep.subr.mxu0 0.0
        %2126 = vmatpush1.xpose.msra.mxu0 0.0
        %2127 = vmatprep.subr.mxu0 0.0
        %2128 = vmatpush1.xpose.msra.mxu0 0.0
        %2129 = vmatprep.subr.mxu0 0.0
        %2130 = vmatpush1.xpose.msra.mxu0 0.0
        %2131 = vmatprep.subr.mxu0 0.0
        %2132 = vmatpush1.xpose.msra.mxu0 0.0
        %2133 = vmatprep.subr.mxu0 0.0
        %2134 = vmatpush1.xpose.msra.mxu0 0.0
        %2135 = vmatprep.subr.mxu0 0.0
        %2136 = vmatpush1.xpose.msra.mxu0 0.0
        %2137 = vmatprep.subr.mxu0 0.0
        %2138 = vmatpush1.xpose.msra.mxu0 0.0
        %2139 = vmatprep.subr.mxu0 0.0
        %2140 = vmatpush1.xpose.msra.mxu0 0.0
        %2141 = vmatprep.subr.mxu0 0.0
        %2142 = vmatpush1.xpose.msra.mxu0 0.0
        %2143 = vmatprep.subr.mxu0 0.0
        %2144 = vmatpush1.xpose.msra.mxu0 0.0
        %2145 = vmatprep.subr.mxu0 0.0
        %2146 = vmatpush1.xpose.msra.mxu0 0.0
        %2147 = vmatprep.subr.mxu0 0.0
        %2148 = vmatpush1.xpose.msra.mxu0 0.0
        %2149 = vmatprep.subr.mxu0 0.0
        %2150 = vmatpush1.xpose.msra.mxu0 0.0
        %2151 = vmatprep.subr.mxu0 0.0
        %2152 = vmatpush1.xpose.msra.mxu0 0.0
        %2153 = vmatprep.subr.mxu0 0.0
        %2154 = vmatpush1.xpose.msra.mxu0 0.0
        %2155 = vmatprep.subr.mxu0 0.0
        %2156 = vmatpush1.xpose.msra.mxu0 0.0
        %2157 = vmatprep.subr.mxu0 0.0
        %2158 = vmatpush1.xpose.msra.mxu0 0.0
        %2159 = vmatprep.mubr.f32.mxu0 0.0
        %2160 = vmatmul.mubr.f32.gmra.mrb[0].mxu0 %v2090
        %v2161 = vpop.f32.mrb[0].mxu0
        %v2162 = vadd.f32 %v1397, %v2161
        %v2163 = vpop.f32.mrb[0].mxu0
        %2164 = vdwg.mxu0
        %v2166 = vsel %vm1404, %v762, 0
        %v2169 = vsel %vm1404, %v277, 0
        %2171 = vmatprep.subr.mxu0 0.0
        %2172 = vmatpush1.xpose.msra.mxu0 %v2169
        %2173 = vmatprep.subr.mxu0 0.0
        %2174 = vmatpush1.xpose.msra.mxu0 0.0
        %2175 = vmatprep.subr.mxu0 0.0
        %2176 = vmatpush1.xpose.msra.mxu0 0.0
        %2177 = vmatprep.subr.mxu0 0.0
        %2178 = vmatpush1.xpose.msra.mxu0 0.0
        %2179 = vmatprep.subr.mxu0 0.0
        %2180 = vmatpush1.xpose.msra.mxu0 0.0
        %2181 = vmatprep.subr.mxu0 0.0
        %2182 = vmatpush1.xpose.msra.mxu0 0.0
        %2183 = vmatprep.subr.mxu0 0.0
        %2184 = vmatpush1.xpose.msra.mxu0 0.0
        %2185 = vmatprep.subr.mxu0 0.0
        %2186 = vmatpush1.xpose.msra.mxu0 0.0
        %2187 = vmatprep.subr.mxu0 0.0
        %2188 = vmatpush1.xpose.msra.mxu0 0.0
        %2189 = vmatprep.subr.mxu0 0.0
        %2190 = vmatpush1.xpose.msra.mxu0 0.0
        %2191 = vmatprep.subr.mxu0 0.0
        %2192 = vmatpush1.xpose.msra.mxu0 0.0
        %2193 = vmatprep.subr.mxu0 0.0
        %2194 = vmatpush1.xpose.msra.mxu0 0.0
        %2195 = vmatprep.subr.mxu0 0.0
        %2196 = vmatpush1.xpose.msra.mxu0 0.0
        %2197 = vmatprep.subr.mxu0 0.0
        %2198 = vmatpush1.xpose.msra.mxu0 0.0
        %2199 = vmatprep.subr.mxu0 0.0
        %2200 = vmatpush1.xpose.msra.mxu0 0.0
        %2201 = vmatprep.subr.mxu0 0.0
        %2202 = vmatpush1.xpose.msra.mxu0 0.0
        %2203 = vmatprep.subr.mxu0 0.0
        %2204 = vmatpush1.xpose.msra.mxu0 0.0
        %2205 = vmatprep.subr.mxu0 0.0
        %2206 = vmatpush1.xpose.msra.mxu0 0.0
        %2207 = vmatprep.subr.mxu0 0.0
        %2208 = vmatpush1.xpose.msra.mxu0 0.0
        %2209 = vmatprep.subr.mxu0 0.0
        %2210 = vmatpush1.xpose.msra.mxu0 0.0
        %2211 = vmatprep.subr.mxu0 0.0
        %2212 = vmatpush1.xpose.msra.mxu0 0.0
        %2213 = vmatprep.subr.mxu0 0.0
        %2214 = vmatpush1.xpose.msra.mxu0 0.0
        %2215 = vmatprep.subr.mxu0 0.0
        %2216 = vmatpush1.xpose.msra.mxu0 0.0
        %2217 = vmatprep.subr.mxu0 0.0
        %2218 = vmatpush1.xpose.msra.mxu0 0.0
        %2219 = vmatprep.subr.mxu0 0.0
        %2220 = vmatpush1.xpose.msra.mxu0 0.0
        %2221 = vmatprep.subr.mxu0 0.0
        %2222 = vmatpush1.xpose.msra.mxu0 0.0
        %2223 = vmatprep.subr.mxu0 0.0
        %2224 = vmatpush1.xpose.msra.mxu0 0.0
        %2225 = vmatprep.subr.mxu0 0.0
        %2226 = vmatpush1.xpose.msra.mxu0 0.0
        %2227 = vmatprep.subr.mxu0 0.0
        %2228 = vmatpush1.xpose.msra.mxu0 0.0
        %2229 = vmatprep.subr.mxu0 0.0
        %2230 = vmatpush1.xpose.msra.mxu0 0.0
        %2231 = vmatprep.subr.mxu0 0.0
        %2232 = vmatpush1.xpose.msra.mxu0 0.0
        %2233 = vmatprep.subr.mxu0 0.0
        %2234 = vmatpush1.xpose.msra.mxu0 0.0
        %2235 = vmatprep.mubr.f32.mxu0 0.0
        %2236 = vmatmul.mubr.f32.gmra.mrb[0].mxu0 %v2166
        %v2237 = vpop.f32.mrb[0].mxu0
        %v2238 = vadd.f32 %v1398, %v2237
        %v2239 = vpop.f32.mrb[0].mxu0
        %2240 = vdwg.mxu0
        %v2242 = vsel %vm1404, %v763, 0
        %v2245 = vsel %vm1404, %v278, 0
        %2247 = vmatprep.subr.mxu0 0.0
        %2248 = vmatpush1.xpose.msra.mxu0 %v2245
        %2249 = vmatprep.subr.mxu0 0.0
        %2250 = vmatpush1.xpose.msra.mxu0 0.0
        %2251 = vmatprep.subr.mxu0 0.0
        %2252 = vmatpush1.xpose.msra.mxu0 0.0
        %2253 = vmatprep.subr.mxu0 0.0
        %2254 = vmatpush1.xpose.msra.mxu0 0.0
        %2255 = vmatprep.subr.mxu0 0.0
        %2256 = vmatpush1.xpose.msra.mxu0 0.0
        %2257 = vmatprep.subr.mxu0 0.0
        %2258 = vmatpush1.xpose.msra.mxu0 0.0
        %2259 = vmatprep.subr.mxu0 0.0
        %2260 = vmatpush1.xpose.msra.mxu0 0.0
        %2261 = vmatprep.subr.mxu0 0.0
        %2262 = vmatpush1.xpose.msra.mxu0 0.0
        %2263 = vmatprep.subr.mxu0 0.0
        %2264 = vmatpush1.xpose.msra.mxu0 0.0
        %2265 = vmatprep.subr.mxu0 0.0
        %2266 = vmatpush1.xpose.msra.mxu0 0.0
        %2267 = vmatprep.subr.mxu0 0.0
        %2268 = vmatpush1.xpose.msra.mxu0 0.0
        %2269 = vmatprep.subr.mxu0 0.0
        %2270 = vmatpush1.xpose.msra.mxu0 0.0
        %2271 = vmatprep.subr.mxu0 0.0
        %2272 = vmatpush1.xpose.msra.mxu0 0.0
        %2273 = vmatprep.subr.mxu0 0.0
        %2274 = vmatpush1.xpose.msra.mxu0 0.0
        %2275 = vmatprep.subr.mxu0 0.0
        %2276 = vmatpush1.xpose.msra.mxu0 0.0
        %2277 = vmatprep.subr.mxu0 0.0
        %2278 = vmatpush1.xpose.msra.mxu0 0.0
        %2279 = vmatprep.subr.mxu0 0.0
        %2280 = vmatpush1.xpose.msra.mxu0 0.0
        %2281 = vmatprep.subr.mxu0 0.0
        %2282 = vmatpush1.xpose.msra.mxu0 0.0
        %2283 = vmatprep.subr.mxu0 0.0
        %2284 = vmatpush1.xpose.msra.mxu0 0.0
        %2285 = vmatprep.subr.mxu0 0.0
        %2286 = vmatpush1.xpose.msra.mxu0 0.0
        %2287 = vmatprep.subr.mxu0 0.0
        %2288 = vmatpush1.xpose.msra.mxu0 0.0
        %2289 = vmatprep.subr.mxu0 0.0
        %2290 = vmatpush1.xpose.msra.mxu0 0.0
        %2291 = vmatprep.subr.mxu0 0.0
        %2292 = vmatpush1.xpose.msra.mxu0 0.0
        %2293 = vmatprep.subr.mxu0 0.0
        %2294 = vmatpush1.xpose.msra.mxu0 0.0
        %2295 = vmatprep.subr.mxu0 0.0
        %2296 = vmatpush1.xpose.msra.mxu0 0.0
        %2297 = vmatprep.subr.mxu0 0.0
        %2298 = vmatpush1.xpose.msra.mxu0 0.0
        %2299 = vmatprep.subr.mxu0 0.0
        %2300 = vmatpush1.xpose.msra.mxu0 0.0
        %2301 = vmatprep.subr.mxu0 0.0
        %2302 = vmatpush1.xpose.msra.mxu0 0.0
        %2303 = vmatprep.subr.mxu0 0.0
        %2304 = vmatpush1.xpose.msra.mxu0 0.0
        %2305 = vmatprep.subr.mxu0 0.0
        %2306 = vmatpush1.xpose.msra.mxu0 0.0
        %2307 = vmatprep.subr.mxu0 0.0
        %2308 = vmatpush1.xpose.msra.mxu0 0.0
        %2309 = vmatprep.subr.mxu0 0.0
        %2310 = vmatpush1.xpose.msra.mxu0 0.0
        %2311 = vmatprep.mubr.f32.mxu0 0.0
        %2312 = vmatmul.mubr.f32.gmra.mrb[0].mxu0 %v2242
        %v2313 = vpop.f32.mrb[0].mxu0
        %v2314 = vadd.f32 %v1399, %v2313
        %v2315 = vpop.f32.mrb[0].mxu0
        %2316 = vdwg.mxu0
        %v2318 = vsel %vm1404, %v764, 0
        %v2321 = vsel %vm1404, %v279, 0
        %2323 = vmatprep.subr.mxu0 0.0
        %2324 = vmatpush1.xpose.msra.mxu0 %v2321
        %2325 = vmatprep.subr.mxu0 0.0
        %2326 = vmatpush1.xpose.msra.mxu0 0.0
        %2327 = vmatprep.subr.mxu0 0.0
        %2328 = vmatpush1.xpose.msra.mxu0 0.0
        %2329 = vmatprep.subr.mxu0 0.0
        %2330 = vmatpush1.xpose.msra.mxu0 0.0
        %2331 = vmatprep.subr.mxu0 0.0
        %2332 = vmatpush1.xpose.msra.mxu0 0.0
        %2333 = vmatprep.subr.mxu0 0.0
        %2334 = vmatpush1.xpose.msra.mxu0 0.0
        %2335 = vmatprep.subr.mxu0 0.0
        %2336 = vmatpush1.xpose.msra.mxu0 0.0
        %2337 = vmatprep.subr.mxu0 0.0
        %2338 = vmatpush1.xpose.msra.mxu0 0.0
        %2339 = vmatprep.subr.mxu0 0.0
        %2340 = vmatpush1.xpose.msra.mxu0 0.0
        %2341 = vmatprep.subr.mxu0 0.0
        %2342 = vmatpush1.xpose.msra.mxu0 0.0
        %2343 = vmatprep.subr.mxu0 0.0
        %2344 = vmatpush1.xpose.msra.mxu0 0.0
        %2345 = vmatprep.subr.mxu0 0.0
        %2346 = vmatpush1.xpose.msra.mxu0 0.0
        %2347 = vmatprep.subr.mxu0 0.0
        %2348 = vmatpush1.xpose.msra.mxu0 0.0
        %2349 = vmatprep.subr.mxu0 0.0
        %2350 = vmatpush1.xpose.msra.mxu0 0.0
        %2351 = vmatprep.subr.mxu0 0.0
        %2352 = vmatpush1.xpose.msra.mxu0 0.0
        %2353 = vmatprep.subr.mxu0 0.0
        %2354 = vmatpush1.xpose.msra.mxu0 0.0
        %2355 = vmatprep.subr.mxu0 0.0
        %2356 = vmatpush1.xpose.msra.mxu0 0.0
        %2357 = vmatprep.subr.mxu0 0.0
        %2358 = vmatpush1.xpose.msra.mxu0 0.0
        %2359 = vmatprep.subr.mxu0 0.0
        %2360 = vmatpush1.xpose.msra.mxu0 0.0
        %2361 = vmatprep.subr.mxu0 0.0
        %2362 = vmatpush1.xpose.msra.mxu0 0.0
        %2363 = vmatprep.subr.mxu0 0.0
        %2364 = vmatpush1.xpose.msra.mxu0 0.0
        %2365 = vmatprep.subr.mxu0 0.0
        %2366 = vmatpush1.xpose.msra.mxu0 0.0
        %2367 = vmatprep.subr.mxu0 0.0
        %2368 = vmatpush1.xpose.msra.mxu0 0.0
        %2369 = vmatprep.subr.mxu0 0.0
        %2370 = vmatpush1.xpose.msra.mxu0 0.0
        %2371 = vmatprep.subr.mxu0 0.0
        %2372 = vmatpush1.xpose.msra.mxu0 0.0
        %2373 = vmatprep.subr.mxu0 0.0
        %2374 = vmatpush1.xpose.msra.mxu0 0.0
        %2375 = vmatprep.subr.mxu0 0.0
        %2376 = vmatpush1.xpose.msra.mxu0 0.0
        %2377 = vmatprep.subr.mxu0 0.0
        %2378 = vmatpush1.xpose.msra.mxu0 0.0
        %2379 = vmatprep.subr.mxu0 0.0
        %2380 = vmatpush1.xpose.msra.mxu0 0.0
        %2381 = vmatprep.subr.mxu0 0.0
        %2382 = vmatpush1.xpose.msra.mxu0 0.0
        %2383 = vmatprep.subr.mxu0 0.0
        %2384 = vmatpush1.xpose.msra.mxu0 0.0
        %2385 = vmatprep.subr.mxu0 0.0
        %2386 = vmatpush1.xpose.msra.mxu0 0.0
        %2387 = vmatprep.mubr.f32.mxu0 0.0
        %2388 = vmatmul.mubr.f32.gmra.mrb[0].mxu0 %v2318
        %v2389 = vpop.f32.mrb[0].mxu0
        %v2390 = vadd.f32 %v1400, %v2389
        %v2391 = vpop.f32.mrb[0].mxu0
        %2392 = vdwg.mxu0
        %v2394 = vsel %vm1404, %v765, 0
        %v2397 = vsel %vm1404, %v280, 0
        %2399 = vmatprep.subr.mxu0 0.0
        %2400 = vmatpush1.xpose.msra.mxu0 %v2397
        %2401 = vmatprep.subr.mxu0 0.0
        %2402 = vmatpush1.xpose.msra.mxu0 0.0
        %2403 = vmatprep.subr.mxu0 0.0
        %2404 = vmatpush1.xpose.msra.mxu0 0.0
        %2405 = vmatprep.subr.mxu0 0.0
        %2406 = vmatpush1.xpose.msra.mxu0 0.0
        %2407 = vmatprep.subr.mxu0 0.0
        %2408 = vmatpush1.xpose.msra.mxu0 0.0
        %2409 = vmatprep.subr.mxu0 0.0
        %2410 = vmatpush1.xpose.msra.mxu0 0.0
        %2411 = vmatprep.subr.mxu0 0.0
        %2412 = vmatpush1.xpose.msra.mxu0 0.0
        %2413 = vmatprep.subr.mxu0 0.0
        %2414 = vmatpush1.xpose.msra.mxu0 0.0
        %2415 = vmatprep.subr.mxu0 0.0
        %2416 = vmatpush1.xpose.msra.mxu0 0.0
        %2417 = vmatprep.subr.mxu0 0.0
        %2418 = vmatpush1.xpose.msra.mxu0 0.0
        %2419 = vmatprep.subr.mxu0 0.0
        %2420 = vmatpush1.xpose.msra.mxu0 0.0
        %2421 = vmatprep.subr.mxu0 0.0
        %2422 = vmatpush1.xpose.msra.mxu0 0.0
        %2423 = vmatprep.subr.mxu0 0.0
        %2424 = vmatpush1.xpose.msra.mxu0 0.0
        %2425 = vmatprep.subr.mxu0 0.0
        %2426 = vmatpush1.xpose.msra.mxu0 0.0
        %2427 = vmatprep.subr.mxu0 0.0
        %2428 = vmatpush1.xpose.msra.mxu0 0.0
        %2429 = vmatprep.subr.mxu0 0.0
        %2430 = vmatpush1.xpose.msra.mxu0 0.0
        %2431 = vmatprep.subr.mxu0 0.0
        %2432 = vmatpush1.xpose.msra.mxu0 0.0
        %2433 = vmatprep.subr.mxu0 0.0
        %2434 = vmatpush1.xpose.msra.mxu0 0.0
        %2435 = vmatprep.subr.mxu0 0.0
        %2436 = vmatpush1.xpose.msra.mxu0 0.0
        %2437 = vmatprep.subr.mxu0 0.0
        %2438 = vmatpush1.xpose.msra.mxu0 0.0
        %2439 = vmatprep.subr.mxu0 0.0
        %2440 = vmatpush1.xpose.msra.mxu0 0.0
        %2441 = vmatprep.subr.mxu0 0.0
        %2442 = vmatpush1.xpose.msra.mxu0 0.0
        %2443 = vmatprep.subr.mxu0 0.0
        %2444 = vmatpush1.xpose.msra.mxu0 0.0
        %2445 = vmatprep.subr.mxu0 0.0
        %2446 = vmatpush1.xpose.msra.mxu0 0.0
        %2447 = vmatprep.subr.mxu0 0.0
        %2448 = vmatpush1.xpose.msra.mxu0 0.0
        %2449 = vmatprep.subr.mxu0 0.0
        %2450 = vmatpush1.xpose.msra.mxu0 0.0
        %2451 = vmatprep.subr.mxu0 0.0
        %2452 = vmatpush1.xpose.msra.mxu0 0.0
        %2453 = vmatprep.subr.mxu0 0.0
        %2454 = vmatpush1.xpose.msra.mxu0 0.0
        %2455 = vmatprep.subr.mxu0 0.0
        %2456 = vmatpush1.xpose.msra.mxu0 0.0
        %2457 = vmatprep.subr.mxu0 0.0
        %2458 = vmatpush1.xpose.msra.mxu0 0.0
        %2459 = vmatprep.subr.mxu0 0.0
        %2460 = vmatpush1.xpose.msra.mxu0 0.0
        %2461 = vmatprep.subr.mxu0 0.0
        %2462 = vmatpush1.xpose.msra.mxu0 0.0
        %2463 = vmatprep.mubr.f32.mxu0 0.0
        %2464 = vmatmul.mubr.f32.gmra.mrb[0].mxu0 %v2394
        %v2465 = vpop.f32.mrb[0].mxu0
        %v2466 = vadd.f32 %v1401, %v2465
        %v2467 = vpop.f32.mrb[0].mxu0
        %2468 = vdwg.mxu0
        %v2470 = vsel %vm1404, %v766, 0
        %v2473 = vsel %vm1404, %v281, 0
        %2475 = vmatprep.subr.mxu0 0.0
        %2476 = vmatpush1.xpose.msra.mxu0 %v2473
        %2477 = vmatprep.subr.mxu0 0.0
        %2478 = vmatpush1.xpose.msra.mxu0 0.0
        %2479 = vmatprep.subr.mxu0 0.0
        %2480 = vmatpush1.xpose.msra.mxu0 0.0
        %2481 = vmatprep.subr.mxu0 0.0
        %2482 = vmatpush1.xpose.msra.mxu0 0.0
        %2483 = vmatprep.subr.mxu0 0.0
        %2484 = vmatpush1.xpose.msra.mxu0 0.0
        %2485 = vmatprep.subr.mxu0 0.0
        %2486 = vmatpush1.xpose.msra.mxu0 0.0
        %2487 = vmatprep.subr.mxu0 0.0
        %2488 = vmatpush1.xpose.msra.mxu0 0.0
        %2489 = vmatprep.subr.mxu0 0.0
        %2490 = vmatpush1.xpose.msra.mxu0 0.0
        %2491 = vmatprep.subr.mxu0 0.0
        %2492 = vmatpush1.xpose.msra.mxu0 0.0
        %2493 = vmatprep.subr.mxu0 0.0
        %2494 = vmatpush1.xpose.msra.mxu0 0.0
        %2495 = vmatprep.subr.mxu0 0.0
        %2496 = vmatpush1.xpose.msra.mxu0 0.0
        %2497 = vmatprep.subr.mxu0 0.0
        %2498 = vmatpush1.xpose.msra.mxu0 0.0
        %2499 = vmatprep.subr.mxu0 0.0
        %2500 = vmatpush1.xpose.msra.mxu0 0.0
        %2501 = vmatprep.subr.mxu0 0.0
        %2502 = vmatpush1.xpose.msra.mxu0 0.0
        %2503 = vmatprep.subr.mxu0 0.0
        %2504 = vmatpush1.xpose.msra.mxu0 0.0
        %2505 = vmatprep.subr.mxu0 0.0
        %2506 = vmatpush1.xpose.msra.mxu0 0.0
        %2507 = vmatprep.subr.mxu0 0.0
        %2508 = vmatpush1.xpose.msra.mxu0 0.0
        %2509 = vmatprep.subr.mxu0 0.0
        %2510 = vmatpush1.xpose.msra.mxu0 0.0
        %2511 = vmatprep.subr.mxu0 0.0
        %2512 = vmatpush1.xpose.msra.mxu0 0.0
        %2513 = vmatprep.subr.mxu0 0.0
        %2514 = vmatpush1.xpose.msra.mxu0 0.0
        %2515 = vmatprep.subr.mxu0 0.0
        %2516 = vmatpush1.xpose.msra.mxu0 0.0
        %2517 = vmatprep.subr.mxu0 0.0
        %2518 = vmatpush1.xpose.msra.mxu0 0.0
        %2519 = vmatprep.subr.mxu0 0.0
        %2520 = vmatpush1.xpose.msra.mxu0 0.0
        %2521 = vmatprep.subr.mxu0 0.0
        %2522 = vmatpush1.xpose.msra.mxu0 0.0
        %2523 = vmatprep.subr.mxu0 0.0
        %2524 = vmatpush1.xpose.msra.mxu0 0.0
        %2525 = vmatprep.subr.mxu0 0.0
        %2526 = vmatpush1.xpose.msra.mxu0 0.0
        %2527 = vmatprep.subr.mxu0 0.0
        %2528 = vmatpush1.xpose.msra.mxu0 0.0
        %2529 = vmatprep.subr.mxu0 0.0
        %2530 = vmatpush1.xpose.msra.mxu0 0.0
        %2531 = vmatprep.subr.mxu0 0.0
        %2532 = vmatpush1.xpose.msra.mxu0 0.0
        %2533 = vmatprep.subr.mxu0 0.0
        %2534 = vmatpush1.xpose.msra.mxu0 0.0
        %2535 = vmatprep.subr.mxu0 0.0
        %2536 = vmatpush1.xpose.msra.mxu0 0.0
        %2537 = vmatprep.subr.mxu0 0.0
        %2538 = vmatpush1.xpose.msra.mxu0 0.0
        %2539 = vmatprep.mubr.f32.mxu0 0.0
        %2540 = vmatmul.mubr.f32.gmra.mrb[0].mxu0 %v2470
        %v2541 = vpop.f32.mrb[0].mxu0
        %v2542 = vadd.f32 %v1402, %v2541
        %v2543 = vpop.f32.mrb[0].mxu0
        %2544 = vdwg.mxu0
        %v2546 = vsel %vm1404, %v767, 0
        %v2549 = vsel %vm1404, %v282, 0
        %2551 = vmatprep.subr.mxu0 0.0
        %2552 = vmatpush1.xpose.msra.mxu0 %v2549
        %2553 = vmatprep.subr.mxu0 0.0
        %2554 = vmatpush1.xpose.msra.mxu0 0.0
        %2555 = vmatprep.subr.mxu0 0.0
        %2556 = vmatpush1.xpose.msra.mxu0 0.0
        %2557 = vmatprep.subr.mxu0 0.0
        %2558 = vmatpush1.xpose.msra.mxu0 0.0
        %2559 = vmatprep.subr.mxu0 0.0
        %2560 = vmatpush1.xpose.msra.mxu0 0.0
        %2561 = vmatprep.subr.mxu0 0.0
        %2562 = vmatpush1.xpose.msra.mxu0 0.0
        %2563 = vmatprep.subr.mxu0 0.0
        %2564 = vmatpush1.xpose.msra.mxu0 0.0
        %2565 = vmatprep.subr.mxu0 0.0
        %2566 = vmatpush1.xpose.msra.mxu0 0.0
        %2567 = vmatprep.subr.mxu0 0.0
        %2568 = vmatpush1.xpose.msra.mxu0 0.0
        %2569 = vmatprep.subr.mxu0 0.0
        %2570 = vmatpush1.xpose.msra.mxu0 0.0
        %2571 = vmatprep.subr.mxu0 0.0
        %2572 = vmatpush1.xpose.msra.mxu0 0.0
        %2573 = vmatprep.subr.mxu0 0.0
        %2574 = vmatpush1.xpose.msra.mxu0 0.0
        %2575 = vmatprep.subr.mxu0 0.0
        %2576 = vmatpush1.xpose.msra.mxu0 0.0
        %2577 = vmatprep.subr.mxu0 0.0
        %2578 = vmatpush1.xpose.msra.mxu0 0.0
        %2579 = vmatprep.subr.mxu0 0.0
        %2580 = vmatpush1.xpose.msra.mxu0 0.0
        %2581 = vmatprep.subr.mxu0 0.0
        %2582 = vmatpush1.xpose.msra.mxu0 0.0
        %2583 = vmatprep.subr.mxu0 0.0
        %2584 = vmatpush1.xpose.msra.mxu0 0.0
        %2585 = vmatprep.subr.mxu0 0.0
        %2586 = vmatpush1.xpose.msra.mxu0 0.0
        %2587 = vmatprep.subr.mxu0 0.0
        %2588 = vmatpush1.xpose.msra.mxu0 0.0
        %2589 = vmatprep.subr.mxu0 0.0
        %2590 = vmatpush1.xpose.msra.mxu0 0.0
        %2591 = vmatprep.subr.mxu0 0.0
        %2592 = vmatpush1.xpose.msra.mxu0 0.0
        %2593 = vmatprep.subr.mxu0 0.0
        %2594 = vmatpush1.xpose.msra.mxu0 0.0
        %2595 = vmatprep.subr.mxu0 0.0
        %2596 = vmatpush1.xpose.msra.mxu0 0.0
        %2597 = vmatprep.subr.mxu0 0.0
        %2598 = vmatpush1.xpose.msra.mxu0 0.0
        %2599 = vmatprep.subr.mxu0 0.0
        %2600 = vmatpush1.xpose.msra.mxu0 0.0
        %2601 = vmatprep.subr.mxu0 0.0
        %2602 = vmatpush1.xpose.msra.mxu0 0.0
        %2603 = vmatprep.subr.mxu0 0.0
        %2604 = vmatpush1.xpose.msra.mxu0 0.0
        %2605 = vmatprep.subr.mxu0 0.0
        %2606 = vmatpush1.xpose.msra.mxu0 0.0
        %2607 = vmatprep.subr.mxu0 0.0
        %2608 = vmatpush1.xpose.msra.mxu0 0.0
        %2609 = vmatprep.subr.mxu0 0.0
        %2610 = vmatpush1.xpose.msra.mxu0 0.0
        %2611 = vmatprep.subr.mxu0 0.0
        %2612 = vmatpush1.xpose.msra.mxu0 0.0
        %2613 = vmatprep.subr.mxu0 0.0
        %2614 = vmatpush1.xpose.msra.mxu0 0.0
        %2615 = vmatprep.mubr.f32.mxu0 0.0
        %2616 = vmatmul.mubr.f32.gmra.mrb[0].mxu0 %v2546
        %v2617 = vpop.f32.mrb[0].mxu0
        %v2618 = vadd.f32 %v1403, %v2617
        %v2619 = vpop.f32.mrb[0].mxu0
        %2620 = vdwg.mxu0
        %v2637 = vrot.slane %v1554, 7
        %v2638 = vsel %vm303, %v2637, %v1478
        %v2639 = vrot.slane %v1630, 6
        %v2640 = vsel %vm306, %v2639, %v2638
        %v2641 = vrot.slane %v1706, 5
        %v2642 = vsel %vm309, %v2641, %v2640
        %v2643 = vrot.slane %v1782, 4
        %vm2644 = vcmask 1044484
        %v2645 = vsel %vm2644, %v2643, %v2642
        %v2646 = vrot.slane %v1858, 3
        %vm2647 = vcmask 1045509
        %v2648 = vsel %vm2647, %v2646, %v2645
        %v2649 = vrot.slane %v1934, 2
        %vm2650 = vcmask 1046534
        %v2651 = vsel %vm2650, %v2649, %v2648
        %v2652 = vrot.slane %v2010, 1
        %vm2653 = vcmask 1047559
        %v2654 = vsel %vm2653, %v2652, %v2651
        %v2655 = vrot.slane %v2162, 7
        %v2656 = vsel %vm303, %v2655, %v2086
        %v2657 = vrot.slane %v2238, 6
        %v2658 = vsel %vm306, %v2657, %v2656
        %v2659 = vrot.slane %v2314, 5
        %v2660 = vsel %vm309, %v2659, %v2658
        %v2661 = vrot.slane %v2390, 4
        %v2662 = vsel %vm2644, %v2661, %v2660
        %v2663 = vrot.slane %v2466, 3
        %v2664 = vsel %vm2647, %v2663, %v2662
        %v2665 = vrot.slane %v2542, 2
        %v2666 = vsel %vm2650, %v2665, %v2664
        %v2667 = vrot.slane %v2618, 1
        %v2668 = vsel %vm2653, %v2667, %v2666
        %vm2671 = vcmask 130048
        %v2673 = vsel %vm2671, %v266, 0
        %2675 = vmatprep.subr.mxu0 0.0
        %2676 = vmatpush1.msra.mxu0 %v2654
        %2677 = vmatprep.subr.mxu0 0.0
        %2678 = vmatpush1.msra.mxu0 %v2668
        %2679 = vmatprep.subr.mxu0 0.0
        %2680 = vmatpush1.msra.mxu0 0.0
        %2681 = vmatprep.subr.mxu0 0.0
        %2682 = vmatpush1.msra.mxu0 0.0
        %2683 = vmatprep.subr.mxu0 0.0
        %2684 = vmatpush1.msra.mxu0 0.0
        %2685 = vmatprep.subr.mxu0 0.0
        %2686 = vmatpush1.msra.mxu0 0.0
        %2687 = vmatprep.subr.mxu0 0.0
        %2688 = vmatpush1.msra.mxu0 0.0
        %2689 = vmatprep.subr.mxu0 0.0
        %2690 = vmatpush1.msra.mxu0 0.0
        %2691 = vmatprep.subr.mxu0 0.0
        %2692 = vmatpush1.msra.mxu0 0.0
        %2693 = vmatprep.subr.mxu0 0.0
        %2694 = vmatpush1.msra.mxu0 0.0
        %2695 = vmatprep.subr.mxu0 0.0
        %2696 = vmatpush1.msra.mxu0 0.0
        %2697 = vmatprep.subr.mxu0 0.0
        %2698 = vmatpush1.msra.mxu0 0.0
        %2699 = vmatprep.subr.mxu0 0.0
        %2700 = vmatpush1.msra.mxu0 0.0
        %2701 = vmatprep.subr.mxu0 0.0
        %2702 = vmatpush1.msra.mxu0 0.0
        %2703 = vmatprep.subr.mxu0 0.0
        %2704 = vmatpush1.msra.mxu0 0.0
        %2705 = vmatprep.subr.mxu0 0.0
        %2706 = vmatpush1.msra.mxu0 0.0
        %2707 = vmatprep.subr.mxu0 0.0
        %2708 = vmatpush1.msra.mxu0 0.0
        %2709 = vmatprep.subr.mxu0 0.0
        %2710 = vmatpush1.msra.mxu0 0.0
        %2711 = vmatprep.subr.mxu0 0.0
        %2712 = vmatpush1.msra.mxu0 0.0
        %2713 = vmatprep.subr.mxu0 0.0
        %2714 = vmatpush1.msra.mxu0 0.0
        %2715 = vmatprep.subr.mxu0 0.0
        %2716 = vmatpush1.msra.mxu0 0.0
        %2717 = vmatprep.subr.mxu0 0.0
        %2718 = vmatpush1.msra.mxu0 0.0
        %2719 = vmatprep.subr.mxu0 0.0
        %2720 = vmatpush1.msra.mxu0 0.0
        %2721 = vmatprep.subr.mxu0 0.0
        %2722 = vmatpush1.msra.mxu0 0.0
        %2723 = vmatprep.subr.mxu0 0.0
        %2724 = vmatpush1.msra.mxu0 0.0
        %2725 = vmatprep.subr.mxu0 0.0
        %2726 = vmatpush1.msra.mxu0 0.0
        %2727 = vmatprep.subr.mxu0 0.0
        %2728 = vmatpush1.msra.mxu0 0.0
        %2729 = vmatprep.subr.mxu0 0.0
        %2730 = vmatpush1.msra.mxu0 0.0
        %2731 = vmatprep.subr.mxu0 0.0
        %2732 = vmatpush1.msra.mxu0 0.0
        %2733 = vmatprep.subr.mxu0 0.0
        %2734 = vmatpush1.msra.mxu0 0.0
        %2735 = vmatprep.subr.mxu0 0.0
        %2736 = vmatpush1.msra.mxu0 0.0
        %2737 = vmatprep.subr.mxu0 0.0
        %2738 = vmatpush1.msra.mxu0 0.0
        %2739 = vmatprep.mubr.f32.mxu0 0.0
        %2740 = vmatmul.mubr.f32.gmra.mrb[0].mxu0 %v2673
        %v2741 = vpop.f32.mrb[0].mxu0
        %v2742 = vadd.f32 0.0, %v2741
        %v2743 = vpop.f32.mrb[0].mxu0
        %2744 = vdwg.mxu0
        %v2747 = vunpack.c.l.s4 1966171168
        %v2748 = vunpack.c.0.s8 %v2747
        %v2749 = vlaneseq
        %v2750 = vshrl.u32 %v2749, 7
        %v2751 = vsub.s32 %v2748, %v2750
        %v2752 = vrot.slane %v2742, %v2751
        %v2753 = vcombine.high %v2752, %v2752
        %v2755 = vunpack.c.l.s4 1966171168
        %v2756 = vunpack.c.0.s8 %v2755
        %v2757 = vlaneseq
        %v2758 = vshrl.u32 %v2757, 7
        %v2759 = vsub.s32 %v2756, %v2758
        %v2760 = vrot.slane %v2752, %v2759
        %v2762 = vunpack.c.l.s4 1966171168
        %v2763 = vunpack.c.0.s8 %v2762
        %v2764 = vlaneseq
        %v2765 = vshrl.u32 %v2764, 7
        %v2766 = vsub.s32 %v2763, %v2765
        %v2767 = vrot.slane %v2753, %v2766
        %v2768 = vcombine.high %v2760, %v2760
        %v2769 = vcombine.high %v2767, %v2767
        %2774 = vst.msk [vmem:[%s243] sm:$0x1] %vm512, %v2760
        %2775 = vst.msk [vmem:[%s243 + $0x2] sm:$0x1] %vm512, %v2767
        %2776 = vst.msk [vmem:[%s243 + $0x4] sm:$0x1] %vm512, %v2768
        %2777 = vst.msk [vmem:[%s243 + $0x6] sm:$0x1] %vm512, %v2769
        %v2778 = vrot.slane %v1478, 1
        %v2779 = vsel %vm303, %v1554, %v2778
        %v2780 = vrot.slane %v1630, 7
        %v2781 = vsel %vm306, %v2780, %v2779
        %v2782 = vrot.slane %v1706, 6
        %v2783 = vsel %vm309, %v2782, %v2781
        %v2784 = vrot.slane %v1782, 5
        %v2785 = vsel %vm2644, %v2784, %v2783
        %v2786 = vrot.slane %v1858, 4
        %v2787 = vsel %vm2647, %v2786, %v2785
        %v2788 = vrot.slane %v1934, 3
        %v2789 = vsel %vm2650, %v2788, %v2787
        %v2790 = vrot.slane %v2010, 2
        %v2791 = vsel %vm2653, %v2790, %v2789
        %v2792 = vrot.slane %v2086, 1
        %v2793 = vsel %vm303, %v2162, %v2792
        %v2794 = vrot.slane %v2238, 7
        %v2795 = vsel %vm306, %v2794, %v2793
        %v2796 = vrot.slane %v2314, 6
        %v2797 = vsel %vm309, %v2796, %v2795
        %v2798 = vrot.slane %v2390, 5
        %v2799 = vsel %vm2644, %v2798, %v2797
        %v2800 = vrot.slane %v2466, 4
        %v2801 = vsel %vm2647, %v2800, %v2799
        %v2802 = vrot.slane %v2542, 3
        %v2803 = vsel %vm2650, %v2802, %v2801
        %v2804 = vrot.slane %v2618, 2
        %v2805 = vsel %vm2653, %v2804, %v2803
        %2808 = vmatprep.subr.mxu0 0.0
        %2809 = vmatpush1.msra.mxu0 %v2791
        %2810 = vmatprep.subr.mxu0 0.0
        %2811 = vmatpush1.msra.mxu0 %v2805
        %2812 = vmatprep.subr.mxu0 0.0
        %2813 = vmatpush1.msra.mxu0 0.0
        %2814 = vmatprep.subr.mxu0 0.0
        %2815 = vmatpush1.msra.mxu0 0.0
        %2816 = vmatprep.subr.mxu0 0.0
        %2817 = vmatpush1.msra.mxu0 0.0
        %2818 = vmatprep.subr.mxu0 0.0
        %2819 = vmatpush1.msra.mxu0 0.0
        %2820 = vmatprep.subr.mxu0 0.0
        %2821 = vmatpush1.msra.mxu0 0.0
        %2822 = vmatprep.subr.mxu0 0.0
        %2823 = vmatpush1.msra.mxu0 0.0
        %2824 = vmatprep.subr.mxu0 0.0
        %2825 = vmatpush1.msra.mxu0 0.0
        %2826 = vmatprep.subr.mxu0 0.0
        %2827 = vmatpush1.msra.mxu0 0.0
        %2828 = vmatprep.subr.mxu0 0.0
        %2829 = vmatpush1.msra.mxu0 0.0
        %2830 = vmatprep.subr.mxu0 0.0
        %2831 = vmatpush1.msra.mxu0 0.0
        %2832 = vmatprep.subr.mxu0 0.0
        %2833 = vmatpush1.msra.mxu0 0.0
        %2834 = vmatprep.subr.mxu0 0.0
        %2835 = vmatpush1.msra.mxu0 0.0
        %2836 = vmatprep.subr.mxu0 0.0
        %2837 = vmatpush1.msra.mxu0 0.0
        %2838 = vmatprep.subr.mxu0 0.0
        %2839 = vmatpush1.msra.mxu0 0.0
        %2840 = vmatprep.subr.mxu0 0.0
        %2841 = vmatpush1.msra.mxu0 0.0
        %2842 = vmatprep.subr.mxu0 0.0
        %2843 = vmatpush1.msra.mxu0 0.0
        %2844 = vmatprep.subr.mxu0 0.0
        %2845 = vmatpush1.msra.mxu0 0.0
        %2846 = vmatprep.subr.mxu0 0.0
        %2847 = vmatpush1.msra.mxu0 0.0
        %2848 = vmatprep.subr.mxu0 0.0
        %2849 = vmatpush1.msra.mxu0 0.0
        %2850 = vmatprep.subr.mxu0 0.0
        %2851 = vmatpush1.msra.mxu0 0.0
        %2852 = vmatprep.subr.mxu0 0.0
        %2853 = vmatpush1.msra.mxu0 0.0
        %2854 = vmatprep.subr.mxu0 0.0
        %2855 = vmatpush1.msra.mxu0 0.0
        %2856 = vmatprep.subr.mxu0 0.0
        %2857 = vmatpush1.msra.mxu0 0.0
        %2858 = vmatprep.subr.mxu0 0.0
        %2859 = vmatpush1.msra.mxu0 0.0
        %2860 = vmatprep.subr.mxu0 0.0
        %2861 = vmatpush1.msra.mxu0 0.0
        %2862 = vmatprep.subr.mxu0 0.0
        %2863 = vmatpush1.msra.mxu0 0.0
        %2864 = vmatprep.subr.mxu0 0.0
        %2865 = vmatpush1.msra.mxu0 0.0
        %2866 = vmatprep.subr.mxu0 0.0
        %2867 = vmatpush1.msra.mxu0 0.0
        %2868 = vmatprep.subr.mxu0 0.0
        %2869 = vmatpush1.msra.mxu0 0.0
        %2870 = vmatprep.subr.mxu0 0.0
        %2871 = vmatpush1.msra.mxu0 0.0
        %2872 = vmatprep.mubr.f32.mxu0 0.0
        %2873 = vmatmul.mubr.f32.gmra.mrb[0].mxu0 %v2673
        %v2874 = vpop.f32.mrb[0].mxu0
        %v2875 = vadd.f32 0.0, %v2874
        %v2876 = vpop.f32.mrb[0].mxu0
        %2877 = vdwg.mxu0
        %v2880 = vunpack.c.l.s4 1966171168
        %v2881 = vunpack.c.0.s8 %v2880
        %v2882 = vlaneseq
        %v2883 = vshrl.u32 %v2882, 7
        %v2884 = vsub.s32 %v2881, %v2883
        %v2885 = vrot.slane %v2875, %v2884
        %v2886 = vcombine.high %v2885, %v2885
        %v2888 = vunpack.c.l.s4 1966171168
        %v2889 = vunpack.c.0.s8 %v2888
        %v2890 = vlaneseq
        %v2891 = vshrl.u32 %v2890, 7
        %v2892 = vsub.s32 %v2889, %v2891
        %v2893 = vrot.slane %v2885, %v2892
        %v2895 = vunpack.c.l.s4 1966171168
        %v2896 = vunpack.c.0.s8 %v2895
        %v2897 = vlaneseq
        %v2898 = vshrl.u32 %v2897, 7
        %v2899 = vsub.s32 %v2896, %v2898
        %v2900 = vrot.slane %v2886, %v2899
        %v2901 = vcombine.high %v2893, %v2893
        %v2902 = vcombine.high %v2900, %v2900
        %2907 = vst.msk [vmem:[%s243 + $0x1] sm:$0x1] %vm512, %v2893
        %2908 = vst.msk [vmem:[%s243 + $0x3] sm:$0x1] %vm512, %v2900
        %2909 = vst.msk [vmem:[%s243 + $0x5] sm:$0x1] %vm512, %v2901
        %2910 = vst.msk [vmem:[%s243 + $0x7] sm:$0x1] %vm512, %v2902
        %s2911 = sadd.s32 %s24, 1
        %p2912 = scmp.lt.s32.totalorder %s2911, 2
        // Predicated region
        $region45: #{tpu_custom_call.1} parent=39 // pred_check
          %p2913 = pneg %p2912
        $region46: #{tpu_custom_call.1} parent=39 // pred_check_branch
          %2915 = sbr.rel (%p2913) target = $region48
        $region47: #{tpu_custom_call.1} parent=39 // pred_region
          %v2918 = vcombine.high %v289, %v289
          %v2920 = vunpack.c.l.s4 1966171168
          %v2921 = vunpack.c.0.s8 %v2920
          %v2922 = vlaneseq
          %v2923 = vshrl.u32 %v2922, 7
          %v2924 = vsub.s32 %v2921, %v2923
          %v2925 = vrot.slane %v289, %v2924
          %v2927 = vunpack.c.l.s4 1966171168
          %v2928 = vunpack.c.0.s8 %v2927
          %v2929 = vlaneseq
          %v2930 = vshrl.u32 %v2929, 7
          %v2931 = vsub.s32 %v2928, %v2930
          %v2932 = vrot.slane %v2918, %v2931
          %v2933 = vcombine.high %v2925, %v2925
          %v2934 = vcombine.high %v2932, %v2932
          %v2936 = vunpack.c.l.s4 1966171168
          %v2937 = vunpack.c.0.s8 %v2936
          %v2938 = vlaneseq
          %v2939 = vshrl.u32 %v2938, 7
          %v2940 = vsub.s32 %v2937, %v2939
          %v2941 = vrot.slane %v2925, %v2940
          %v2943 = vunpack.c.l.s4 1966171168
          %v2944 = vunpack.c.0.s8 %v2943
          %v2945 = vlaneseq
          %v2946 = vshrl.u32 %v2945, 7
          %v2947 = vsub.s32 %v2944, %v2946
          %v2948 = vrot.slane %v2932, %v2947
          %v2950 = vunpack.c.l.s4 1966171168
          %v2951 = vunpack.c.0.s8 %v2950
          %v2952 = vlaneseq
          %v2953 = vshrl.u32 %v2952, 7
          %v2954 = vsub.s32 %v2951, %v2953
          %v2955 = vrot.slane %v2933, %v2954
          %v2957 = vunpack.c.l.s4 1966171168
          %v2958 = vunpack.c.0.s8 %v2957
          %v2959 = vlaneseq
          %v2960 = vshrl.u32 %v2959, 7
          %v2961 = vsub.s32 %v2958, %v2960
          %v2962 = vrot.slane %v2934, %v2961
          %v2963 = vcombine.high %v2941, %v2941
          %v2964 = vcombine.high %v2948, %v2948
          %v2965 = vcombine.high %v2955, %v2955
          %v2966 = vcombine.high %v2962, %v2962
          %v2967 = vcombine.high %v290, %v290
          %v2969 = vunpack.c.l.s4 1966171168
          %v2970 = vunpack.c.0.s8 %v2969
          %v2971 = vlaneseq
          %v2972 = vshrl.u32 %v2971, 7
          %v2973 = vsub.s32 %v2970, %v2972
          %v2974 = vrot.slane %v290, %v2973
          %v2976 = vunpack.c.l.s4 1966171168
          %v2977 = vunpack.c.0.s8 %v2976
          %v2978 = vlaneseq
          %v2979 = vshrl.u32 %v2978, 7
          %v2980 = vsub.s32 %v2977, %v2979
          %v2981 = vrot.slane %v2967, %v2980
          %v2982 = vcombine.high %v2974, %v2974
          %v2983 = vcombine.high %v2981, %v2981
          %v2985 = vunpack.c.l.s4 1966171168
          %v2986 = vunpack.c.0.s8 %v2985
          %v2987 = vlaneseq
          %v2988 = vshrl.u32 %v2987, 7
          %v2989 = vsub.s32 %v2986, %v2988
          %v2990 = vrot.slane %v2974, %v2989
          %v2992 = vunpack.c.l.s4 1966171168
          %v2993 = vunpack.c.0.s8 %v2992
          %v2994 = vlaneseq
          %v2995 = vshrl.u32 %v2994, 7
          %v2996 = vsub.s32 %v2993, %v2995
          %v2997 = vrot.slane %v2981, %v2996
          %v2999 = vunpack.c.l.s4 1966171168
          %v3000 = vunpack.c.0.s8 %v2999
          %v3001 = vlaneseq
          %v3002 = vshrl.u32 %v3001, 7
          %v3003 = vsub.s32 %v3000, %v3002
          %v3004 = vrot.slane %v2982, %v3003
          %v3006 = vunpack.c.l.s4 1966171168
          %v3007 = vunpack.c.0.s8 %v3006
          %v3008 = vlaneseq
          %v3009 = vshrl.u32 %v3008, 7
          %v3010 = vsub.s32 %v3007, %v3009
          %v3011 = vrot.slane %v2983, %v3010
          %v3012 = vcombine.high %v2990, %v2990
          %v3013 = vcombine.high %v2997, %v2997
          %v3014 = vcombine.high %v3004, %v3004
          %v3015 = vcombine.high %v3011, %v3011
          %v3016 = vlaneseq
          %v3017 = vshrl.u32 %v3016, 7
          %v3018 = vsub.s32 0, %v3017
          %v3019 = vrot.slane %v2941, %v3018
          %v3020 = vlaneseq
          %v3021 = vshrl.u32 %v3020, 7
          %v3022 = vsub.s32 0, %v3021
          %v3023 = vrot.slane %v2955, %v3022
          %v3024 = vlaneseq
          %v3025 = vshrl.u32 %v3024, 7
          %v3026 = vsub.s32 0, %v3025
          %v3027 = vrot.slane %v2963, %v3026
          %v3028 = vlaneseq
          %v3029 = vshrl.u32 %v3028, 7
          %v3030 = vsub.s32 0, %v3029
          %v3031 = vrot.slane %v2965, %v3030
          %v3032 = vlaneseq
          %v3033 = vshrl.u32 %v3032, 7
          %v3034 = vsub.s32 0, %v3033
          %v3035 = vrot.slane %v2948, %v3034
          %v3036 = vlaneseq
          %v3037 = vshrl.u32 %v3036, 7
          %v3038 = vsub.s32 0, %v3037
          %v3039 = vrot.slane %v2962, %v3038
          %v3040 = vlaneseq
          %v3041 = vshrl.u32 %v3040, 7
          %v3042 = vsub.s32 0, %v3041
          %v3043 = vrot.slane %v2964, %v3042
          %v3044 = vlaneseq
          %v3045 = vshrl.u32 %v3044, 7
          %v3046 = vsub.s32 0, %v3045
          %v3047 = vrot.slane %v2966, %v3046
          %v3048 = vlaneseq
          %v3049 = vshrl.u32 %v3048, 7
          %v3050 = vsub.s32 0, %v3049
          %v3051 = vrot.slane %v2990, %v3050
          %v3052 = vlaneseq
          %v3053 = vshrl.u32 %v3052, 7
          %v3054 = vsub.s32 0, %v3053
          %v3055 = vrot.slane %v3004, %v3054
          %v3056 = vlaneseq
          %v3057 = vshrl.u32 %v3056, 7
          %v3058 = vsub.s32 0, %v3057
          %v3059 = vrot.slane %v3012, %v3058
          %v3060 = vlaneseq
          %v3061 = vshrl.u32 %v3060, 7
          %v3062 = vsub.s32 0, %v3061
          %v3063 = vrot.slane %v3014, %v3062
          %v3064 = vlaneseq
          %v3065 = vshrl.u32 %v3064, 7
          %v3066 = vsub.s32 0, %v3065
          %v3067 = vrot.slane %v2997, %v3066
          %v3068 = vlaneseq
          %v3069 = vshrl.u32 %v3068, 7
          %v3070 = vsub.s32 0, %v3069
          %v3071 = vrot.slane %v3011, %v3070
          %v3072 = vlaneseq
          %v3073 = vshrl.u32 %v3072, 7
          %v3074 = vsub.s32 0, %v3073
          %v3075 = vrot.slane %v3013, %v3074
          %v3076 = vlaneseq
          %v3077 = vshrl.u32 %v3076, 7
          %v3078 = vsub.s32 0, %v3077
          %v3079 = vrot.slane %v3015, %v3078
          %v3096 = vmul.f32 %v3019, %v752
          %v3097 = vmul.f32 %v3023, %v753
          %v3098 = vmul.f32 %v3027, %v754
          %v3099 = vmul.f32 %v3031, %v755
          %v3100 = vmul.f32 %v3035, %v756
          %v3101 = vmul.f32 %v3039, %v757
          %v3102 = vmul.f32 %v3043, %v758
          %v3103 = vmul.f32 %v3047, %v759
          %v3104 = vmul.f32 %v3051, %v760
          %v3105 = vmul.f32 %v3055, %v761
          %v3106 = vmul.f32 %v3059, %v762
          %v3107 = vmul.f32 %v3063, %v763
          %v3108 = vmul.f32 %v3067, %v764
          %v3109 = vmul.f32 %v3071, %v765
          %v3110 = vmul.f32 %v3075, %v766
          %v3111 = vmul.f32 %v3079, %v767
          %vm3112 = vcmask 58368
          %v3113 = vsel %vm3112, %v3096, 0.0
          %3114 = vadd.xlane.f32.xlu0 %v3113
          %v3115 = vpop.xlane.xlu0 %3114
          %v3116 = vsel %vm3112, %v3097, 0.0
          %3117 = vadd.xlane.f32.xlu0 %v3116
          %v3118 = vpop.xlane.xlu0 %3117
          %v3119 = vsel %vm3112, %v3098, 0.0
          %3120 = vadd.xlane.f32.xlu0 %v3119
          %v3121 = vpop.xlane.xlu0 %3120
          %v3122 = vsel %vm3112, %v3099, 0.0
          %3123 = vadd.xlane.f32.xlu0 %v3122
          %v3124 = vpop.xlane.xlu0 %3123
          %v3125 = vsel %vm3112, %v3100, 0.0
          %3126 = vadd.xlane.f32.xlu0 %v3125
          %v3127 = vpop.xlane.xlu0 %3126
          %v3128 = vsel %vm3112, %v3101, 0.0
          %3129 = vadd.xlane.f32.xlu0 %v3128
          %v3130 = vpop.xlane.xlu0 %3129
          %v3131 = vsel %vm3112, %v3102, 0.0
          %3132 = vadd.xlane.f32.xlu0 %v3131
          %v3133 = vpop.xlane.xlu0 %3132
          %v3134 = vsel %vm3112, %v3103, 0.0
          %3135 = vadd.xlane.f32.xlu0 %v3134
          %v3136 = vpop.xlane.xlu0 %3135
          %v3137 = vsel %vm3112, %v3104, 0.0
          %3138 = vadd.xlane.f32.xlu0 %v3137
          %v3139 = vpop.xlane.xlu0 %3138
          %v3140 = vsel %vm3112, %v3105, 0.0
          %3141 = vadd.xlane.f32.xlu0 %v3140
          %v3142 = vpop.xlane.xlu0 %3141
          %v3143 = vsel %vm3112, %v3106, 0.0
          %3144 = vadd.xlane.f32.xlu0 %v3143
          %v3145 = vpop.xlane.xlu0 %3144
          %v3146 = vsel %vm3112, %v3107, 0.0
          %3147 = vadd.xlane.f32.xlu0 %v3146
          %v3148 = vpop.xlane.xlu0 %3147
          %v3149 = vsel %vm3112, %v3108, 0.0
          %3150 = vadd.xlane.f32.xlu0 %v3149
          %v3151 = vpop.xlane.xlu0 %3150
          %v3152 = vsel %vm3112, %v3109, 0.0
          %3153 = vadd.xlane.f32.xlu0 %v3152
          %v3154 = vpop.xlane.xlu0 %3153
          %v3155 = vsel %vm3112, %v3110, 0.0
          %3156 = vadd.xlane.f32.xlu0 %v3155
          %v3157 = vpop.xlane.xlu0 %3156
          %v3158 = vsel %vm3112, %v3111, 0.0
          %3159 = vadd.xlane.f32.xlu0 %v3158
          %v3160 = vpop.xlane.xlu0 %3159
          %v3163 = vcombine.high %v292, %v292
          %v3165 = vunpack.c.l.s4 1966171168
          %v3166 = vunpack.c.0.s8 %v3165
          %v3167 = vlaneseq
          %v3168 = vshrl.u32 %v3167, 7
          %v3169 = vsub.s32 %v3166, %v3168
          %v3170 = vrot.slane %v292, %v3169
          %v3172 = vunpack.c.l.s4 1966171168
          %v3173 = vunpack.c.0.s8 %v3172
          %v3174 = vlaneseq
          %v3175 = vshrl.u32 %v3174, 7
          %v3176 = vsub.s32 %v3173, %v3175
          %v3177 = vrot.slane %v3163, %v3176
          %v3178 = vcombine.high %v3170, %v3170
          %v3179 = vcombine.high %v3177, %v3177
          %v3181 = vunpack.c.l.s4 1966171168
          %v3182 = vunpack.c.0.s8 %v3181
          %v3183 = vlaneseq
          %v3184 = vshrl.u32 %v3183, 7
          %v3185 = vsub.s32 %v3182, %v3184
          %v3186 = vrot.slane %v3170, %v3185
          %v3188 = vunpack.c.l.s4 1966171168
          %v3189 = vunpack.c.0.s8 %v3188
          %v3190 = vlaneseq
          %v3191 = vshrl.u32 %v3190, 7
          %v3192 = vsub.s32 %v3189, %v3191
          %v3193 = vrot.slane %v3177, %v3192
          %v3195 = vunpack.c.l.s4 1966171168
          %v3196 = vunpack.c.0.s8 %v3195
          %v3197 = vlaneseq
          %v3198 = vshrl.u32 %v3197, 7
          %v3199 = vsub.s32 %v3196, %v3198
          %v3200 = vrot.slane %v3178, %v3199
          %v3202 = vunpack.c.l.s4 1966171168
          %v3203 = vunpack.c.0.s8 %v3202
          %v3204 = vlaneseq
          %v3205 = vshrl.u32 %v3204, 7
          %v3206 = vsub.s32 %v3203, %v3205
          %v3207 = vrot.slane %v3179, %v3206
          %v3208 = vcombine.high %v3186, %v3186
          %v3209 = vcombine.high %v3193, %v3193
          %v3210 = vcombine.high %v3200, %v3200
          %v3211 = vcombine.high %v3207, %v3207
          %v3212 = vcombine.high %v293, %v293
          %v3214 = vunpack.c.l.s4 1966171168
          %v3215 = vunpack.c.0.s8 %v3214
          %v3216 = vlaneseq
          %v3217 = vshrl.u32 %v3216, 7
          %v3218 = vsub.s32 %v3215, %v3217
          %v3219 = vrot.slane %v293, %v3218
          %v3221 = vunpack.c.l.s4 1966171168
          %v3222 = vunpack.c.0.s8 %v3221
          %v3223 = vlaneseq
          %v3224 = vshrl.u32 %v3223, 7
          %v3225 = vsub.s32 %v3222, %v3224
          %v3226 = vrot.slane %v3212, %v3225
          %v3227 = vcombine.high %v3219, %v3219
          %v3228 = vcombine.high %v3226, %v3226
          %v3230 = vunpack.c.l.s4 1966171168
          %v3231 = vunpack.c.0.s8 %v3230
          %v3232 = vlaneseq
          %v3233 = vshrl.u32 %v3232, 7
          %v3234 = vsub.s32 %v3231, %v3233
          %v3235 = vrot.slane %v3219, %v3234
          %v3237 = vunpack.c.l.s4 1966171168
          %v3238 = vunpack.c.0.s8 %v3237
          %v3239 = vlaneseq
          %v3240 = vshrl.u32 %v3239, 7
          %v3241 = vsub.s32 %v3238, %v3240
          %v3242 = vrot.slane %v3226, %v3241
          %v3244 = vunpack.c.l.s4 1966171168
          %v3245 = vunpack.c.0.s8 %v3244
          %v3246 = vlaneseq
          %v3247 = vshrl.u32 %v3246, 7
          %v3248 = vsub.s32 %v3245, %v3247
          %v3249 = vrot.slane %v3227, %v3248
          %v3251 = vunpack.c.l.s4 1966171168
          %v3252 = vunpack.c.0.s8 %v3251
          %v3253 = vlaneseq
          %v3254 = vshrl.u32 %v3253, 7
          %v3255 = vsub.s32 %v3252, %v3254
          %v3256 = vrot.slane %v3228, %v3255
          %v3257 = vcombine.high %v3235, %v3235
          %v3258 = vcombine.high %v3242, %v3242
          %v3259 = vcombine.high %v3249, %v3249
          %v3260 = vcombine.high %v3256, %v3256
          %v3261 = vlaneseq
          %v3262 = vshrl.u32 %v3261, 7
          %v3263 = vsub.s32 0, %v3262
          %v3264 = vrot.slane %v3186, %v3263
          %v3265 = vlaneseq
          %v3266 = vshrl.u32 %v3265, 7
          %v3267 = vsub.s32 0, %v3266
          %v3268 = vrot.slane %v3200, %v3267
          %v3269 = vlaneseq
          %v3270 = vshrl.u32 %v3269, 7
          %v3271 = vsub.s32 0, %v3270
          %v3272 = vrot.slane %v3208, %v3271
          %v3273 = vlaneseq
          %v3274 = vshrl.u32 %v3273, 7
          %v3275 = vsub.s32 0, %v3274
          %v3276 = vrot.slane %v3210, %v3275
          %v3277 = vlaneseq
          %v3278 = vshrl.u32 %v3277, 7
          %v3279 = vsub.s32 0, %v3278
          %v3280 = vrot.slane %v3193, %v3279
          %v3281 = vlaneseq
          %v3282 = vshrl.u32 %v3281, 7
          %v3283 = vsub.s32 0, %v3282
          %v3284 = vrot.slane %v3207, %v3283
          %v3285 = vlaneseq
          %v3286 = vshrl.u32 %v3285, 7
          %v3287 = vsub.s32 0, %v3286
          %v3288 = vrot.slane %v3209, %v3287
          %v3289 = vlaneseq
          %v3290 = vshrl.u32 %v3289, 7
          %v3291 = vsub.s32 0, %v3290
          %v3292 = vrot.slane %v3211, %v3291
          %v3293 = vlaneseq
          %v3294 = vshrl.u32 %v3293, 7
          %v3295 = vsub.s32 0, %v3294
          %v3296 = vrot.slane %v3235, %v3295
          %v3297 = vlaneseq
          %v3298 = vshrl.u32 %v3297, 7
          %v3299 = vsub.s32 0, %v3298
          %v3300 = vrot.slane %v3249, %v3299
          %v3301 = vlaneseq
          %v3302 = vshrl.u32 %v3301, 7
          %v3303 = vsub.s32 0, %v3302
          %v3304 = vrot.slane %v3257, %v3303
          %v3305 = vlaneseq
          %v3306 = vshrl.u32 %v3305, 7
          %v3307 = vsub.s32 0, %v3306
          %v3308 = vrot.slane %v3259, %v3307
          %v3309 = vlaneseq
          %v3310 = vshrl.u32 %v3309, 7
          %v3311 = vsub.s32 0, %v3310
          %v3312 = vrot.slane %v3242, %v3311
          %v3313 = vlaneseq
          %v3314 = vshrl.u32 %v3313, 7
          %v3315 = vsub.s32 0, %v3314
          %v3316 = vrot.slane %v3256, %v3315
          %v3317 = vlaneseq
          %v3318 = vshrl.u32 %v3317, 7
          %v3319 = vsub.s32 0, %v3318
          %v3320 = vrot.slane %v3258, %v3319
          %v3321 = vlaneseq
          %v3322 = vshrl.u32 %v3321, 7
          %v3323 = vsub.s32 0, %v3322
          %v3324 = vrot.slane %v3260, %v3323
          %v3341 = vmul.f32 %v3264, %v752
          %v3342 = vmul.f32 %v3268, %v753
          %v3343 = vmul.f32 %v3272, %v754
          %v3344 = vmul.f32 %v3276, %v755
          %v3345 = vmul.f32 %v3280, %v756
          %v3346 = vmul.f32 %v3284, %v757
          %v3347 = vmul.f32 %v3288, %v758
          %v3348 = vmul.f32 %v3292, %v759
          %v3349 = vmul.f32 %v3296, %v760
          %v3350 = vmul.f32 %v3300, %v761
          %v3351 = vmul.f32 %v3304, %v762
          %v3352 = vmul.f32 %v3308, %v763
          %v3353 = vmul.f32 %v3312, %v764
          %v3354 = vmul.f32 %v3316, %v765
          %v3355 = vmul.f32 %v3320, %v766
          %v3356 = vmul.f32 %v3324, %v767
          %v3357 = vsel %vm3112, %v3341, 0.0
          %3358 = vadd.xlane.f32.xlu0 %v3357
          %v3359 = vpop.xlane.xlu0 %3358
          %v3360 = vsel %vm3112, %v3342, 0.0
          %3361 = vadd.xlane.f32.xlu0 %v3360
          %v3362 = vpop.xlane.xlu0 %3361
          %v3363 = vsel %vm3112, %v3343, 0.0
          %3364 = vadd.xlane.f32.xlu0 %v3363
          %v3365 = vpop.xlane.xlu0 %3364
          %v3366 = vsel %vm3112, %v3344, 0.0
          %3367 = vadd.xlane.f32.xlu0 %v3366
          %v3368 = vpop.xlane.xlu0 %3367
          %v3369 = vsel %vm3112, %v3345, 0.0
          %3370 = vadd.xlane.f32.xlu0 %v3369
          %v3371 = vpop.xlane.xlu0 %3370
          %v3372 = vsel %vm3112, %v3346, 0.0
          %3373 = vadd.xlane.f32.xlu0 %v3372
          %v3374 = vpop.xlane.xlu0 %3373
          %v3375 = vsel %vm3112, %v3347, 0.0
          %3376 = vadd.xlane.f32.xlu0 %v3375
          %v3377 = vpop.xlane.xlu0 %3376
          %v3378 = vsel %vm3112, %v3348, 0.0
          %3379 = vadd.xlane.f32.xlu0 %v3378
          %v3380 = vpop.xlane.xlu0 %3379
          %v3381 = vsel %vm3112, %v3349, 0.0
          %3382 = vadd.xlane.f32.xlu0 %v3381
          %v3383 = vpop.xlane.xlu0 %3382
          %v3384 = vsel %vm3112, %v3350, 0.0
          %3385 = vadd.xlane.f32.xlu0 %v3384
          %v3386 = vpop.xlane.xlu0 %3385
          %v3387 = vsel %vm3112, %v3351, 0.0
          %3388 = vadd.xlane.f32.xlu0 %v3387
          %v3389 = vpop.xlane.xlu0 %3388
          %v3390 = vsel %vm3112, %v3352, 0.0
          %3391 = vadd.xlane.f32.xlu0 %v3390
          %v3392 = vpop.xlane.xlu0 %3391
          %v3393 = vsel %vm3112, %v3353, 0.0
          %3394 = vadd.xlane.f32.xlu0 %v3393
          %v3395 = vpop.xlane.xlu0 %3394
          %v3396 = vsel %vm3112, %v3354, 0.0
          %3397 = vadd.xlane.f32.xlu0 %v3396
          %v3398 = vpop.xlane.xlu0 %3397
          %v3399 = vsel %vm3112, %v3355, 0.0
          %3400 = vadd.xlane.f32.xlu0 %v3399
          %v3401 = vpop.xlane.xlu0 %3400
          %v3402 = vsel %vm3112, %v3356, 0.0
          %3403 = vadd.xlane.f32.xlu0 %v3402
          %v3404 = vpop.xlane.xlu0 %3403
          %v3405 = vld [vmem:[#allocation3] sm:$0xff]
          %v3406 = vld [vmem:[#allocation3 + $0x8] sm:$0xff]
          %v3407 = vld [vmem:[#allocation4] sm:$0xff]
          %v3408 = vld [vmem:[#allocation4 + $0x8] sm:$0xff]
          %3409 = vset.pattern.permute.xlu0 0
          %3410 = vperm.xlu0 %3409, %v289
          %v3411 = vpop.permute.xlu0 %3410
          %3413 = vset.pattern.permute.xlu0 0
          %3414 = vperm.xlu0 %3413, %v290
          %v3415 = vpop.permute.xlu0 %3414
          %v3417 = vmul.f32 %v3411, %v3405
          %v3418 = vmul.f32 %v3415, %v3406
          %3419 = vset.pattern.permute.xlu0 0
          %3420 = vperm.xlu0 %3419, %v292
          %v3421 = vpop.permute.xlu0 %3420
          %3423 = vset.pattern.permute.xlu0 0
          %3424 = vperm.xlu0 %3423, %v293
          %v3425 = vpop.permute.xlu0 %3424
          %v3427 = vmul.f32 %v3421, %v3407
          %v3428 = vmul.f32 %v3425, %v3408
          %v3429 = vsub.f32 %v3417, %v3427
          %v3430 = vsub.f32 %v3418, %v3428
          %v3447 = vlaneseq
          %v3448 = vand.u32 %v3447, 127
          %v3449 = vlaneseq
          %v3450 = vshrl.u32 %v3449, 7
          %v3451 = vsub.s32 %v3448, %v3450
          %v3452 = vrot.slane %v3115, %v3451
          %v3453 = vlaneseq
          %v3454 = vshrl.u32 %v3453, 7
          %v3455 = vsub.s32 %v3448, %v3454
          %v3456 = vrot.slane %v3118, %v3455
          %v3457 = vlaneseq
          %v3458 = vshrl.u32 %v3457, 7
          %v3459 = vsub.s32 %v3448, %v3458
          %v3460 = vrot.slane %v3121, %v3459
          %v3461 = vlaneseq
          %v3462 = vshrl.u32 %v3461, 7
          %v3463 = vsub.s32 %v3448, %v3462
          %v3464 = vrot.slane %v3124, %v3463
          %v3465 = vlaneseq
          %v3466 = vshrl.u32 %v3465, 7
          %v3467 = vsub.s32 %v3448, %v3466
          %v3468 = vrot.slane %v3127, %v3467
          %v3469 = vlaneseq
          %v3470 = vshrl.u32 %v3469, 7
          %v3471 = vsub.s32 %v3448, %v3470
          %v3472 = vrot.slane %v3130, %v3471
          %v3473 = vlaneseq
          %v3474 = vshrl.u32 %v3473, 7
          %v3475 = vsub.s32 %v3448, %v3474
          %v3476 = vrot.slane %v3133, %v3475
          %v3477 = vlaneseq
          %v3478 = vshrl.u32 %v3477, 7
          %v3479 = vsub.s32 %v3448, %v3478
          %v3480 = vrot.slane %v3136, %v3479
          %v3481 = vlaneseq
          %v3482 = vshrl.u32 %v3481, 7
          %v3483 = vsub.s32 %v3448, %v3482
          %v3484 = vrot.slane %v3139, %v3483
          %v3485 = vlaneseq
          %v3486 = vshrl.u32 %v3485, 7
          %v3487 = vsub.s32 %v3448, %v3486
          %v3488 = vrot.slane %v3142, %v3487
          %v3489 = vlaneseq
          %v3490 = vshrl.u32 %v3489, 7
          %v3491 = vsub.s32 %v3448, %v3490
          %v3492 = vrot.slane %v3145, %v3491
          %v3493 = vlaneseq
          %v3494 = vshrl.u32 %v3493, 7
          %v3495 = vsub.s32 %v3448, %v3494
          %v3496 = vrot.slane %v3148, %v3495
          %v3497 = vlaneseq
          %v3498 = vshrl.u32 %v3497, 7
          %v3499 = vsub.s32 %v3448, %v3498
          %v3500 = vrot.slane %v3151, %v3499
          %v3501 = vlaneseq
          %v3502 = vshrl.u32 %v3501, 7
          %v3503 = vsub.s32 %v3448, %v3502
          %v3504 = vrot.slane %v3154, %v3503
          %v3505 = vlaneseq
          %v3506 = vshrl.u32 %v3505, 7
          %v3507 = vsub.s32 %v3448, %v3506
          %v3508 = vrot.slane %v3157, %v3507
          %v3509 = vlaneseq
          %v3510 = vshrl.u32 %v3509, 7
          %v3511 = vsub.s32 %v3448, %v3510
          %v3512 = vrot.slane %v3160, %v3511
          %v3513 = vsel %vm303, %v3456, %v3452
          %v3514 = vsel %vm306, %v3460, %v3513
          %v3515 = vsel %vm309, %v3464, %v3514
          %v3516 = vsel %vm2644, %v3468, %v3515
          %v3517 = vsel %vm2647, %v3472, %v3516
          %v3518 = vsel %vm2650, %v3476, %v3517
          %v3519 = vsel %vm2653, %v3480, %v3518
          %v3520 = vsel %vm303, %v3488, %v3484
          %v3521 = vsel %vm306, %v3492, %v3520
          %v3522 = vsel %vm309, %v3496, %v3521
          %v3523 = vsel %vm2644, %v3500, %v3522
          %v3524 = vsel %vm2647, %v3504, %v3523
          %v3525 = vsel %vm2650, %v3508, %v3524
          %v3526 = vsel %vm2653, %v3512, %v3525
          %v3529 = vadd.f32 %v3429, %v3519
          %v3530 = vadd.f32 %v3430, %v3526
          %vm3531 = vcmask 15360
          %3532 = vst.msk [vmem:[#allocation3] sm:$0xff] %vm3531, %v3529
          %3533 = vst.msk [vmem:[#allocation3 + $0x8] sm:$0xff] %vm3531, %v3530
          %v3534 = vmul.f32 %v3411, %v3407
          %v3535 = vmul.f32 %v3415, %v3408
          %v3536 = vmul.f32 %v3421, %v3405
          %v3537 = vmul.f32 %v3425, %v3406
          %v3538 = vadd.f32 %v3534, %v3536
          %v3539 = vadd.f32 %v3535, %v3537
          %v3556 = vlaneseq
          %v3557 = vshrl.u32 %v3556, 7
          %v3558 = vsub.s32 %v3448, %v3557
          %v3559 = vrot.slane %v3359, %v3558
          %v3560 = vlaneseq
          %v3561 = vshrl.u32 %v3560, 7
          %v3562 = vsub.s32 %v3448, %v3561
          %v3563 = vrot.slane %v3362, %v3562
          %v3564 = vlaneseq
          %v3565 = vshrl.u32 %v3564, 7
          %v3566 = vsub.s32 %v3448, %v3565
          %v3567 = vrot.slane %v3365, %v3566
          %v3568 = vlaneseq
          %v3569 = vshrl.u32 %v3568, 7
          %v3570 = vsub.s32 %v3448, %v3569
          %v3571 = vrot.slane %v3368, %v3570
          %v3572 = vlaneseq
          %v3573 = vshrl.u32 %v3572, 7
          %v3574 = vsub.s32 %v3448, %v3573
          %v3575 = vrot.slane %v3371, %v3574
          %v3576 = vlaneseq
          %v3577 = vshrl.u32 %v3576, 7
          %v3578 = vsub.s32 %v3448, %v3577
          %v3579 = vrot.slane %v3374, %v3578
          %v3580 = vlaneseq
          %v3581 = vshrl.u32 %v3580, 7
          %v3582 = vsub.s32 %v3448, %v3581
          %v3583 = vrot.slane %v3377, %v3582
          %v3584 = vlaneseq
          %v3585 = vshrl.u32 %v3584, 7
          %v3586 = vsub.s32 %v3448, %v3585
          %v3587 = vrot.slane %v3380, %v3586
          %v3588 = vlaneseq
          %v3589 = vshrl.u32 %v3588, 7
          %v3590 = vsub.s32 %v3448, %v3589
          %v3591 = vrot.slane %v3383, %v3590
          %v3592 = vlaneseq
          %v3593 = vshrl.u32 %v3592, 7
          %v3594 = vsub.s32 %v3448, %v3593
          %v3595 = vrot.slane %v3386, %v3594
          %v3596 = vlaneseq
          %v3597 = vshrl.u32 %v3596, 7
          %v3598 = vsub.s32 %v3448, %v3597
          %v3599 = vrot.slane %v3389, %v3598
          %v3600 = vlaneseq
          %v3601 = vshrl.u32 %v3600, 7
          %v3602 = vsub.s32 %v3448, %v3601
          %v3603 = vrot.slane %v3392, %v3602
          %v3604 = vlaneseq
          %v3605 = vshrl.u32 %v3604, 7
          %v3606 = vsub.s32 %v3448, %v3605
          %v3607 = vrot.slane %v3395, %v3606
          %v3608 = vlaneseq
          %v3609 = vshrl.u32 %v3608, 7
          %v3610 = vsub.s32 %v3448, %v3609
          %v3611 = vrot.slane %v3398, %v3610
          %v3612 = vlaneseq
          %v3613 = vshrl.u32 %v3612, 7
          %v3614 = vsub.s32 %v3448, %v3613
          %v3615 = vrot.slane %v3401, %v3614
          %v3616 = vlaneseq
          %v3617 = vshrl.u32 %v3616, 7
          %v3618 = vsub.s32 %v3448, %v3617
          %v3619 = vrot.slane %v3404, %v3618
          %v3620 = vsel %vm303, %v3563, %v3559
          %v3621 = vsel %vm306, %v3567, %v3620
          %v3622 = vsel %vm309, %v3571, %v3621
          %v3623 = vsel %vm2644, %v3575, %v3622
          %v3624 = vsel %vm2647, %v3579, %v3623
          %v3625 = vsel %vm2650, %v3583, %v3624
          %v3626 = vsel %vm2653, %v3587, %v3625
          %v3627 = vsel %vm303, %v3595, %v3591
          %v3628 = vsel %vm306, %v3599, %v3627
          %v3629 = vsel %vm309, %v3603, %v3628
          %v3630 = vsel %vm2644, %v3607, %v3629
          %v3631 = vsel %vm2647, %v3611, %v3630
          %v3632 = vsel %vm2650, %v3615, %v3631
          %v3633 = vsel %vm2653, %v3619, %v3632
          %v3636 = vadd.f32 %v3538, %v3626
          %v3637 = vadd.f32 %v3539, %v3633
          %3638 = vst.msk [vmem:[#allocation4] sm:$0xff] %vm3531, %v3636
          %3639 = vst.msk [vmem:[#allocation4 + $0x8] sm:$0xff] %vm3531, %v3637
        $region48: #{tpu_custom_call.1} parent=39 // pred_fallthru
          _
        %s3640 = sand.u32 %s157, 1
        %s3641 = scalar_lea.sflag [#allocation6], %s3640
        %s3642 = sand.u32 %s157, 1
        %s3643 = smul.addr %s3642, 8
        %s3644 = scalar_lea.vmem [#allocation5], %s3643
        // Predicated region
        $region49: #{tpu_custom_call.1} parent=39 // pred_check
          %p3645 = pneg %p167
        $region50: #{tpu_custom_call.1} parent=39 // pred_check_branch
          %3647 = sbr.rel (%p3645) target = $region52
        $region51: #{tpu_custom_call.1} parent=39 // pred_region
          %s3648 = smul.u32 %s23, 2
          %s3649 = sadd.s32 %s3648, %s24
          %s3651 = ssub.s32 128, 128
          %3652 = vsyncadd %s3641, %s3651
          %s3653 = smul.addr %s3649, 4
          %s3654 = smul.addr %s3653, 32
          %s3655 = scalar_lea.hbm %s5, %s3654
          %s3656 = sshll.u32 %s3644, 4
          %s3657 = int_to_ptr.vmem [resolvable:$true] %s3656
          %3662 = dma.vmem_to_hbm [thread:$0]  %s3657, 128, %s3655, %s3641, 32, 32, 2
        $region52: #{tpu_custom_call.1} parent=39 // pred_fallthru
          _
      $region40: #{tpu_custom_call.1} parent=5 // pred_fallthru
        _
      %p3663 = scmp.le.s32.totalorder 2, %s14
      // Predicated region
      $region53: #{tpu_custom_call.1} parent=5 // pred_check
        %p3664 = pneg %p3663
      $region54: #{tpu_custom_call.1} parent=5 // pred_check_branch
        %3666 = sbr.rel (%p3664) target = $region56
      $region55: #{tpu_custom_call.1} parent=5 // pred_region
        %s3667 = ssub.s32 %s14, 2
        // Predicated region
        $region57: #{tpu_custom_call.1} parent=55 // pred_check
          %p3668 = pneg %p173
        $region58: #{tpu_custom_call.1} parent=55 // pred_check_branch
          %3670 = sbr.rel (%p3668) target = $region60
        $region59: #{tpu_custom_call.1} parent=55 // pred_region
          %s3671 = sand.u32 %s158, 1
          %s3672 = scalar_lea.sflag [#allocation6], %s3671
          %s3673 = sand.u32 %s158, 1
          %s3674 = smul.addr %s3673, 8
          %s3675 = scalar_lea.vmem [#allocation5], %s3674
          %3676 = dma.done %s3672, 128
        $region60: #{tpu_custom_call.1} parent=55 // pred_fallthru
          _
      $region56: #{tpu_custom_call.1} parent=5 // pred_fallthru
        _
    $region6: #{tpu_custom_call.1} parent=1 // loop_footer
      %s18 = sadd.s32 1, %s14
    $region7: #{tpu_custom_call.1} parent=1 // loop_footer_branch
      %13 = sbr.rel target = $region3
    $region8: #{tpu_custom_call.1} parent=1 // loop_exit
      _
    %3677 = vsyncpa [#allocation6], 1
    %s3678 = scalar_lea.sflag [#allocation6], 1
    %3679 = vsyncpa %s3678, 1

</llo_original>
